<compile_context>
chip_gen: v5e
topology: v5e:2x2
jax: 0.10.0
libtpu: 0.0.40
codegen_flags: <defaults>
</compile_context>

<pallas_src>
import math

import jax
import jax.numpy as jnp
from jax.experimental import pallas as pl
from jax.experimental.pallas import tpu as pltpu

# ---- small synthetic ViT config ----
IMG = 16            # image spatial size
PATCH = 4           # patch size (conv kernel = stride = PATCH)
CHANNELS = 3        # ViT uses RGB
HIDDEN = 32         # hidden_size
HEADS = 4
HEAD_DIM = HIDDEN // HEADS
INTERMEDIATE = 64   # MLP intermediate size
LAYERS = 2          # encoder layers
FC_DIM = 256        # self.fc = nn.Linear(hidden, 256)
LN_EPS = 1e-12      # HF ViT layer_norm_eps
NUM_PATCHES = (IMG // PATCH) ** 2
SEQ = NUM_PATCHES + 1
CPP = CHANNELS * PATCH * PATCH   # flattened patch feature size


# ------------------------- fused Pallas kernel -------------------------

def _vit_fused_kernel(xp_ref, pw_ref, emb0_ref, embr_ref,
                      ln1g_ref, ln1b_ref, wqkv_ref, bqkv_ref, wo_ref, bo_ref,
                      ln2g_ref, ln2b_ref, w1_ref, b1_ref, w2_ref, b2_ref,
                      fing_ref, finb_ref, fcw_ref, fcb_ref, regw_ref, regb_ref,
                      out_ref):
    """Single invocation == the entire forward pass for the whole batch."""
    f32 = jnp.float32
    B = xp_ref.shape[0] // NUM_PATCHES          # static at trace time
    scale = 1.0 / math.sqrt(HEAD_DIM)
    c_gelu = math.sqrt(2.0 / math.pi)

    def layernorm(x, g, b):
        mean = jnp.mean(x, axis=-1, keepdims=True)
        c = x - mean
        var = jnp.mean(c * c, axis=-1, keepdims=True)
        return c * jax.lax.rsqrt(var + LN_EPS) * g + b

    # --- patch embedding over all B*NUM_PATCHES rows at once
    #     (Conv2d k=stride=PATCH == matmul over flattened patches). ---
    hp = jnp.dot(xp_ref[...], pw_ref[...], preferred_element_type=f32)
    emb0 = emb0_ref[...]            # (1, HIDDEN)           cls + pos[0]
    embr = embr_ref[...]            # (NUM_PATCHES, HIDDEN)  patch_bias + pos[1:]
    rows = []
    for b in range(B):              # static; CLS row written explicitly
        rows.append(emb0)
        rows.append(hp[b * NUM_PATCHES:(b + 1) * NUM_PATCHES] + embr)
    h = jnp.concatenate(rows, axis=0)                       # (B*SEQ, HIDDEN)
    # TODO(synk): backbone embedding/attention/hidden dropouts are identity
    # (inference mode, frozen backbone).

    # --- transformer encoder (pre-LN, as in HF ViT), statically unrolled ---
    for l in range(LAYERS):
        # MHSA.  QKV projection is one fused matmul over all B*SEQ rows;
        # only scores/softmax/PV stay per-image (attention must not mix
        # images) and per-head (lane slices).
        x = layernorm(h, ln1g_ref[l], ln1b_ref[l])
        qkv = jnp.dot(x, wqkv_ref[l], preferred_element_type=f32) + bqkv_ref[l]
        wo_l = wo_ref[l]                                     # (HIDDEN, HIDDEN)
        attn_rows = []
        for b in range(B):
            qkv_b = qkv[b * SEQ:(b + 1) * SEQ]               # (SEQ, 3*HIDDEN)
            acc = jnp.zeros((SEQ, HIDDEN), f32)
            for hd in range(HEADS):
                q = qkv_b[:, hd * HEAD_DIM:(hd + 1) * HEAD_DIM]
                k = qkv_b[:, HIDDEN + hd * HEAD_DIM:HIDDEN + (hd + 1) * HEAD_DIM]
                v = qkv_b[:, 2 * HIDDEN + hd * HEAD_DIM:2 * HIDDEN + (hd + 1) * HEAD_DIM]
                s = jax.lax.dot_general(q, k, (((1,), (1,)), ((), ())),
                                        preferred_element_type=f32) * scale
                m = jnp.max(s, axis=-1, keepdims=True)
                p = jnp.exp(s - m)
                p = p * pl.reciprocal(jnp.sum(p, axis=-1, keepdims=True),
                                      approx=True)
                ctx = jnp.dot(p, v, preferred_element_type=f32)   # (SEQ, HEAD_DIM)
                # Accumulate the output projection per head (MXU) instead of
                # concatenating 8-lane head slices along the lane axis.
                acc = acc + jnp.dot(
                    ctx, wo_l[hd * HEAD_DIM:(hd + 1) * HEAD_DIM, :],
                    preferred_element_type=f32)
            attn_rows.append(acc)
        h = h + jnp.concatenate(attn_rows, axis=0) + bo_ref[l]

        # MLP with GELU, over all B*SEQ rows at once.
        # TODO(synk): HF ViT uses exact erf-GELU; tanh approximation used here
        # for portable Mosaic lowering (~1e-3 relative difference).
        x = layernorm(h, ln2g_ref[l], ln2b_ref[l])
        m1 = jnp.dot(x, w1_ref[l], preferred_element_type=f32) + b1_ref[l]
        m1 = 0.5 * m1 * (1.0 + jnp.tanh(c_gelu * (m1 + 0.044715 * m1 * m1 * m1)))
        h = h + jnp.dot(m1, w2_ref[l], preferred_element_type=f32) + b2_ref[l]

    # --- final LayerNorm, stacked CLS rows, fc -> ReLU -> dropout -> regressor ---
    h = layernorm(h, fing_ref[...], finb_ref[...])
    cls_tok = jnp.concatenate([h[b * SEQ:b * SEQ + 1, :] for b in range(B)],
                              axis=0)                        # (B, HIDDEN)
    y = jnp.dot(cls_tok, fcw_ref[...], preferred_element_type=f32) + fcb_ref[...]
    y = jnp.maximum(y, 0.0)                                  # ReLU
    # TODO(synk): nn.Dropout(0.5) is identity in inference mode.
    # regressor(256 -> 1) as multiply + lane reduction; one (B, 1) HBM store.
    y = jnp.sum(y * regw_ref[...], axis=-1, keepdims=True) + regb_ref[...]
    out_ref[...] = y


# ------------------------- parameters -------------------------

def init_params(key):
    keys = jax.random.split(key, 16)
    ki = iter(keys)

    def nrm(shape, scale=0.02):
        return (scale * jax.random.normal(next(ki), shape)).astype(jnp.float32)

    def zeros(shape):
        return jnp.zeros(shape, jnp.float32)

    def ones(shape):
        return jnp.ones(shape, jnp.float32)

    # CLS token, position embedding and conv-patch bias are folded once here
    # (batch-independent), so the per-call graph carries no extra XLA glue.
    cls = nrm((1, HIDDEN))
    pos = nrm((SEQ, HIDDEN))
    patch_b = zeros((1, HIDDEN))

    return {
        # Conv2d(C, HIDDEN, k=stride=PATCH) as a linear projection of patches
        # flattened in (C, ph, pw) order.
        "patch_w": nrm((CPP, HIDDEN)),
        "emb0": cls + pos[0:1],                # (1, HIDDEN)  cls + pos[0]
        "emb_rest": patch_b + pos[1:],         # (NUM_PATCHES, HIDDEN)
        # Per-layer weights stacked on a leading LAYERS axis (VMEM-resident).
        # QKV fused into one (HIDDEN, 3*HIDDEN) weight per layer.
        "ln1_g": ones((LAYERS, 1, HIDDEN)), "ln1_b": zeros((LAYERS, 1, HIDDEN)),
        "wqkv": nrm((LAYERS, HIDDEN, 3 * HIDDEN)),
        "bqkv": zeros((LAYERS, 1, 3 * HIDDEN)),
        "wo": nrm((LAYERS, HIDDEN, HIDDEN)), "bo": zeros((LAYERS, 1, HIDDEN)),
        "ln2_g": ones((LAYERS, 1, HIDDEN)), "ln2_b": zeros((LAYERS, 1, HIDDEN)),
        "w1": nrm((LAYERS, HIDDEN, INTERMEDIATE)),
        "b1": zeros((LAYERS, 1, INTERMEDIATE)),
        "w2": nrm((LAYERS, INTERMEDIATE, HIDDEN)),
        "b2": zeros((LAYERS, 1, HIDDEN)),
        "fin_g": ones((1, HIDDEN)), "fin_b": zeros((1, HIDDEN)),
        "fc_w": nrm((HIDDEN, FC_DIM)), "fc_b": zeros((1, FC_DIM)),
        "reg_wt": nrm((1, FC_DIM)),      # regressor weight stored transposed
        "reg_b": zeros((1, 1)),
    }


# ------------------------- forward pass -------------------------

def vit_regressor_forward(x, params):
    """x: (B, C, H, W) float32 (NCHW, like the PyTorch module). Returns (B, 1)."""
    B = x.shape[0]

    # Patchification glue (pure reshape/transpose) -- the only XLA-side op.
    xp = x.reshape(B, CHANNELS, IMG // PATCH, PATCH, IMG // PATCH, PATCH)
    xp = xp.transpose(0, 2, 4, 1, 3, 5).reshape(B * NUM_PATCHES, CPP)

    weights = (params["patch_w"], params["emb0"], params["emb_rest"],
               params["ln1_g"], params["ln1_b"], params["wqkv"], params["bqkv"],
               params["wo"], params["bo"], params["ln2_g"], params["ln2_b"],
               params["w1"], params["b1"], params["w2"], params["b2"],
               params["fin_g"], params["fin_b"], params["fc_w"], params["fc_b"],
               params["reg_wt"], params["reg_b"])

    # Advisory cost estimate so XLA doesn't treat the fused call as free.
    flops = B * (
        2 * NUM_PATCHES * CPP * HIDDEN
        + LAYERS * (2 * SEQ * HIDDEN * 3 * HIDDEN
                    + HEADS * (4 * SEQ * SEQ * HEAD_DIM)
                    + 2 * SEQ * HIDDEN * HIDDEN
                    + 4 * SEQ * HIDDEN * INTERMEDIATE)
        + 2 * HIDDEN * FC_DIM + 2 * FC_DIM)
    transcendentals = B * LAYERS * (HEADS * SEQ * SEQ + SEQ * INTERMEDIATE)
    bytes_accessed = 4 * (int(xp.size) + sum(int(w.size) for w in weights) + B)

    vmem_spec = pl.BlockSpec(memory_space=pltpu.MemorySpace.VMEM)
    out = pl.pallas_call(
        _vit_fused_kernel,
        out_shape=jax.ShapeDtypeStruct((B, 1), jnp.float32),
        # No grid: one invocation, whole arrays VMEM-resident, single store.
        in_specs=[vmem_spec] * (1 + len(weights)),
        out_specs=vmem_spec,
        cost_estimate=pl.CostEstimate(flops=flops,
                                      transcendentals=transcendentals,
                                      bytes_accessed=bytes_accessed),
    )(xp, *weights)
    return out


if __name__ == "__main__":
    key = jax.random.PRNGKey(0)
    kx, kp = jax.random.split(key)
    x = jax.random.normal(kx, (2, CHANNELS, IMG, IMG), dtype=jnp.float32)
    params = init_params(kp)

    out = jax.jit(vit_regressor_forward)(x, params)
    jax.block_until_ready(out)
    assert out.shape == (2, 1), out.shape
    assert out.dtype == jnp.float32
    print("KERNEL_OK")
</pallas_src>

<mosaic_0001>
module attributes {stable_mosaic.version = 11 : i64} {
  func.func @_vit_fused_kernel(%arg0: memref<32x48xf32, #tpu.memory_space<vmem>>, %arg1: memref<48x32xf32, #tpu.memory_space<vmem>>, %arg2: memref<1x32xf32, #tpu.memory_space<vmem>>, %arg3: memref<16x32xf32, #tpu.memory_space<vmem>>, %arg4: memref<2x1x32xf32, #tpu.memory_space<vmem>>, %arg5: memref<2x1x32xf32, #tpu.memory_space<vmem>>, %arg6: memref<2x32x96xf32, #tpu.memory_space<vmem>>, %arg7: memref<2x1x96xf32, #tpu.memory_space<vmem>>, %arg8: memref<2x32x32xf32, #tpu.memory_space<vmem>>, %arg9: memref<2x1x32xf32, #tpu.memory_space<vmem>>, %arg10: memref<2x1x32xf32, #tpu.memory_space<vmem>>, %arg11: memref<2x1x32xf32, #tpu.memory_space<vmem>>, %arg12: memref<2x32x64xf32, #tpu.memory_space<vmem>>, %arg13: memref<2x1x64xf32, #tpu.memory_space<vmem>>, %arg14: memref<2x64x32xf32, #tpu.memory_space<vmem>>, %arg15: memref<2x1x32xf32, #tpu.memory_space<vmem>>, %arg16: memref<1x32xf32, #tpu.memory_space<vmem>>, %arg17: memref<1x32xf32, #tpu.memory_space<vmem>>, %arg18: memref<32x256xf32, #tpu.memory_space<vmem>>, %arg19: memref<1x256xf32, #tpu.memory_space<vmem>>, %arg20: memref<1x256xf32, #tpu.memory_space<vmem>>, %arg21: memref<1x1xf32, #tpu.memory_space<vmem>>, %arg22: memref<2x1xf32, #tpu.memory_space<vmem>>) attributes {dimension_semantics = [], scalar_prefetch = 0 : i64, scratch_operands = 0 : i64, tpu.core_type = #tpu.core_type<tc>} {
    %c0 = arith.constant 0 : index
    %c0_0 = arith.constant 0 : index
    %0 = vector.load %arg0[%c0, %c0_0] : memref<32x48xf32, #tpu.memory_space<vmem>>, vector<32x48xf32>
    %c0_1 = arith.constant 0 : index
    %c0_2 = arith.constant 0 : index
    %1 = vector.load %arg1[%c0_1, %c0_2] : memref<48x32xf32, #tpu.memory_space<vmem>>, vector<48x32xf32>
    %cst = arith.constant dense<0.000000e+00> : vector<32x32xf32>
    %2 = tpu.matmul %0, %1, %cst {dimension_numbers = #tpu.dot_dimension_numbers<[1], [0], [0], [1], [0, 0, 1, 1], [], []>} : vector<32x48xf32>, vector<48x32xf32>, vector<32x32xf32> -> vector<32x32xf32>
    %c0_3 = arith.constant 0 : index
    %c0_4 = arith.constant 0 : index
    %3 = vector.load %arg2[%c0_3, %c0_4] : memref<1x32xf32, #tpu.memory_space<vmem>>, vector<1x32xf32>
    %c0_5 = arith.constant 0 : index
    %c0_6 = arith.constant 0 : index
    %4 = vector.load %arg3[%c0_5, %c0_6] : memref<16x32xf32, #tpu.memory_space<vmem>>, vector<16x32xf32>
    %5 = vector.extract_strided_slice %2 {offsets = [0, 0], sizes = [16, 32], strides = [1, 1]} : vector<32x32xf32> to vector<16x32xf32>
    %6 = arith.addf %5, %4 : vector<16x32xf32>
    %7 = vector.extract_strided_slice %2 {offsets = [16, 0], sizes = [16, 32], strides = [1, 1]} : vector<32x32xf32> to vector<16x32xf32>
    %8 = arith.addf %7, %4 : vector<16x32xf32>
    %9 = tpu.concatenate %3, %6, %3, %8 in 0 : vector<1x32xf32>, vector<16x32xf32>, vector<1x32xf32>, vector<16x32xf32> -> vector<34x32xf32>
    %c0_7 = arith.constant 0 : index
    %c0_8 = arith.constant 0 : index
    %c0_9 = arith.constant 0 : index
    %10 = vector.load %arg4[%c0_7, %c0_8, %c0_9] : memref<2x1x32xf32, #tpu.memory_space<vmem>>, vector<1x1x32xf32>
    %11 = vector.shape_cast %10 : vector<1x1x32xf32> to vector<1x32xf32>
    %c0_10 = arith.constant 0 : index
    %c0_11 = arith.constant 0 : index
    %c0_12 = arith.constant 0 : index
    %12 = vector.load %arg5[%c0_10, %c0_11, %c0_12] : memref<2x1x32xf32, #tpu.memory_space<vmem>>, vector<1x1x32xf32>
    %13 = vector.shape_cast %12 : vector<1x1x32xf32> to vector<1x32xf32>
    %cst_13 = arith.constant dense<0.000000e+00> : vector<34xf32>
    %14 = vector.multi_reduction <add>, %9, %cst_13 [1] : vector<34x32xf32> to vector<34xf32>
    %15 = vector.shape_cast %14 : vector<34xf32> to vector<34x1xf32>
    %cst_14 = arith.constant 3.200000e+01 : f32
    %16 = vector.broadcast %cst_14 : f32 to vector<34x1xf32>
    %17 = arith.divf %15, %16 : vector<34x1xf32>
    %18 = vector.broadcast %17 : vector<34x1xf32> to vector<34x32xf32>
    %19 = arith.subf %9, %18 : vector<34x32xf32>
    %20 = arith.mulf %19, %19 : vector<34x32xf32>
    %cst_15 = arith.constant dense<0.000000e+00> : vector<34xf32>
    %21 = vector.multi_reduction <add>, %20, %cst_15 [1] : vector<34x32xf32> to vector<34xf32>
    %22 = vector.shape_cast %21 : vector<34xf32> to vector<34x1xf32>
    %cst_16 = arith.constant 3.200000e+01 : f32
    %23 = vector.broadcast %cst_16 : f32 to vector<34x1xf32>
    %24 = arith.divf %22, %23 : vector<34x1xf32>
    %cst_17 = arith.constant 9.99999996E-13 : f32
    %25 = vector.broadcast %cst_17 : f32 to vector<34x1xf32>
    %26 = arith.addf %24, %25 : vector<34x1xf32>
    %27 = math.rsqrt %26 : vector<34x1xf32>
    %28 = vector.broadcast %27 : vector<34x1xf32> to vector<34x32xf32>
    %29 = arith.mulf %19, %28 : vector<34x32xf32>
    %30 = vector.broadcast %11 : vector<1x32xf32> to vector<34x32xf32>
    %31 = arith.mulf %29, %30 : vector<34x32xf32>
    %32 = vector.broadcast %13 : vector<1x32xf32> to vector<34x32xf32>
    %33 = arith.addf %31, %32 : vector<34x32xf32>
    %c0_18 = arith.constant 0 : index
    %c0_19 = arith.constant 0 : index
    %c0_20 = arith.constant 0 : index
    %34 = vector.load %arg6[%c0_18, %c0_19, %c0_20] : memref<2x32x96xf32, #tpu.memory_space<vmem>>, vector<1x32x96xf32>
    %35 = vector.shape_cast %34 : vector<1x32x96xf32> to vector<32x96xf32>
    %cst_21 = arith.constant dense<0.000000e+00> : vector<34x96xf32>
    %36 = tpu.matmul %33, %35, %cst_21 {dimension_numbers = #tpu.dot_dimension_numbers<[1], [0], [0], [1], [0, 0, 1, 1], [], []>} : vector<34x32xf32>, vector<32x96xf32>, vector<34x96xf32> -> vector<34x96xf32>
    %c0_22 = arith.constant 0 : index
    %c0_23 = arith.constant 0 : index
    %c0_24 = arith.constant 0 : index
    %37 = vector.load %arg7[%c0_22, %c0_23, %c0_24] : memref<2x1x96xf32, #tpu.memory_space<vmem>>, vector<1x1x96xf32>
    %38 = vector.shape_cast %37 : vector<1x1x96xf32> to vector<1x96xf32>
    %39 = vector.broadcast %38 : vector<1x96xf32> to vector<34x96xf32>
    %40 = arith.addf %36, %39 : vector<34x96xf32>
    %c0_25 = arith.constant 0 : index
    %c0_26 = arith.constant 0 : index
    %c0_27 = arith.constant 0 : index
    %41 = vector.load %arg8[%c0_25, %c0_26, %c0_27] : memref<2x32x32xf32, #tpu.memory_space<vmem>>, vector<1x32x32xf32>
    %42 = vector.shape_cast %41 : vector<1x32x32xf32> to vector<32x32xf32>
    %43 = vector.extract_strided_slice %40 {offsets = [0, 0], sizes = [17, 96], strides = [1, 1]} : vector<34x96xf32> to vector<17x96xf32>
    %cst_28 = arith.constant 0.000000e+00 : f32
    %44 = vector.broadcast %cst_28 : f32 to vector<17x32xf32>
    %45 = vector.extract_strided_slice %43 {offsets = [0, 0], sizes = [17, 8], strides = [1, 1]} : vector<17x96xf32> to vector<17x8xf32>
    %46 = vector.extract_strided_slice %43 {offsets = [0, 32], sizes = [17, 8], strides = [1, 1]} : vector<17x96xf32> to vector<17x8xf32>
    %47 = vector.extract_strided_slice %43 {offsets = [0, 64], sizes = [17, 8], strides = [1, 1]} : vector<17x96xf32> to vector<17x8xf32>
    %cst_29 = arith.constant dense<0.000000e+00> : vector<17x17xf32>
    %48 = tpu.matmul %45, %46, %cst_29 {dimension_numbers = #tpu.dot_dimension_numbers<[1], [1], [0], [0], [0, 0, 1, 0], [], []>} : vector<17x8xf32>, vector<17x8xf32>, vector<17x17xf32> -> vector<17x17xf32>
    %cst_30 = arith.constant 0.353553385 : f32
    %49 = vector.broadcast %cst_30 : f32 to vector<17x17xf32>
    %50 = arith.mulf %48, %49 : vector<17x17xf32>
    %cst_31 = arith.constant dense<0xFF800000> : vector<17xf32>
    %51 = vector.multi_reduction <maximumf>, %50, %cst_31 [1] : vector<17x17xf32> to vector<17xf32>
    %52 = vector.shape_cast %51 : vector<17xf32> to vector<17x1xf32>
    %53 = vector.broadcast %52 : vector<17x1xf32> to vector<17x17xf32>
    %54 = arith.subf %50, %53 : vector<17x17xf32>
    %55 = math.exp %54 : vector<17x17xf32>
    %cst_32 = arith.constant dense<0.000000e+00> : vector<17xf32>
    %56 = vector.multi_reduction <add>, %55, %cst_32 [1] : vector<17x17xf32> to vector<17xf32>
    %57 = vector.shape_cast %56 : vector<17xf32> to vector<17x1xf32>
    %58 = tpu.reciprocal %57 {approx = true} : vector<17x1xf32> -> vector<17x1xf32>
    %59 = vector.broadcast %58 : vector<17x1xf32> to vector<17x17xf32>
    %60 = arith.mulf %55, %59 : vector<17x17xf32>
    %cst_33 = arith.constant dense<0.000000e+00> : vector<17x8xf32>
    %61 = tpu.matmul %60, %47, %cst_33 {dimension_numbers = #tpu.dot_dimension_numbers<[1], [0], [0], [1], [0, 0, 1, 1], [], []>} : vector<17x17xf32>, vector<17x8xf32>, vector<17x8xf32> -> vector<17x8xf32>
    %62 = vector.extract_strided_slice %42 {offsets = [0, 0], sizes = [8, 32], strides = [1, 1]} : vector<32x32xf32> to vector<8x32xf32>
    %cst_34 = arith.constant dense<0.000000e+00> : vector<17x32xf32>
    %63 = tpu.matmul %61, %62, %cst_34 {dimension_numbers = #tpu.dot_dimension_numbers<[1], [0], [0], [1], [0, 0, 1, 1], [], []>} : vector<17x8xf32>, vector<8x32xf32>, vector<17x32xf32> -> vector<17x32xf32>
    %64 = arith.addf %44, %63 : vector<17x32xf32>
    %65 = vector.extract_strided_slice %43 {offsets = [0, 8], sizes = [17, 8], strides = [1, 1]} : vector<17x96xf32> to vector<17x8xf32>
    %66 = vector.extract_strided_slice %43 {offsets = [0, 40], sizes = [17, 8], strides = [1, 1]} : vector<17x96xf32> to vector<17x8xf32>
    %67 = vector.extract_strided_slice %43 {offsets = [0, 72], sizes = [17, 8], strides = [1, 1]} : vector<17x96xf32> to vector<17x8xf32>
    %cst_35 = arith.constant dense<0.000000e+00> : vector<17x17xf32>
    %68 = tpu.matmul %65, %66, %cst_35 {dimension_numbers = #tpu.dot_dimension_numbers<[1], [1], [0], [0], [0, 0, 1, 0], [], []>} : vector<17x8xf32>, vector<17x8xf32>, vector<17x17xf32> -> vector<17x17xf32>
    %cst_36 = arith.constant 0.353553385 : f32
    %69 = vector.broadcast %cst_36 : f32 to vector<17x17xf32>
    %70 = arith.mulf %68, %69 : vector<17x17xf32>
    %cst_37 = arith.constant dense<0xFF800000> : vector<17xf32>
    %71 = vector.multi_reduction <maximumf>, %70, %cst_37 [1] : vector<17x17xf32> to vector<17xf32>
    %72 = vector.shape_cast %71 : vector<17xf32> to vector<17x1xf32>
    %73 = vector.broadcast %72 : vector<17x1xf32> to vector<17x17xf32>
    %74 = arith.subf %70, %73 : vector<17x17xf32>
    %75 = math.exp %74 : vector<17x17xf32>
    %cst_38 = arith.constant dense<0.000000e+00> : vector<17xf32>
    %76 = vector.multi_reduction <add>, %75, %cst_38 [1] : vector<17x17xf32> to vector<17xf32>
    %77 = vector.shape_cast %76 : vector<17xf32> to vector<17x1xf32>
    %78 = tpu.reciprocal %77 {approx = true} : vector<17x1xf32> -> vector<17x1xf32>
    %79 = vector.broadcast %78 : vector<17x1xf32> to vector<17x17xf32>
    %80 = arith.mulf %75, %79 : vector<17x17xf32>
    %cst_39 = arith.constant dense<0.000000e+00> : vector<17x8xf32>
    %81 = tpu.matmul %80, %67, %cst_39 {dimension_numbers = #tpu.dot_dimension_numbers<[1], [0], [0], [1], [0, 0, 1, 1], [], []>} : vector<17x17xf32>, vector<17x8xf32>, vector<17x8xf32> -> vector<17x8xf32>
    %82 = vector.extract_strided_slice %42 {offsets = [8, 0], sizes = [8, 32], strides = [1, 1]} : vector<32x32xf32> to vector<8x32xf32>
    %cst_40 = arith.constant dense<0.000000e+00> : vector<17x32xf32>
    %83 = tpu.matmul %81, %82, %cst_40 {dimension_numbers = #tpu.dot_dimension_numbers<[1], [0], [0], [1], [0, 0, 1, 1], [], []>} : vector<17x8xf32>, vector<8x32xf32>, vector<17x32xf32> -> vector<17x32xf32>
    %84 = arith.addf %64, %83 : vector<17x32xf32>
    %85 = vector.extract_strided_slice %43 {offsets = [0, 16], sizes = [17, 8], strides = [1, 1]} : vector<17x96xf32> to vector<17x8xf32>
    %86 = vector.extract_strided_slice %43 {offsets = [0, 48], sizes = [17, 8], strides = [1, 1]} : vector<17x96xf32> to vector<17x8xf32>
    %87 = vector.extract_strided_slice %43 {offsets = [0, 80], sizes = [17, 8], strides = [1, 1]} : vector<17x96xf32> to vector<17x8xf32>
    %cst_41 = arith.constant dense<0.000000e+00> : vector<17x17xf32>
    %88 = tpu.matmul %85, %86, %cst_41 {dimension_numbers = #tpu.dot_dimension_numbers<[1], [1], [0], [0], [0, 0, 1, 0], [], []>} : vector<17x8xf32>, vector<17x8xf32>, vector<17x17xf32> -> vector<17x17xf32>
    %cst_42 = arith.constant 0.353553385 : f32
    %89 = vector.broadcast %cst_42 : f32 to vector<17x17xf32>
    %90 = arith.mulf %88, %89 : vector<17x17xf32>
    %cst_43 = arith.constant dense<0xFF800000> : vector<17xf32>
    %91 = vector.multi_reduction <maximumf>, %90, %cst_43 [1] : vector<17x17xf32> to vector<17xf32>
    %92 = vector.shape_cast %91 : vector<17xf32> to vector<17x1xf32>
    %93 = vector.broadcast %92 : vector<17x1xf32> to vector<17x17xf32>
    %94 = arith.subf %90, %93 : vector<17x17xf32>
    %95 = math.exp %94 : vector<17x17xf32>
    %cst_44 = arith.constant dense<0.000000e+00> : vector<17xf32>
    %96 = vector.multi_reduction <add>, %95, %cst_44 [1] : vector<17x17xf32> to vector<17xf32>
    %97 = vector.shape_cast %96 : vector<17xf32> to vector<17x1xf32>
    %98 = tpu.reciprocal %97 {approx = true} : vector<17x1xf32> -> vector<17x1xf32>
    %99 = vector.broadcast %98 : vector<17x1xf32> to vector<17x17xf32>
    %100 = arith.mulf %95, %99 : vector<17x17xf32>
    %cst_45 = arith.constant dense<0.000000e+00> : vector<17x8xf32>
    %101 = tpu.matmul %100, %87, %cst_45 {dimension_numbers = #tpu.dot_dimension_numbers<[1], [0], [0], [1], [0, 0, 1, 1], [], []>} : vector<17x17xf32>, vector<17x8xf32>, vector<17x8xf32> -> vector<17x8xf32>
    %102 = vector.extract_strided_slice %42 {offsets = [16, 0], sizes = [8, 32], strides = [1, 1]} : vector<32x32xf32> to vector<8x32xf32>
    %cst_46 = arith.constant dense<0.000000e+00> : vector<17x32xf32>
    %103 = tpu.matmul %101, %102, %cst_46 {dimension_numbers = #tpu.dot_dimension_numbers<[1], [0], [0], [1], [0, 0, 1, 1], [], []>} : vector<17x8xf32>, vector<8x32xf32>, vector<17x32xf32> -> vector<17x32xf32>
    %104 = arith.addf %84, %103 : vector<17x32xf32>
    %105 = vector.extract_strided_slice %43 {offsets = [0, 24], sizes = [17, 8], strides = [1, 1]} : vector<17x96xf32> to vector<17x8xf32>
    %106 = vector.extract_strided_slice %43 {offsets = [0, 56], sizes = [17, 8], strides = [1, 1]} : vector<17x96xf32> to vector<17x8xf32>
    %107 = vector.extract_strided_slice %43 {offsets = [0, 88], sizes = [17, 8], strides = [1, 1]} : vector<17x96xf32> to vector<17x8xf32>
    %cst_47 = arith.constant dense<0.000000e+00> : vector<17x17xf32>
    %108 = tpu.matmul %105, %106, %cst_47 {dimension_numbers = #tpu.dot_dimension_numbers<[1], [1], [0], [0], [0, 0, 1, 0], [], []>} : vector<17x8xf32>, vector<17x8xf32>, vector<17x17xf32> -> vector<17x17xf32>
    %cst_48 = arith.constant 0.353553385 : f32
    %109 = vector.broadcast %cst_48 : f32 to vector<17x17xf32>
    %110 = arith.mulf %108, %109 : vector<17x17xf32>
    %cst_49 = arith.constant dense<0xFF800000> : vector<17xf32>
    %111 = vector.multi_reduction <maximumf>, %110, %cst_49 [1] : vector<17x17xf32> to vector<17xf32>
    %112 = vector.shape_cast %111 : vector<17xf32> to vector<17x1xf32>
    %113 = vector.broadcast %112 : vector<17x1xf32> to vector<17x17xf32>
    %114 = arith.subf %110, %113 : vector<17x17xf32>
    %115 = math.exp %114 : vector<17x17xf32>
    %cst_50 = arith.constant dense<0.000000e+00> : vector<17xf32>
    %116 = vector.multi_reduction <add>, %115, %cst_50 [1] : vector<17x17xf32> to vector<17xf32>
    %117 = vector.shape_cast %116 : vector<17xf32> to vector<17x1xf32>
    %118 = tpu.reciprocal %117 {approx = true} : vector<17x1xf32> -> vector<17x1xf32>
    %119 = vector.broadcast %118 : vector<17x1xf32> to vector<17x17xf32>
    %120 = arith.mulf %115, %119 : vector<17x17xf32>
    %cst_51 = arith.constant dense<0.000000e+00> : vector<17x8xf32>
    %121 = tpu.matmul %120, %107, %cst_51 {dimension_numbers = #tpu.dot_dimension_numbers<[1], [0], [0], [1], [0, 0, 1, 1], [], []>} : vector<17x17xf32>, vector<17x8xf32>, vector<17x8xf32> -> vector<17x8xf32>
    %122 = vector.extract_strided_slice %42 {offsets = [24, 0], sizes = [8, 32], strides = [1, 1]} : vector<32x32xf32> to vector<8x32xf32>
    %cst_52 = arith.constant dense<0.000000e+00> : vector<17x32xf32>
    %123 = tpu.matmul %121, %122, %cst_52 {dimension_numbers = #tpu.dot_dimension_numbers<[1], [0], [0], [1], [0, 0, 1, 1], [], []>} : vector<17x8xf32>, vector<8x32xf32>, vector<17x32xf32> -> vector<17x32xf32>
    %124 = arith.addf %104, %123 : vector<17x32xf32>
    %125 = vector.extract_strided_slice %40 {offsets = [17, 0], sizes = [17, 96], strides = [1, 1]} : vector<34x96xf32> to vector<17x96xf32>
    %cst_53 = arith.constant 0.000000e+00 : f32
    %126 = vector.broadcast %cst_53 : f32 to vector<17x32xf32>
    %127 = vector.extract_strided_slice %125 {offsets = [0, 0], sizes = [17, 8], strides = [1, 1]} : vector<17x96xf32> to vector<17x8xf32>
    %128 = vector.extract_strided_slice %125 {offsets = [0, 32], sizes = [17, 8], strides = [1, 1]} : vector<17x96xf32> to vector<17x8xf32>
    %129 = vector.extract_strided_slice %125 {offsets = [0, 64], sizes = [17, 8], strides = [1, 1]} : vector<17x96xf32> to vector<17x8xf32>
    %cst_54 = arith.constant dense<0.000000e+00> : vector<17x17xf32>
    %130 = tpu.matmul %127, %128, %cst_54 {dimension_numbers = #tpu.dot_dimension_numbers<[1], [1], [0], [0], [0, 0, 1, 0], [], []>} : vector<17x8xf32>, vector<17x8xf32>, vector<17x17xf32> -> vector<17x17xf32>
    %cst_55 = arith.constant 0.353553385 : f32
    %131 = vector.broadcast %cst_55 : f32 to vector<17x17xf32>
    %132 = arith.mulf %130, %131 : vector<17x17xf32>
    %cst_56 = arith.constant dense<0xFF800000> : vector<17xf32>
    %133 = vector.multi_reduction <maximumf>, %132, %cst_56 [1] : vector<17x17xf32> to vector<17xf32>
    %134 = vector.shape_cast %133 : vector<17xf32> to vector<17x1xf32>
    %135 = vector.broadcast %134 : vector<17x1xf32> to vector<17x17xf32>
    %136 = arith.subf %132, %135 : vector<17x17xf32>
    %137 = math.exp %136 : vector<17x17xf32>
    %cst_57 = arith.constant dense<0.000000e+00> : vector<17xf32>
    %138 = vector.multi_reduction <add>, %137, %cst_57 [1] : vector<17x17xf32> to vector<17xf32>
    %139 = vector.shape_cast %138 : vector<17xf32> to vector<17x1xf32>
    %140 = tpu.reciprocal %139 {approx = true} : vector<17x1xf32> -> vector<17x1xf32>
    %141 = vector.broadcast %140 : vector<17x1xf32> to vector<17x17xf32>
    %142 = arith.mulf %137, %141 : vector<17x17xf32>
    %cst_58 = arith.constant dense<0.000000e+00> : vector<17x8xf32>
    %143 = tpu.matmul %142, %129, %cst_58 {dimension_numbers = #tpu.dot_dimension_numbers<[1], [0], [0], [1], [0, 0, 1, 1], [], []>} : vector<17x17xf32>, vector<17x8xf32>, vector<17x8xf32> -> vector<17x8xf32>
    %144 = vector.extract_strided_slice %42 {offsets = [0, 0], sizes = [8, 32], strides = [1, 1]} : vector<32x32xf32> to vector<8x32xf32>
    %cst_59 = arith.constant dense<0.000000e+00> : vector<17x32xf32>
    %145 = tpu.matmul %143, %144, %cst_59 {dimension_numbers = #tpu.dot_dimension_numbers<[1], [0], [0], [1], [0, 0, 1, 1], [], []>} : vector<17x8xf32>, vector<8x32xf32>, vector<17x32xf32> -> vector<17x32xf32>
    %146 = arith.addf %126, %145 : vector<17x32xf32>
    %147 = vector.extract_strided_slice %125 {offsets = [0, 8], sizes = [17, 8], strides = [1, 1]} : vector<17x96xf32> to vector<17x8xf32>
    %148 = vector.extract_strided_slice %125 {offsets = [0, 40], sizes = [17, 8], strides = [1, 1]} : vector<17x96xf32> to vector<17x8xf32>
    %149 = vector.extract_strided_slice %125 {offsets = [0, 72], sizes = [17, 8], strides = [1, 1]} : vector<17x96xf32> to vector<17x8xf32>
    %cst_60 = arith.constant dense<0.000000e+00> : vector<17x17xf32>
    %150 = tpu.matmul %147, %148, %cst_60 {dimension_numbers = #tpu.dot_dimension_numbers<[1], [1], [0], [0], [0, 0, 1, 0], [], []>} : vector<17x8xf32>, vector<17x8xf32>, vector<17x17xf32> -> vector<17x17xf32>
    %cst_61 = arith.constant 0.353553385 : f32
    %151 = vector.broadcast %cst_61 : f32 to vector<17x17xf32>
    %152 = arith.mulf %150, %151 : vector<17x17xf32>
    %cst_62 = arith.constant dense<0xFF800000> : vector<17xf32>
    %153 = vector.multi_reduction <maximumf>, %152, %cst_62 [1] : vector<17x17xf32> to vector<17xf32>
    %154 = vector.shape_cast %153 : vector<17xf32> to vector<17x1xf32>
    %155 = vector.broadcast %154 : vector<17x1xf32> to vector<17x17xf32>
    %156 = arith.subf %152, %155 : vector<17x17xf32>
    %157 = math.exp %156 : vector<17x17xf32>
    %cst_63 = arith.constant dense<0.000000e+00> : vector<17xf32>
    %158 = vector.multi_reduction <add>, %157, %cst_63 [1] : vector<17x17xf32> to vector<17xf32>
    %159 = vector.shape_cast %158 : vector<17xf32> to vector<17x1xf32>
    %160 = tpu.reciprocal %159 {approx = true} : vector<17x1xf32> -> vector<17x1xf32>
    %161 = vector.broadcast %160 : vector<17x1xf32> to vector<17x17xf32>
    %162 = arith.mulf %157, %161 : vector<17x17xf32>
    %cst_64 = arith.constant dense<0.000000e+00> : vector<17x8xf32>
    %163 = tpu.matmul %162, %149, %cst_64 {dimension_numbers = #tpu.dot_dimension_numbers<[1], [0], [0], [1], [0, 0, 1, 1], [], []>} : vector<17x17xf32>, vector<17x8xf32>, vector<17x8xf32> -> vector<17x8xf32>
    %164 = vector.extract_strided_slice %42 {offsets = [8, 0], sizes = [8, 32], strides = [1, 1]} : vector<32x32xf32> to vector<8x32xf32>
    %cst_65 = arith.constant dense<0.000000e+00> : vector<17x32xf32>
    %165 = tpu.matmul %163, %164, %cst_65 {dimension_numbers = #tpu.dot_dimension_numbers<[1], [0], [0], [1], [0, 0, 1, 1], [], []>} : vector<17x8xf32>, vector<8x32xf32>, vector<17x32xf32> -> vector<17x32xf32>
    %166 = arith.addf %146, %165 : vector<17x32xf32>
    %167 = vector.extract_strided_slice %125 {offsets = [0, 16], sizes = [17, 8], strides = [1, 1]} : vector<17x96xf32> to vector<17x8xf32>
    %168 = vector.extract_strided_slice %125 {offsets = [0, 48], sizes = [17, 8], strides = [1, 1]} : vector<17x96xf32> to vector<17x8xf32>
    %169 = vector.extract_strided_slice %125 {offsets = [0, 80], sizes = [17, 8], strides = [1, 1]} : vector<17x96xf32> to vector<17x8xf32>
    %cst_66 = arith.constant dense<0.000000e+00> : vector<17x17xf32>
    %170 = tpu.matmul %167, %168, %cst_66 {dimension_numbers = #tpu.dot_dimension_numbers<[1], [1], [0], [0], [0, 0, 1, 0], [], []>} : vector<17x8xf32>, vector<17x8xf32>, vector<17x17xf32> -> vector<17x17xf32>
    %cst_67 = arith.constant 0.353553385 : f32
    %171 = vector.broadcast %cst_67 : f32 to vector<17x17xf32>
    %172 = arith.mulf %170, %171 : vector<17x17xf32>
    %cst_68 = arith.constant dense<0xFF800000> : vector<17xf32>
    %173 = vector.multi_reduction <maximumf>, %172, %cst_68 [1] : vector<17x17xf32> to vector<17xf32>
    %174 = vector.shape_cast %173 : vector<17xf32> to vector<17x1xf32>
    %175 = vector.broadcast %174 : vector<17x1xf32> to vector<17x17xf32>
    %176 = arith.subf %172, %175 : vector<17x17xf32>
    %177 = math.exp %176 : vector<17x17xf32>
    %cst_69 = arith.constant dense<0.000000e+00> : vector<17xf32>
    %178 = vector.multi_reduction <add>, %177, %cst_69 [1] : vector<17x17xf32> to vector<17xf32>
    %179 = vector.shape_cast %178 : vector<17xf32> to vector<17x1xf32>
    %180 = tpu.reciprocal %179 {approx = true} : vector<17x1xf32> -> vector<17x1xf32>
    %181 = vector.broadcast %180 : vector<17x1xf32> to vector<17x17xf32>
    %182 = arith.mulf %177, %181 : vector<17x17xf32>
    %cst_70 = arith.constant dense<0.000000e+00> : vector<17x8xf32>
    %183 = tpu.matmul %182, %169, %cst_70 {dimension_numbers = #tpu.dot_dimension_numbers<[1], [0], [0], [1], [0, 0, 1, 1], [], []>} : vector<17x17xf32>, vector<17x8xf32>, vector<17x8xf32> -> vector<17x8xf32>
    %184 = vector.extract_strided_slice %42 {offsets = [16, 0], sizes = [8, 32], strides = [1, 1]} : vector<32x32xf32> to vector<8x32xf32>
    %cst_71 = arith.constant dense<0.000000e+00> : vector<17x32xf32>
    %185 = tpu.matmul %183, %184, %cst_71 {dimension_numbers = #tpu.dot_dimension_numbers<[1], [0], [0], [1], [0, 0, 1, 1], [], []>} : vector<17x8xf32>, vector<8x32xf32>, vector<17x32xf32> -> vector<17x32xf32>
    %186 = arith.addf %166, %185 : vector<17x32xf32>
    %187 = vector.extract_strided_slice %125 {offsets = [0, 24], sizes = [17, 8], strides = [1, 1]} : vector<17x96xf32> to vector<17x8xf32>
    %188 = vector.extract_strided_slice %125 {offsets = [0, 56], sizes = [17, 8], strides = [1, 1]} : vector<17x96xf32> to vector<17x8xf32>
    %189 = vector.extract_strided_slice %125 {offsets = [0, 88], sizes = [17, 8], strides = [1, 1]} : vector<17x96xf32> to vector<17x8xf32>
    %cst_72 = arith.constant dense<0.000000e+00> : vector<17x17xf32>
    %190 = tpu.matmul %187, %188, %cst_72 {dimension_numbers = #tpu.dot_dimension_numbers<[1], [1], [0], [0], [0, 0, 1, 0], [], []>} : vector<17x8xf32>, vector<17x8xf32>, vector<17x17xf32> -> vector<17x17xf32>
    %cst_73 = arith.constant 0.353553385 : f32
    %191 = vector.broadcast %cst_73 : f32 to vector<17x17xf32>
    %192 = arith.mulf %190, %191 : vector<17x17xf32>
    %cst_74 = arith.constant dense<0xFF800000> : vector<17xf32>
    %193 = vector.multi_reduction <maximumf>, %192, %cst_74 [1] : vector<17x17xf32> to vector<17xf32>
    %194 = vector.shape_cast %193 : vector<17xf32> to vector<17x1xf32>
    %195 = vector.broadcast %194 : vector<17x1xf32> to vector<17x17xf32>
    %196 = arith.subf %192, %195 : vector<17x17xf32>
    %197 = math.exp %196 : vector<17x17xf32>
    %cst_75 = arith.constant dense<0.000000e+00> : vector<17xf32>
    %198 = vector.multi_reduction <add>, %197, %cst_75 [1] : vector<17x17xf32> to vector<17xf32>
    %199 = vector.shape_cast %198 : vector<17xf32> to vector<17x1xf32>
    %200 = tpu.reciprocal %199 {approx = true} : vector<17x1xf32> -> vector<17x1xf32>
    %201 = vector.broadcast %200 : vector<17x1xf32> to vector<17x17xf32>
    %202 = arith.mulf %197, %201 : vector<17x17xf32>
    %cst_76 = arith.constant dense<0.000000e+00> : vector<17x8xf32>
    %203 = tpu.matmul %202, %189, %cst_76 {dimension_numbers = #tpu.dot_dimension_numbers<[1], [0], [0], [1], [0, 0, 1, 1], [], []>} : vector<17x17xf32>, vector<17x8xf32>, vector<17x8xf32> -> vector<17x8xf32>
    %204 = vector.extract_strided_slice %42 {offsets = [24, 0], sizes = [8, 32], strides = [1, 1]} : vector<32x32xf32> to vector<8x32xf32>
    %cst_77 = arith.constant dense<0.000000e+00> : vector<17x32xf32>
    %205 = tpu.matmul %203, %204, %cst_77 {dimension_numbers = #tpu.dot_dimension_numbers<[1], [0], [0], [1], [0, 0, 1, 1], [], []>} : vector<17x8xf32>, vector<8x32xf32>, vector<17x32xf32> -> vector<17x32xf32>
    %206 = arith.addf %186, %205 : vector<17x32xf32>
    %207 = tpu.concatenate %124, %206 in 0 : vector<17x32xf32>, vector<17x32xf32> -> vector<34x32xf32>
    %208 = arith.addf %9, %207 : vector<34x32xf32>
    %c0_78 = arith.constant 0 : index
    %c0_79 = arith.constant 0 : index
    %c0_80 = arith.constant 0 : index
    %209 = vector.load %arg9[%c0_78, %c0_79, %c0_80] : memref<2x1x32xf32, #tpu.memory_space<vmem>>, vector<1x1x32xf32>
    %210 = vector.shape_cast %209 : vector<1x1x32xf32> to vector<1x32xf32>
    %211 = vector.broadcast %210 : vector<1x32xf32> to vector<34x32xf32>
    %212 = arith.addf %208, %211 : vector<34x32xf32>
    %c0_81 = arith.constant 0 : index
    %c0_82 = arith.constant 0 : index
    %c0_83 = arith.constant 0 : index
    %213 = vector.load %arg10[%c0_81, %c0_82, %c0_83] : memref<2x1x32xf32, #tpu.memory_space<vmem>>, vector<1x1x32xf32>
    %214 = vector.shape_cast %213 : vector<1x1x32xf32> to vector<1x32xf32>
    %c0_84 = arith.constant 0 : index
    %c0_85 = arith.constant 0 : index
    %c0_86 = arith.constant 0 : index
    %215 = vector.load %arg11[%c0_84, %c0_85, %c0_86] : memref<2x1x32xf32, #tpu.memory_space<vmem>>, vector<1x1x32xf32>
    %216 = vector.shape_cast %215 : vector<1x1x32xf32> to vector<1x32xf32>
    %cst_87 = arith.constant dense<0.000000e+00> : vector<34xf32>
    %217 = vector.multi_reduction <add>, %212, %cst_87 [1] : vector<34x32xf32> to vector<34xf32>
    %218 = vector.shape_cast %217 : vector<34xf32> to vector<34x1xf32>
    %cst_88 = arith.constant 3.200000e+01 : f32
    %219 = vector.broadcast %cst_88 : f32 to vector<34x1xf32>
    %220 = arith.divf %218, %219 : vector<34x1xf32>
    %221 = vector.broadcast %220 : vector<34x1xf32> to vector<34x32xf32>
    %222 = arith.subf %212, %221 : vector<34x32xf32>
    %223 = arith.mulf %222, %222 : vector<34x32xf32>
    %cst_89 = arith.constant dense<0.000000e+00> : vector<34xf32>
    %224 = vector.multi_reduction <add>, %223, %cst_89 [1] : vector<34x32xf32> to vector<34xf32>
    %225 = vector.shape_cast %224 : vector<34xf32> to vector<34x1xf32>
    %cst_90 = arith.constant 3.200000e+01 : f32
    %226 = vector.broadcast %cst_90 : f32 to vector<34x1xf32>
    %227 = arith.divf %225, %226 : vector<34x1xf32>
    %cst_91 = arith.constant 9.99999996E-13 : f32
    %228 = vector.broadcast %cst_91 : f32 to vector<34x1xf32>
    %229 = arith.addf %227, %228 : vector<34x1xf32>
    %230 = math.rsqrt %229 : vector<34x1xf32>
    %231 = vector.broadcast %230 : vector<34x1xf32> to vector<34x32xf32>
    %232 = arith.mulf %222, %231 : vector<34x32xf32>
    %233 = vector.broadcast %214 : vector<1x32xf32> to vector<34x32xf32>
    %234 = arith.mulf %232, %233 : vector<34x32xf32>
    %235 = vector.broadcast %216 : vector<1x32xf32> to vector<34x32xf32>
    %236 = arith.addf %234, %235 : vector<34x32xf32>
    %c0_92 = arith.constant 0 : index
    %c0_93 = arith.constant 0 : index
    %c0_94 = arith.constant 0 : index
    %237 = vector.load %arg12[%c0_92, %c0_93, %c0_94] : memref<2x32x64xf32, #tpu.memory_space<vmem>>, vector<1x32x64xf32>
    %238 = vector.shape_cast %237 : vector<1x32x64xf32> to vector<32x64xf32>
    %cst_95 = arith.constant dense<0.000000e+00> : vector<34x64xf32>
    %239 = tpu.matmul %236, %238, %cst_95 {dimension_numbers = #tpu.dot_dimension_numbers<[1], [0], [0], [1], [0, 0, 1, 1], [], []>} : vector<34x32xf32>, vector<32x64xf32>, vector<34x64xf32> -> vector<34x64xf32>
    %c0_96 = arith.constant 0 : index
    %c0_97 = arith.constant 0 : index
    %c0_98 = arith.constant 0 : index
    %240 = vector.load %arg13[%c0_96, %c0_97, %c0_98] : memref<2x1x64xf32, #tpu.memory_space<vmem>>, vector<1x1x64xf32>
    %241 = vector.shape_cast %240 : vector<1x1x64xf32> to vector<1x64xf32>
    %242 = vector.broadcast %241 : vector<1x64xf32> to vector<34x64xf32>
    %243 = arith.addf %239, %242 : vector<34x64xf32>
    %cst_99 = arith.constant 5.000000e-01 : f32
    %244 = vector.broadcast %cst_99 : f32 to vector<34x64xf32>
    %245 = arith.mulf %244, %243 : vector<34x64xf32>
    %cst_100 = arith.constant 4.471500e-02 : f32
    %246 = vector.broadcast %cst_100 : f32 to vector<34x64xf32>
    %247 = arith.mulf %246, %243 : vector<34x64xf32>
    %248 = arith.mulf %247, %243 : vector<34x64xf32>
    %249 = arith.mulf %248, %243 : vector<34x64xf32>
    %250 = arith.addf %243, %249 : vector<34x64xf32>
    %cst_101 = arith.constant 0.797884583 : f32
    %251 = vector.broadcast %cst_101 : f32 to vector<34x64xf32>
    %252 = arith.mulf %251, %250 : vector<34x64xf32>
    %253 = math.tanh %252 : vector<34x64xf32>
    %cst_102 = arith.constant 1.000000e+00 : f32
    %254 = vector.broadcast %cst_102 : f32 to vector<34x64xf32>
    %255 = arith.addf %254, %253 : vector<34x64xf32>
    %256 = arith.mulf %245, %255 : vector<34x64xf32>
    %c0_103 = arith.constant 0 : index
    %c0_104 = arith.constant 0 : index
    %c0_105 = arith.constant 0 : index
    %257 = vector.load %arg14[%c0_103, %c0_104, %c0_105] : memref<2x64x32xf32, #tpu.memory_space<vmem>>, vector<1x64x32xf32>
    %258 = vector.shape_cast %257 : vector<1x64x32xf32> to vector<64x32xf32>
    %cst_106 = arith.constant dense<0.000000e+00> : vector<34x32xf32>
    %259 = tpu.matmul %256, %258, %cst_106 {dimension_numbers = #tpu.dot_dimension_numbers<[1], [0], [0], [1], [0, 0, 1, 1], [], []>} : vector<34x64xf32>, vector<64x32xf32>, vector<34x32xf32> -> vector<34x32xf32>
    %260 = arith.addf %212, %259 : vector<34x32xf32>
    %c0_107 = arith.constant 0 : index
    %c0_108 = arith.constant 0 : index
    %c0_109 = arith.constant 0 : index
    %261 = vector.load %arg15[%c0_107, %c0_108, %c0_109] : memref<2x1x32xf32, #tpu.memory_space<vmem>>, vector<1x1x32xf32>
    %262 = vector.shape_cast %261 : vector<1x1x32xf32> to vector<1x32xf32>
    %263 = vector.broadcast %262 : vector<1x32xf32> to vector<34x32xf32>
    %264 = arith.addf %260, %263 : vector<34x32xf32>
    %c1 = arith.constant 1 : index
    %c0_110 = arith.constant 0 : index
    %c0_111 = arith.constant 0 : index
    %265 = vector.load %arg4[%c1, %c0_110, %c0_111] : memref<2x1x32xf32, #tpu.memory_space<vmem>>, vector<1x1x32xf32>
    %266 = vector.shape_cast %265 : vector<1x1x32xf32> to vector<1x32xf32>
    %c1_112 = arith.constant 1 : index
    %c0_113 = arith.constant 0 : index
    %c0_114 = arith.constant 0 : index
    %267 = vector.load %arg5[%c1_112, %c0_113, %c0_114] : memref<2x1x32xf32, #tpu.memory_space<vmem>>, vector<1x1x32xf32>
    %268 = vector.shape_cast %267 : vector<1x1x32xf32> to vector<1x32xf32>
    %cst_115 = arith.constant dense<0.000000e+00> : vector<34xf32>
    %269 = vector.multi_reduction <add>, %264, %cst_115 [1] : vector<34x32xf32> to vector<34xf32>
    %270 = vector.shape_cast %269 : vector<34xf32> to vector<34x1xf32>
    %cst_116 = arith.constant 3.200000e+01 : f32
    %271 = vector.broadcast %cst_116 : f32 to vector<34x1xf32>
    %272 = arith.divf %270, %271 : vector<34x1xf32>
    %273 = vector.broadcast %272 : vector<34x1xf32> to vector<34x32xf32>
    %274 = arith.subf %264, %273 : vector<34x32xf32>
    %275 = arith.mulf %274, %274 : vector<34x32xf32>
    %cst_117 = arith.constant dense<0.000000e+00> : vector<34xf32>
    %276 = vector.multi_reduction <add>, %275, %cst_117 [1] : vector<34x32xf32> to vector<34xf32>
    %277 = vector.shape_cast %276 : vector<34xf32> to vector<34x1xf32>
    %cst_118 = arith.constant 3.200000e+01 : f32
    %278 = vector.broadcast %cst_118 : f32 to vector<34x1xf32>
    %279 = arith.divf %277, %278 : vector<34x1xf32>
    %cst_119 = arith.constant 9.99999996E-13 : f32
    %280 = vector.broadcast %cst_119 : f32 to vector<34x1xf32>
    %281 = arith.addf %279, %280 : vector<34x1xf32>
    %282 = math.rsqrt %281 : vector<34x1xf32>
    %283 = vector.broadcast %282 : vector<34x1xf32> to vector<34x32xf32>
    %284 = arith.mulf %274, %283 : vector<34x32xf32>
    %285 = vector.broadcast %266 : vector<1x32xf32> to vector<34x32xf32>
    %286 = arith.mulf %284, %285 : vector<34x32xf32>
    %287 = vector.broadcast %268 : vector<1x32xf32> to vector<34x32xf32>
    %288 = arith.addf %286, %287 : vector<34x32xf32>
    %c1_120 = arith.constant 1 : index
    %c0_121 = arith.constant 0 : index
    %c0_122 = arith.constant 0 : index
    %289 = vector.load %arg6[%c1_120, %c0_121, %c0_122] : memref<2x32x96xf32, #tpu.memory_space<vmem>>, vector<1x32x96xf32>
    %290 = vector.shape_cast %289 : vector<1x32x96xf32> to vector<32x96xf32>
    %cst_123 = arith.constant dense<0.000000e+00> : vector<34x96xf32>
    %291 = tpu.matmul %288, %290, %cst_123 {dimension_numbers = #tpu.dot_dimension_numbers<[1], [0], [0], [1], [0, 0, 1, 1], [], []>} : vector<34x32xf32>, vector<32x96xf32>, vector<34x96xf32> -> vector<34x96xf32>
    %c1_124 = arith.constant 1 : index
    %c0_125 = arith.constant 0 : index
    %c0_126 = arith.constant 0 : index
    %292 = vector.load %arg7[%c1_124, %c0_125, %c0_126] : memref<2x1x96xf32, #tpu.memory_space<vmem>>, vector<1x1x96xf32>
    %293 = vector.shape_cast %292 : vector<1x1x96xf32> to vector<1x96xf32>
    %294 = vector.broadcast %293 : vector<1x96xf32> to vector<34x96xf32>
    %295 = arith.addf %291, %294 : vector<34x96xf32>
    %c1_127 = arith.constant 1 : index
    %c0_128 = arith.constant 0 : index
    %c0_129 = arith.constant 0 : index
    %296 = vector.load %arg8[%c1_127, %c0_128, %c0_129] : memref<2x32x32xf32, #tpu.memory_space<vmem>>, vector<1x32x32xf32>
    %297 = vector.shape_cast %296 : vector<1x32x32xf32> to vector<32x32xf32>
    %298 = vector.extract_strided_slice %295 {offsets = [0, 0], sizes = [17, 96], strides = [1, 1]} : vector<34x96xf32> to vector<17x96xf32>
    %cst_130 = arith.constant 0.000000e+00 : f32
    %299 = vector.broadcast %cst_130 : f32 to vector<17x32xf32>
    %300 = vector.extract_strided_slice %298 {offsets = [0, 0], sizes = [17, 8], strides = [1, 1]} : vector<17x96xf32> to vector<17x8xf32>
    %301 = vector.extract_strided_slice %298 {offsets = [0, 32], sizes = [17, 8], strides = [1, 1]} : vector<17x96xf32> to vector<17x8xf32>
    %302 = vector.extract_strided_slice %298 {offsets = [0, 64], sizes = [17, 8], strides = [1, 1]} : vector<17x96xf32> to vector<17x8xf32>
    %cst_131 = arith.constant dense<0.000000e+00> : vector<17x17xf32>
    %303 = tpu.matmul %300, %301, %cst_131 {dimension_numbers = #tpu.dot_dimension_numbers<[1], [1], [0], [0], [0, 0, 1, 0], [], []>} : vector<17x8xf32>, vector<17x8xf32>, vector<17x17xf32> -> vector<17x17xf32>
    %cst_132 = arith.constant 0.353553385 : f32
    %304 = vector.broadcast %cst_132 : f32 to vector<17x17xf32>
    %305 = arith.mulf %303, %304 : vector<17x17xf32>
    %cst_133 = arith.constant dense<0xFF800000> : vector<17xf32>
    %306 = vector.multi_reduction <maximumf>, %305, %cst_133 [1] : vector<17x17xf32> to vector<17xf32>
    %307 = vector.shape_cast %306 : vector<17xf32> to vector<17x1xf32>
    %308 = vector.broadcast %307 : vector<17x1xf32> to vector<17x17xf32>
    %309 = arith.subf %305, %308 : vector<17x17xf32>
    %310 = math.exp %309 : vector<17x17xf32>
    %cst_134 = arith.constant dense<0.000000e+00> : vector<17xf32>
    %311 = vector.multi_reduction <add>, %310, %cst_134 [1] : vector<17x17xf32> to vector<17xf32>
    %312 = vector.shape_cast %311 : vector<17xf32> to vector<17x1xf32>
    %313 = tpu.reciprocal %312 {approx = true} : vector<17x1xf32> -> vector<17x1xf32>
    %314 = vector.broadcast %313 : vector<17x1xf32> to vector<17x17xf32>
    %315 = arith.mulf %310, %314 : vector<17x17xf32>
    %cst_135 = arith.constant dense<0.000000e+00> : vector<17x8xf32>
    %316 = tpu.matmul %315, %302, %cst_135 {dimension_numbers = #tpu.dot_dimension_numbers<[1], [0], [0], [1], [0, 0, 1, 1], [], []>} : vector<17x17xf32>, vector<17x8xf32>, vector<17x8xf32> -> vector<17x8xf32>
    %317 = vector.extract_strided_slice %297 {offsets = [0, 0], sizes = [8, 32], strides = [1, 1]} : vector<32x32xf32> to vector<8x32xf32>
    %cst_136 = arith.constant dense<0.000000e+00> : vector<17x32xf32>
    %318 = tpu.matmul %316, %317, %cst_136 {dimension_numbers = #tpu.dot_dimension_numbers<[1], [0], [0], [1], [0, 0, 1, 1], [], []>} : vector<17x8xf32>, vector<8x32xf32>, vector<17x32xf32> -> vector<17x32xf32>
    %319 = arith.addf %299, %318 : vector<17x32xf32>
    %320 = vector.extract_strided_slice %298 {offsets = [0, 8], sizes = [17, 8], strides = [1, 1]} : vector<17x96xf32> to vector<17x8xf32>
    %321 = vector.extract_strided_slice %298 {offsets = [0, 40], sizes = [17, 8], strides = [1, 1]} : vector<17x96xf32> to vector<17x8xf32>
    %322 = vector.extract_strided_slice %298 {offsets = [0, 72], sizes = [17, 8], strides = [1, 1]} : vector<17x96xf32> to vector<17x8xf32>
    %cst_137 = arith.constant dense<0.000000e+00> : vector<17x17xf32>
    %323 = tpu.matmul %320, %321, %cst_137 {dimension_numbers = #tpu.dot_dimension_numbers<[1], [1], [0], [0], [0, 0, 1, 0], [], []>} : vector<17x8xf32>, vector<17x8xf32>, vector<17x17xf32> -> vector<17x17xf32>
    %cst_138 = arith.constant 0.353553385 : f32
    %324 = vector.broadcast %cst_138 : f32 to vector<17x17xf32>
    %325 = arith.mulf %323, %324 : vector<17x17xf32>
    %cst_139 = arith.constant dense<0xFF800000> : vector<17xf32>
    %326 = vector.multi_reduction <maximumf>, %325, %cst_139 [1] : vector<17x17xf32> to vector<17xf32>
    %327 = vector.shape_cast %326 : vector<17xf32> to vector<17x1xf32>
    %328 = vector.broadcast %327 : vector<17x1xf32> to vector<17x17xf32>
    %329 = arith.subf %325, %328 : vector<17x17xf32>
    %330 = math.exp %329 : vector<17x17xf32>
    %cst_140 = arith.constant dense<0.000000e+00> : vector<17xf32>
    %331 = vector.multi_reduction <add>, %330, %cst_140 [1] : vector<17x17xf32> to vector<17xf32>
    %332 = vector.shape_cast %331 : vector<17xf32> to vector<17x1xf32>
    %333 = tpu.reciprocal %332 {approx = true} : vector<17x1xf32> -> vector<17x1xf32>
    %334 = vector.broadcast %333 : vector<17x1xf32> to vector<17x17xf32>
    %335 = arith.mulf %330, %334 : vector<17x17xf32>
    %cst_141 = arith.constant dense<0.000000e+00> : vector<17x8xf32>
    %336 = tpu.matmul %335, %322, %cst_141 {dimension_numbers = #tpu.dot_dimension_numbers<[1], [0], [0], [1], [0, 0, 1, 1], [], []>} : vector<17x17xf32>, vector<17x8xf32>, vector<17x8xf32> -> vector<17x8xf32>
    %337 = vector.extract_strided_slice %297 {offsets = [8, 0], sizes = [8, 32], strides = [1, 1]} : vector<32x32xf32> to vector<8x32xf32>
    %cst_142 = arith.constant dense<0.000000e+00> : vector<17x32xf32>
    %338 = tpu.matmul %336, %337, %cst_142 {dimension_numbers = #tpu.dot_dimension_numbers<[1], [0], [0], [1], [0, 0, 1, 1], [], []>} : vector<17x8xf32>, vector<8x32xf32>, vector<17x32xf32> -> vector<17x32xf32>
    %339 = arith.addf %319, %338 : vector<17x32xf32>
    %340 = vector.extract_strided_slice %298 {offsets = [0, 16], sizes = [17, 8], strides = [1, 1]} : vector<17x96xf32> to vector<17x8xf32>
    %341 = vector.extract_strided_slice %298 {offsets = [0, 48], sizes = [17, 8], strides = [1, 1]} : vector<17x96xf32> to vector<17x8xf32>
    %342 = vector.extract_strided_slice %298 {offsets = [0, 80], sizes = [17, 8], strides = [1, 1]} : vector<17x96xf32> to vector<17x8xf32>
    %cst_143 = arith.constant dense<0.000000e+00> : vector<17x17xf32>
    %343 = tpu.matmul %340, %341, %cst_143 {dimension_numbers = #tpu.dot_dimension_numbers<[1], [1], [0], [0], [0, 0, 1, 0], [], []>} : vector<17x8xf32>, vector<17x8xf32>, vector<17x17xf32> -> vector<17x17xf32>
    %cst_144 = arith.constant 0.353553385 : f32
    %344 = vector.broadcast %cst_144 : f32 to vector<17x17xf32>
    %345 = arith.mulf %343, %344 : vector<17x17xf32>
    %cst_145 = arith.constant dense<0xFF800000> : vector<17xf32>
    %346 = vector.multi_reduction <maximumf>, %345, %cst_145 [1] : vector<17x17xf32> to vector<17xf32>
    %347 = vector.shape_cast %346 : vector<17xf32> to vector<17x1xf32>
    %348 = vector.broadcast %347 : vector<17x1xf32> to vector<17x17xf32>
    %349 = arith.subf %345, %348 : vector<17x17xf32>
    %350 = math.exp %349 : vector<17x17xf32>
    %cst_146 = arith.constant dense<0.000000e+00> : vector<17xf32>
    %351 = vector.multi_reduction <add>, %350, %cst_146 [1] : vector<17x17xf32> to vector<17xf32>
    %352 = vector.shape_cast %351 : vector<17xf32> to vector<17x1xf32>
    %353 = tpu.reciprocal %352 {approx = true} : vector<17x1xf32> -> vector<17x1xf32>
    %354 = vector.broadcast %353 : vector<17x1xf32> to vector<17x17xf32>
    %355 = arith.mulf %350, %354 : vector<17x17xf32>
    %cst_147 = arith.constant dense<0.000000e+00> : vector<17x8xf32>
    %356 = tpu.matmul %355, %342, %cst_147 {dimension_numbers = #tpu.dot_dimension_numbers<[1], [0], [0], [1], [0, 0, 1, 1], [], []>} : vector<17x17xf32>, vector<17x8xf32>, vector<17x8xf32> -> vector<17x8xf32>
    %357 = vector.extract_strided_slice %297 {offsets = [16, 0], sizes = [8, 32], strides = [1, 1]} : vector<32x32xf32> to vector<8x32xf32>
    %cst_148 = arith.constant dense<0.000000e+00> : vector<17x32xf32>
    %358 = tpu.matmul %356, %357, %cst_148 {dimension_numbers = #tpu.dot_dimension_numbers<[1], [0], [0], [1], [0, 0, 1, 1], [], []>} : vector<17x8xf32>, vector<8x32xf32>, vector<17x32xf32> -> vector<17x32xf32>
    %359 = arith.addf %339, %358 : vector<17x32xf32>
    %360 = vector.extract_strided_slice %298 {offsets = [0, 24], sizes = [17, 8], strides = [1, 1]} : vector<17x96xf32> to vector<17x8xf32>
    %361 = vector.extract_strided_slice %298 {offsets = [0, 56], sizes = [17, 8], strides = [1, 1]} : vector<17x96xf32> to vector<17x8xf32>
    %362 = vector.extract_strided_slice %298 {offsets = [0, 88], sizes = [17, 8], strides = [1, 1]} : vector<17x96xf32> to vector<17x8xf32>
    %cst_149 = arith.constant dense<0.000000e+00> : vector<17x17xf32>
    %363 = tpu.matmul %360, %361, %cst_149 {dimension_numbers = #tpu.dot_dimension_numbers<[1], [1], [0], [0], [0, 0, 1, 0], [], []>} : vector<17x8xf32>, vector<17x8xf32>, vector<17x17xf32> -> vector<17x17xf32>
    %cst_150 = arith.constant 0.353553385 : f32
    %364 = vector.broadcast %cst_150 : f32 to vector<17x17xf32>
    %365 = arith.mulf %363, %364 : vector<17x17xf32>
    %cst_151 = arith.constant dense<0xFF800000> : vector<17xf32>
    %366 = vector.multi_reduction <maximumf>, %365, %cst_151 [1] : vector<17x17xf32> to vector<17xf32>
    %367 = vector.shape_cast %366 : vector<17xf32> to vector<17x1xf32>
    %368 = vector.broadcast %367 : vector<17x1xf32> to vector<17x17xf32>
    %369 = arith.subf %365, %368 : vector<17x17xf32>
    %370 = math.exp %369 : vector<17x17xf32>
    %cst_152 = arith.constant dense<0.000000e+00> : vector<17xf32>
    %371 = vector.multi_reduction <add>, %370, %cst_152 [1] : vector<17x17xf32> to vector<17xf32>
    %372 = vector.shape_cast %371 : vector<17xf32> to vector<17x1xf32>
    %373 = tpu.reciprocal %372 {approx = true} : vector<17x1xf32> -> vector<17x1xf32>
    %374 = vector.broadcast %373 : vector<17x1xf32> to vector<17x17xf32>
    %375 = arith.mulf %370, %374 : vector<17x17xf32>
    %cst_153 = arith.constant dense<0.000000e+00> : vector<17x8xf32>
    %376 = tpu.matmul %375, %362, %cst_153 {dimension_numbers = #tpu.dot_dimension_numbers<[1], [0], [0], [1], [0, 0, 1, 1], [], []>} : vector<17x17xf32>, vector<17x8xf32>, vector<17x8xf32> -> vector<17x8xf32>
    %377 = vector.extract_strided_slice %297 {offsets = [24, 0], sizes = [8, 32], strides = [1, 1]} : vector<32x32xf32> to vector<8x32xf32>
    %cst_154 = arith.constant dense<0.000000e+00> : vector<17x32xf32>
    %378 = tpu.matmul %376, %377, %cst_154 {dimension_numbers = #tpu.dot_dimension_numbers<[1], [0], [0], [1], [0, 0, 1, 1], [], []>} : vector<17x8xf32>, vector<8x32xf32>, vector<17x32xf32> -> vector<17x32xf32>
    %379 = arith.addf %359, %378 : vector<17x32xf32>
    %380 = vector.extract_strided_slice %295 {offsets = [17, 0], sizes = [17, 96], strides = [1, 1]} : vector<34x96xf32> to vector<17x96xf32>
    %cst_155 = arith.constant 0.000000e+00 : f32
    %381 = vector.broadcast %cst_155 : f32 to vector<17x32xf32>
    %382 = vector.extract_strided_slice %380 {offsets = [0, 0], sizes = [17, 8], strides = [1, 1]} : vector<17x96xf32> to vector<17x8xf32>
    %383 = vector.extract_strided_slice %380 {offsets = [0, 32], sizes = [17, 8], strides = [1, 1]} : vector<17x96xf32> to vector<17x8xf32>
    %384 = vector.extract_strided_slice %380 {offsets = [0, 64], sizes = [17, 8], strides = [1, 1]} : vector<17x96xf32> to vector<17x8xf32>
    %cst_156 = arith.constant dense<0.000000e+00> : vector<17x17xf32>
    %385 = tpu.matmul %382, %383, %cst_156 {dimension_numbers = #tpu.dot_dimension_numbers<[1], [1], [0], [0], [0, 0, 1, 0], [], []>} : vector<17x8xf32>, vector<17x8xf32>, vector<17x17xf32> -> vector<17x17xf32>
    %cst_157 = arith.constant 0.353553385 : f32
    %386 = vector.broadcast %cst_157 : f32 to vector<17x17xf32>
    %387 = arith.mulf %385, %386 : vector<17x17xf32>
    %cst_158 = arith.constant dense<0xFF800000> : vector<17xf32>
    %388 = vector.multi_reduction <maximumf>, %387, %cst_158 [1] : vector<17x17xf32> to vector<17xf32>
    %389 = vector.shape_cast %388 : vector<17xf32> to vector<17x1xf32>
    %390 = vector.broadcast %389 : vector<17x1xf32> to vector<17x17xf32>
    %391 = arith.subf %387, %390 : vector<17x17xf32>
    %392 = math.exp %391 : vector<17x17xf32>
    %cst_159 = arith.constant dense<0.000000e+00> : vector<17xf32>
    %393 = vector.multi_reduction <add>, %392, %cst_159 [1] : vector<17x17xf32> to vector<17xf32>
    %394 = vector.shape_cast %393 : vector<17xf32> to vector<17x1xf32>
    %395 = tpu.reciprocal %394 {approx = true} : vector<17x1xf32> -> vector<17x1xf32>
    %396 = vector.broadcast %395 : vector<17x1xf32> to vector<17x17xf32>
    %397 = arith.mulf %392, %396 : vector<17x17xf32>
    %cst_160 = arith.constant dense<0.000000e+00> : vector<17x8xf32>
    %398 = tpu.matmul %397, %384, %cst_160 {dimension_numbers = #tpu.dot_dimension_numbers<[1], [0], [0], [1], [0, 0, 1, 1], [], []>} : vector<17x17xf32>, vector<17x8xf32>, vector<17x8xf32> -> vector<17x8xf32>
    %399 = vector.extract_strided_slice %297 {offsets = [0, 0], sizes = [8, 32], strides = [1, 1]} : vector<32x32xf32> to vector<8x32xf32>
    %cst_161 = arith.constant dense<0.000000e+00> : vector<17x32xf32>
    %400 = tpu.matmul %398, %399, %cst_161 {dimension_numbers = #tpu.dot_dimension_numbers<[1], [0], [0], [1], [0, 0, 1, 1], [], []>} : vector<17x8xf32>, vector<8x32xf32>, vector<17x32xf32> -> vector<17x32xf32>
    %401 = arith.addf %381, %400 : vector<17x32xf32>
    %402 = vector.extract_strided_slice %380 {offsets = [0, 8], sizes = [17, 8], strides = [1, 1]} : vector<17x96xf32> to vector<17x8xf32>
    %403 = vector.extract_strided_slice %380 {offsets = [0, 40], sizes = [17, 8], strides = [1, 1]} : vector<17x96xf32> to vector<17x8xf32>
    %404 = vector.extract_strided_slice %380 {offsets = [0, 72], sizes = [17, 8], strides = [1, 1]} : vector<17x96xf32> to vector<17x8xf32>
    %cst_162 = arith.constant dense<0.000000e+00> : vector<17x17xf32>
    %405 = tpu.matmul %402, %403, %cst_162 {dimension_numbers = #tpu.dot_dimension_numbers<[1], [1], [0], [0], [0, 0, 1, 0], [], []>} : vector<17x8xf32>, vector<17x8xf32>, vector<17x17xf32> -> vector<17x17xf32>
    %cst_163 = arith.constant 0.353553385 : f32
    %406 = vector.broadcast %cst_163 : f32 to vector<17x17xf32>
    %407 = arith.mulf %405, %406 : vector<17x17xf32>
    %cst_164 = arith.constant dense<0xFF800000> : vector<17xf32>
    %408 = vector.multi_reduction <maximumf>, %407, %cst_164 [1] : vector<17x17xf32> to vector<17xf32>
    %409 = vector.shape_cast %408 : vector<17xf32> to vector<17x1xf32>
    %410 = vector.broadcast %409 : vector<17x1xf32> to vector<17x17xf32>
    %411 = arith.subf %407, %410 : vector<17x17xf32>
    %412 = math.exp %411 : vector<17x17xf32>
    %cst_165 = arith.constant dense<0.000000e+00> : vector<17xf32>
    %413 = vector.multi_reduction <add>, %412, %cst_165 [1] : vector<17x17xf32> to vector<17xf32>
    %414 = vector.shape_cast %413 : vector<17xf32> to vector<17x1xf32>
    %415 = tpu.reciprocal %414 {approx = true} : vector<17x1xf32> -> vector<17x1xf32>
    %416 = vector.broadcast %415 : vector<17x1xf32> to vector<17x17xf32>
    %417 = arith.mulf %412, %416 : vector<17x17xf32>
    %cst_166 = arith.constant dense<0.000000e+00> : vector<17x8xf32>
    %418 = tpu.matmul %417, %404, %cst_166 {dimension_numbers = #tpu.dot_dimension_numbers<[1], [0], [0], [1], [0, 0, 1, 1], [], []>} : vector<17x17xf32>, vector<17x8xf32>, vector<17x8xf32> -> vector<17x8xf32>
    %419 = vector.extract_strided_slice %297 {offsets = [8, 0], sizes = [8, 32], strides = [1, 1]} : vector<32x32xf32> to vector<8x32xf32>
    %cst_167 = arith.constant dense<0.000000e+00> : vector<17x32xf32>
    %420 = tpu.matmul %418, %419, %cst_167 {dimension_numbers = #tpu.dot_dimension_numbers<[1], [0], [0], [1], [0, 0, 1, 1], [], []>} : vector<17x8xf32>, vector<8x32xf32>, vector<17x32xf32> -> vector<17x32xf32>
    %421 = arith.addf %401, %420 : vector<17x32xf32>
    %422 = vector.extract_strided_slice %380 {offsets = [0, 16], sizes = [17, 8], strides = [1, 1]} : vector<17x96xf32> to vector<17x8xf32>
    %423 = vector.extract_strided_slice %380 {offsets = [0, 48], sizes = [17, 8], strides = [1, 1]} : vector<17x96xf32> to vector<17x8xf32>
    %424 = vector.extract_strided_slice %380 {offsets = [0, 80], sizes = [17, 8], strides = [1, 1]} : vector<17x96xf32> to vector<17x8xf32>
    %cst_168 = arith.constant dense<0.000000e+00> : vector<17x17xf32>
    %425 = tpu.matmul %422, %423, %cst_168 {dimension_numbers = #tpu.dot_dimension_numbers<[1], [1], [0], [0], [0, 0, 1, 0], [], []>} : vector<17x8xf32>, vector<17x8xf32>, vector<17x17xf32> -> vector<17x17xf32>
    %cst_169 = arith.constant 0.353553385 : f32
    %426 = vector.broadcast %cst_169 : f32 to vector<17x17xf32>
    %427 = arith.mulf %425, %426 : vector<17x17xf32>
    %cst_170 = arith.constant dense<0xFF800000> : vector<17xf32>
    %428 = vector.multi_reduction <maximumf>, %427, %cst_170 [1] : vector<17x17xf32> to vector<17xf32>
    %429 = vector.shape_cast %428 : vector<17xf32> to vector<17x1xf32>
    %430 = vector.broadcast %429 : vector<17x1xf32> to vector<17x17xf32>
    %431 = arith.subf %427, %430 : vector<17x17xf32>
    %432 = math.exp %431 : vector<17x17xf32>
    %cst_171 = arith.constant dense<0.000000e+00> : vector<17xf32>
    %433 = vector.multi_reduction <add>, %432, %cst_171 [1] : vector<17x17xf32> to vector<17xf32>
    %434 = vector.shape_cast %433 : vector<17xf32> to vector<17x1xf32>
    %435 = tpu.reciprocal %434 {approx = true} : vector<17x1xf32> -> vector<17x1xf32>
    %436 = vector.broadcast %435 : vector<17x1xf32> to vector<17x17xf32>
    %437 = arith.mulf %432, %436 : vector<17x17xf32>
    %cst_172 = arith.constant dense<0.000000e+00> : vector<17x8xf32>
    %438 = tpu.matmul %437, %424, %cst_172 {dimension_numbers = #tpu.dot_dimension_numbers<[1], [0], [0], [1], [0, 0, 1, 1], [], []>} : vector<17x17xf32>, vector<17x8xf32>, vector<17x8xf32> -> vector<17x8xf32>
    %439 = vector.extract_strided_slice %297 {offsets = [16, 0], sizes = [8, 32], strides = [1, 1]} : vector<32x32xf32> to vector<8x32xf32>
    %cst_173 = arith.constant dense<0.000000e+00> : vector<17x32xf32>
    %440 = tpu.matmul %438, %439, %cst_173 {dimension_numbers = #tpu.dot_dimension_numbers<[1], [0], [0], [1], [0, 0, 1, 1], [], []>} : vector<17x8xf32>, vector<8x32xf32>, vector<17x32xf32> -> vector<17x32xf32>
    %441 = arith.addf %421, %440 : vector<17x32xf32>
    %442 = vector.extract_strided_slice %380 {offsets = [0, 24], sizes = [17, 8], strides = [1, 1]} : vector<17x96xf32> to vector<17x8xf32>
    %443 = vector.extract_strided_slice %380 {offsets = [0, 56], sizes = [17, 8], strides = [1, 1]} : vector<17x96xf32> to vector<17x8xf32>
    %444 = vector.extract_strided_slice %380 {offsets = [0, 88], sizes = [17, 8], strides = [1, 1]} : vector<17x96xf32> to vector<17x8xf32>
    %cst_174 = arith.constant dense<0.000000e+00> : vector<17x17xf32>
    %445 = tpu.matmul %442, %443, %cst_174 {dimension_numbers = #tpu.dot_dimension_numbers<[1], [1], [0], [0], [0, 0, 1, 0], [], []>} : vector<17x8xf32>, vector<17x8xf32>, vector<17x17xf32> -> vector<17x17xf32>
    %cst_175 = arith.constant 0.353553385 : f32
    %446 = vector.broadcast %cst_175 : f32 to vector<17x17xf32>
    %447 = arith.mulf %445, %446 : vector<17x17xf32>
    %cst_176 = arith.constant dense<0xFF800000> : vector<17xf32>
    %448 = vector.multi_reduction <maximumf>, %447, %cst_176 [1] : vector<17x17xf32> to vector<17xf32>
    %449 = vector.shape_cast %448 : vector<17xf32> to vector<17x1xf32>
    %450 = vector.broadcast %449 : vector<17x1xf32> to vector<17x17xf32>
    %451 = arith.subf %447, %450 : vector<17x17xf32>
    %452 = math.exp %451 : vector<17x17xf32>
    %cst_177 = arith.constant dense<0.000000e+00> : vector<17xf32>
    %453 = vector.multi_reduction <add>, %452, %cst_177 [1] : vector<17x17xf32> to vector<17xf32>
    %454 = vector.shape_cast %453 : vector<17xf32> to vector<17x1xf32>
    %455 = tpu.reciprocal %454 {approx = true} : vector<17x1xf32> -> vector<17x1xf32>
    %456 = vector.broadcast %455 : vector<17x1xf32> to vector<17x17xf32>
    %457 = arith.mulf %452, %456 : vector<17x17xf32>
    %cst_178 = arith.constant dense<0.000000e+00> : vector<17x8xf32>
    %458 = tpu.matmul %457, %444, %cst_178 {dimension_numbers = #tpu.dot_dimension_numbers<[1], [0], [0], [1], [0, 0, 1, 1], [], []>} : vector<17x17xf32>, vector<17x8xf32>, vector<17x8xf32> -> vector<17x8xf32>
    %459 = vector.extract_strided_slice %297 {offsets = [24, 0], sizes = [8, 32], strides = [1, 1]} : vector<32x32xf32> to vector<8x32xf32>
    %cst_179 = arith.constant dense<0.000000e+00> : vector<17x32xf32>
    %460 = tpu.matmul %458, %459, %cst_179 {dimension_numbers = #tpu.dot_dimension_numbers<[1], [0], [0], [1], [0, 0, 1, 1], [], []>} : vector<17x8xf32>, vector<8x32xf32>, vector<17x32xf32> -> vector<17x32xf32>
    %461 = arith.addf %441, %460 : vector<17x32xf32>
    %462 = tpu.concatenate %379, %461 in 0 : vector<17x32xf32>, vector<17x32xf32> -> vector<34x32xf32>
    %463 = arith.addf %264, %462 : vector<34x32xf32>
    %c1_180 = arith.constant 1 : index
    %c0_181 = arith.constant 0 : index
    %c0_182 = arith.constant 0 : index
    %464 = vector.load %arg9[%c1_180, %c0_181, %c0_182] : memref<2x1x32xf32, #tpu.memory_space<vmem>>, vector<1x1x32xf32>
    %465 = vector.shape_cast %464 : vector<1x1x32xf32> to vector<1x32xf32>
    %466 = vector.broadcast %465 : vector<1x32xf32> to vector<34x32xf32>
    %467 = arith.addf %463, %466 : vector<34x32xf32>
    %c1_183 = arith.constant 1 : index
    %c0_184 = arith.constant 0 : index
    %c0_185 = arith.constant 0 : index
    %468 = vector.load %arg10[%c1_183, %c0_184, %c0_185] : memref<2x1x32xf32, #tpu.memory_space<vmem>>, vector<1x1x32xf32>
    %469 = vector.shape_cast %468 : vector<1x1x32xf32> to vector<1x32xf32>
    %c1_186 = arith.constant 1 : index
    %c0_187 = arith.constant 0 : index
    %c0_188 = arith.constant 0 : index
    %470 = vector.load %arg11[%c1_186, %c0_187, %c0_188] : memref<2x1x32xf32, #tpu.memory_space<vmem>>, vector<1x1x32xf32>
    %471 = vector.shape_cast %470 : vector<1x1x32xf32> to vector<1x32xf32>
    %cst_189 = arith.constant dense<0.000000e+00> : vector<34xf32>
    %472 = vector.multi_reduction <add>, %467, %cst_189 [1] : vector<34x32xf32> to vector<34xf32>
    %473 = vector.shape_cast %472 : vector<34xf32> to vector<34x1xf32>
    %cst_190 = arith.constant 3.200000e+01 : f32
    %474 = vector.broadcast %cst_190 : f32 to vector<34x1xf32>
    %475 = arith.divf %473, %474 : vector<34x1xf32>
    %476 = vector.broadcast %475 : vector<34x1xf32> to vector<34x32xf32>
    %477 = arith.subf %467, %476 : vector<34x32xf32>
    %478 = arith.mulf %477, %477 : vector<34x32xf32>
    %cst_191 = arith.constant dense<0.000000e+00> : vector<34xf32>
    %479 = vector.multi_reduction <add>, %478, %cst_191 [1] : vector<34x32xf32> to vector<34xf32>
    %480 = vector.shape_cast %479 : vector<34xf32> to vector<34x1xf32>
    %cst_192 = arith.constant 3.200000e+01 : f32
    %481 = vector.broadcast %cst_192 : f32 to vector<34x1xf32>
    %482 = arith.divf %480, %481 : vector<34x1xf32>
    %cst_193 = arith.constant 9.99999996E-13 : f32
    %483 = vector.broadcast %cst_193 : f32 to vector<34x1xf32>
    %484 = arith.addf %482, %483 : vector<34x1xf32>
    %485 = math.rsqrt %484 : vector<34x1xf32>
    %486 = vector.broadcast %485 : vector<34x1xf32> to vector<34x32xf32>
    %487 = arith.mulf %477, %486 : vector<34x32xf32>
    %488 = vector.broadcast %469 : vector<1x32xf32> to vector<34x32xf32>
    %489 = arith.mulf %487, %488 : vector<34x32xf32>
    %490 = vector.broadcast %471 : vector<1x32xf32> to vector<34x32xf32>
    %491 = arith.addf %489, %490 : vector<34x32xf32>
    %c1_194 = arith.constant 1 : index
    %c0_195 = arith.constant 0 : index
    %c0_196 = arith.constant 0 : index
    %492 = vector.load %arg12[%c1_194, %c0_195, %c0_196] : memref<2x32x64xf32, #tpu.memory_space<vmem>>, vector<1x32x64xf32>
    %493 = vector.shape_cast %492 : vector<1x32x64xf32> to vector<32x64xf32>
    %cst_197 = arith.constant dense<0.000000e+00> : vector<34x64xf32>
    %494 = tpu.matmul %491, %493, %cst_197 {dimension_numbers = #tpu.dot_dimension_numbers<[1], [0], [0], [1], [0, 0, 1, 1], [], []>} : vector<34x32xf32>, vector<32x64xf32>, vector<34x64xf32> -> vector<34x64xf32>
    %c1_198 = arith.constant 1 : index
    %c0_199 = arith.constant 0 : index
    %c0_200 = arith.constant 0 : index
    %495 = vector.load %arg13[%c1_198, %c0_199, %c0_200] : memref<2x1x64xf32, #tpu.memory_space<vmem>>, vector<1x1x64xf32>
    %496 = vector.shape_cast %495 : vector<1x1x64xf32> to vector<1x64xf32>
    %497 = vector.broadcast %496 : vector<1x64xf32> to vector<34x64xf32>
    %498 = arith.addf %494, %497 : vector<34x64xf32>
    %cst_201 = arith.constant 5.000000e-01 : f32
    %499 = vector.broadcast %cst_201 : f32 to vector<34x64xf32>
    %500 = arith.mulf %499, %498 : vector<34x64xf32>
    %cst_202 = arith.constant 4.471500e-02 : f32
    %501 = vector.broadcast %cst_202 : f32 to vector<34x64xf32>
    %502 = arith.mulf %501, %498 : vector<34x64xf32>
    %503 = arith.mulf %502, %498 : vector<34x64xf32>
    %504 = arith.mulf %503, %498 : vector<34x64xf32>
    %505 = arith.addf %498, %504 : vector<34x64xf32>
    %cst_203 = arith.constant 0.797884583 : f32
    %506 = vector.broadcast %cst_203 : f32 to vector<34x64xf32>
    %507 = arith.mulf %506, %505 : vector<34x64xf32>
    %508 = math.tanh %507 : vector<34x64xf32>
    %cst_204 = arith.constant 1.000000e+00 : f32
    %509 = vector.broadcast %cst_204 : f32 to vector<34x64xf32>
    %510 = arith.addf %509, %508 : vector<34x64xf32>
    %511 = arith.mulf %500, %510 : vector<34x64xf32>
    %c1_205 = arith.constant 1 : index
    %c0_206 = arith.constant 0 : index
    %c0_207 = arith.constant 0 : index
    %512 = vector.load %arg14[%c1_205, %c0_206, %c0_207] : memref<2x64x32xf32, #tpu.memory_space<vmem>>, vector<1x64x32xf32>
    %513 = vector.shape_cast %512 : vector<1x64x32xf32> to vector<64x32xf32>
    %cst_208 = arith.constant dense<0.000000e+00> : vector<34x32xf32>
    %514 = tpu.matmul %511, %513, %cst_208 {dimension_numbers = #tpu.dot_dimension_numbers<[1], [0], [0], [1], [0, 0, 1, 1], [], []>} : vector<34x64xf32>, vector<64x32xf32>, vector<34x32xf32> -> vector<34x32xf32>
    %515 = arith.addf %467, %514 : vector<34x32xf32>
    %c1_209 = arith.constant 1 : index
    %c0_210 = arith.constant 0 : index
    %c0_211 = arith.constant 0 : index
    %516 = vector.load %arg15[%c1_209, %c0_210, %c0_211] : memref<2x1x32xf32, #tpu.memory_space<vmem>>, vector<1x1x32xf32>
    %517 = vector.shape_cast %516 : vector<1x1x32xf32> to vector<1x32xf32>
    %518 = vector.broadcast %517 : vector<1x32xf32> to vector<34x32xf32>
    %519 = arith.addf %515, %518 : vector<34x32xf32>
    %c0_212 = arith.constant 0 : index
    %c0_213 = arith.constant 0 : index
    %520 = vector.load %arg16[%c0_212, %c0_213] : memref<1x32xf32, #tpu.memory_space<vmem>>, vector<1x32xf32>
    %c0_214 = arith.constant 0 : index
    %c0_215 = arith.constant 0 : index
    %521 = vector.load %arg17[%c0_214, %c0_215] : memref<1x32xf32, #tpu.memory_space<vmem>>, vector<1x32xf32>
    %cst_216 = arith.constant dense<0.000000e+00> : vector<34xf32>
    %522 = vector.multi_reduction <add>, %519, %cst_216 [1] : vector<34x32xf32> to vector<34xf32>
    %523 = vector.shape_cast %522 : vector<34xf32> to vector<34x1xf32>
    %cst_217 = arith.constant 3.200000e+01 : f32
    %524 = vector.broadcast %cst_217 : f32 to vector<34x1xf32>
    %525 = arith.divf %523, %524 : vector<34x1xf32>
    %526 = vector.broadcast %525 : vector<34x1xf32> to vector<34x32xf32>
    %527 = arith.subf %519, %526 : vector<34x32xf32>
    %528 = arith.mulf %527, %527 : vector<34x32xf32>
    %cst_218 = arith.constant dense<0.000000e+00> : vector<34xf32>
    %529 = vector.multi_reduction <add>, %528, %cst_218 [1] : vector<34x32xf32> to vector<34xf32>
    %530 = vector.shape_cast %529 : vector<34xf32> to vector<34x1xf32>
    %cst_219 = arith.constant 3.200000e+01 : f32
    %531 = vector.broadcast %cst_219 : f32 to vector<34x1xf32>
    %532 = arith.divf %530, %531 : vector<34x1xf32>
    %cst_220 = arith.constant 9.99999996E-13 : f32
    %533 = vector.broadcast %cst_220 : f32 to vector<34x1xf32>
    %534 = arith.addf %532, %533 : vector<34x1xf32>
    %535 = math.rsqrt %534 : vector<34x1xf32>
    %536 = vector.broadcast %535 : vector<34x1xf32> to vector<34x32xf32>
    %537 = arith.mulf %527, %536 : vector<34x32xf32>
    %538 = vector.broadcast %520 : vector<1x32xf32> to vector<34x32xf32>
    %539 = arith.mulf %537, %538 : vector<34x32xf32>
    %540 = vector.broadcast %521 : vector<1x32xf32> to vector<34x32xf32>
    %541 = arith.addf %539, %540 : vector<34x32xf32>
    %542 = vector.extract_strided_slice %541 {offsets = [0, 0], sizes = [1, 32], strides = [1, 1]} : vector<34x32xf32> to vector<1x32xf32>
    %543 = vector.extract_strided_slice %541 {offsets = [17, 0], sizes = [1, 32], strides = [1, 1]} : vector<34x32xf32> to vector<1x32xf32>
    %544 = tpu.concatenate %542, %543 in 0 : vector<1x32xf32>, vector<1x32xf32> -> vector<2x32xf32>
    %c0_221 = arith.constant 0 : index
    %c0_222 = arith.constant 0 : index
    %545 = vector.load %arg18[%c0_221, %c0_222] : memref<32x256xf32, #tpu.memory_space<vmem>>, vector<32x256xf32>
    %cst_223 = arith.constant dense<0.000000e+00> : vector<2x256xf32>
    %546 = tpu.matmul %544, %545, %cst_223 {dimension_numbers = #tpu.dot_dimension_numbers<[1], [0], [0], [1], [0, 0, 1, 1], [], []>} : vector<2x32xf32>, vector<32x256xf32>, vector<2x256xf32> -> vector<2x256xf32>
    %c0_224 = arith.constant 0 : index
    %c0_225 = arith.constant 0 : index
    %547 = vector.load %arg19[%c0_224, %c0_225] : memref<1x256xf32, #tpu.memory_space<vmem>>, vector<1x256xf32>
    %548 = vector.broadcast %547 : vector<1x256xf32> to vector<2x256xf32>
    %549 = arith.addf %546, %548 : vector<2x256xf32>
    %cst_226 = arith.constant 0.000000e+00 : f32
    %550 = vector.broadcast %cst_226 : f32 to vector<2x256xf32>
    %551 = arith.maximumf %549, %550 : vector<2x256xf32>
    %c0_227 = arith.constant 0 : index
    %c0_228 = arith.constant 0 : index
    %552 = vector.load %arg20[%c0_227, %c0_228] : memref<1x256xf32, #tpu.memory_space<vmem>>, vector<1x256xf32>
    %553 = vector.broadcast %552 : vector<1x256xf32> to vector<2x256xf32>
    %554 = arith.mulf %551, %553 : vector<2x256xf32>
    %cst_229 = arith.constant dense<0.000000e+00> : vector<2xf32>
    %555 = vector.multi_reduction <add>, %554, %cst_229 [1] : vector<2x256xf32> to vector<2xf32>
    %556 = vector.shape_cast %555 : vector<2xf32> to vector<2x1xf32>
    %c0_230 = arith.constant 0 : index
    %c0_231 = arith.constant 0 : index
    %557 = vector.load %arg21[%c0_230, %c0_231] : memref<1x1xf32, #tpu.memory_space<vmem>>, vector<1x1xf32>
    %558 = vector.broadcast %557 : vector<1x1xf32> to vector<2x1xf32>
    %559 = arith.addf %556, %558 : vector<2x1xf32>
    %c0_232 = arith.constant 0 : index
    %c0_233 = arith.constant 0 : index
    %560 = vector.load %arg22[%c0_232, %c0_233] : memref<2x1xf32, #tpu.memory_space<vmem>>, vector<2x1xf32>
    tpu.vector_store %arg22[%c0_232, %c0_233], %559 {strides = array<i32>} : memref<2x1xf32, #tpu.memory_space<vmem>>, vector<2x1xf32>,
    return
  }
}

</mosaic_0001>

<llo_original>
// kernel: vit_regressor_forward.1
$region0: #{vit_regressor_forward.1}
  #allocation0 [shape = 'u32[]', space=smem, size = 0x4, offset = 0x4, fixed_abs, tag = 'smem constant byte address 0x4 - core index']
  #allocation1 [shape = 'u32[72,128]{1,0:T(1,128)}', space=vmem, size = 0x9000, scoped, tag = 'internal scratch']
  #allocation2 [shape = 'f32[1,1]{1,0:T(1,128)S(1)}', space=vmem, size = 0x200, scoped, tag = 'scoped memory for vit_regressor_forward.1']
  %s0 = inlined_call_operand.vmem [shape: f32[32,48], index: 0, kind: input, shape index: {}]
  %s1 = inlined_call_operand.vmem [shape: f32[48,32], index: 1, kind: input, shape index: {}]
  %s2 = inlined_call_operand.vmem [shape: f32[1,32], index: 2, kind: input, shape index: {}]
  %s3 = inlined_call_operand.vmem [shape: f32[16,32], index: 3, kind: input, shape index: {}]
  %s4 = inlined_call_operand.vmem [shape: f32[2,1,32], index: 4, kind: input, shape index: {}]
  %s5 = inlined_call_operand.vmem [shape: f32[2,1,32], index: 5, kind: input, shape index: {}]
  %s6 = inlined_call_operand.vmem [shape: f32[2,32,96], index: 6, kind: input, shape index: {}]
  %s7 = inlined_call_operand.vmem [shape: f32[2,1,96], index: 7, kind: input, shape index: {}]
  %s8 = inlined_call_operand.vmem [shape: f32[2,32,32], index: 8, kind: input, shape index: {}]
  %s9 = inlined_call_operand.vmem [shape: f32[2,1,32], index: 9, kind: input, shape index: {}]
  %s10 = inlined_call_operand.vmem [shape: f32[2,1,32], index: 10, kind: input, shape index: {}]
  %s11 = inlined_call_operand.vmem [shape: f32[2,1,32], index: 11, kind: input, shape index: {}]
  %s12 = inlined_call_operand.vmem [shape: f32[2,32,64], index: 12, kind: input, shape index: {}]
  %s13 = inlined_call_operand.vmem [shape: f32[2,1,64], index: 13, kind: input, shape index: {}]
  %s14 = inlined_call_operand.vmem [shape: f32[2,64,32], index: 14, kind: input, shape index: {}]
  %s15 = inlined_call_operand.vmem [shape: f32[2,1,32], index: 15, kind: input, shape index: {}]
  %s16 = inlined_call_operand.vmem [shape: f32[1,32], index: 16, kind: input, shape index: {}]
  %s17 = inlined_call_operand.vmem [shape: f32[1,32], index: 17, kind: input, shape index: {}]
  %s18 = inlined_call_operand.vmem [shape: f32[32,256], index: 18, kind: input, shape index: {}]
  %s19 = inlined_call_operand.vmem [shape: f32[1,256], index: 19, kind: input, shape index: {}]
  %s20 = inlined_call_operand.vmem [shape: f32[1,256], index: 20, kind: input, shape index: {}]
  %s21 = inlined_call_operand.<no memory space> [shape: f32[1,1], index: 21, kind: input, shape index: {}]
  %s22 = inlined_call_operand.vmem [shape: f32[2,1], index: 22, kind: output, shape index: {}]
  %s23 = sld [smem:[#allocation0]]
  $region98: #{vit_regressor_forward.1} parent=0
    _
  %s25 = ssub.s32 1, %s23
  %s26 = scalar_select 0, %s25, %s23
  %v27 = vstv %s21
  %28 = vst [vmem:[#allocation2] sm:$0x1] %v27
  // Predicated region
  $region2: #{vit_regressor_forward.1} parent=0 // pred_check
    _
  $region3: #{vit_regressor_forward.1} parent=0 // pred_check_branch
    %30 = sbr.rel (0) target = $region5
  $region4: #{vit_regressor_forward.1} parent=0 // pred_region
    _
  $region5: #{vit_regressor_forward.1} parent=0 // pred_fallthru
    _
  // Predicated region
  $region6: #{vit_regressor_forward.1} parent=0 // pred_check
    _
  $region7: #{vit_regressor_forward.1} parent=0 // pred_check_branch
    %32 = sbr.rel (0) target = $region9
  $region8: #{vit_regressor_forward.1} parent=0 // pred_region
    _
  $region9: #{vit_regressor_forward.1} parent=0 // pred_fallthru
    _
  // Predicated region
  $region10: #{vit_regressor_forward.1} parent=0 // pred_check
    _
  $region11: #{vit_regressor_forward.1} parent=0 // pred_check_branch
    %34 = sbr.rel (0) target = $region13
  $region12: #{vit_regressor_forward.1} parent=0 // pred_region
    _
  $region13: #{vit_regressor_forward.1} parent=0 // pred_fallthru
    _
  // Predicated region
  $region14: #{vit_regressor_forward.1} parent=0 // pred_check
    _
  $region15: #{vit_regressor_forward.1} parent=0 // pred_check_branch
    %36 = sbr.rel (0) target = $region17
  $region16: #{vit_regressor_forward.1} parent=0 // pred_region
    _
  $region17: #{vit_regressor_forward.1} parent=0 // pred_fallthru
    _
  // Predicated region
  $region18: #{vit_regressor_forward.1} parent=0 // pred_check
    _
  $region19: #{vit_regressor_forward.1} parent=0 // pred_check_branch
    %38 = sbr.rel (0) target = $region21
  $region20: #{vit_regressor_forward.1} parent=0 // pred_region
    _
  $region21: #{vit_regressor_forward.1} parent=0 // pred_fallthru
    _
  // Predicated region
  $region22: #{vit_regressor_forward.1} parent=0 // pred_check
    _
  $region23: #{vit_regressor_forward.1} parent=0 // pred_check_branch
    %40 = sbr.rel (0) target = $region25
  $region24: #{vit_regressor_forward.1} parent=0 // pred_region
    _
  $region25: #{vit_regressor_forward.1} parent=0 // pred_fallthru
    _
  // Predicated region
  $region26: #{vit_regressor_forward.1} parent=0 // pred_check
    _
  $region27: #{vit_regressor_forward.1} parent=0 // pred_check_branch
    %42 = sbr.rel (0) target = $region29
  $region28: #{vit_regressor_forward.1} parent=0 // pred_region
    _
  $region29: #{vit_regressor_forward.1} parent=0 // pred_fallthru
    _
  // Predicated region
  $region30: #{vit_regressor_forward.1} parent=0 // pred_check
    _
  $region31: #{vit_regressor_forward.1} parent=0 // pred_check_branch
    %44 = sbr.rel (0) target = $region33
  $region32: #{vit_regressor_forward.1} parent=0 // pred_region
    _
  $region33: #{vit_regressor_forward.1} parent=0 // pred_fallthru
    _
  // Predicated region
  $region34: #{vit_regressor_forward.1} parent=0 // pred_check
    _
  $region35: #{vit_regressor_forward.1} parent=0 // pred_check_branch
    %46 = sbr.rel (0) target = $region37
  $region36: #{vit_regressor_forward.1} parent=0 // pred_region
    _
  $region37: #{vit_regressor_forward.1} parent=0 // pred_fallthru
    _
  // Predicated region
  $region38: #{vit_regressor_forward.1} parent=0 // pred_check
    _
  $region39: #{vit_regressor_forward.1} parent=0 // pred_check_branch
    %48 = sbr.rel (0) target = $region41
  $region40: #{vit_regressor_forward.1} parent=0 // pred_region
    _
  $region41: #{vit_regressor_forward.1} parent=0 // pred_fallthru
    _
  // Predicated region
  $region42: #{vit_regressor_forward.1} parent=0 // pred_check
    _
  $region43: #{vit_regressor_forward.1} parent=0 // pred_check_branch
    %50 = sbr.rel (0) target = $region45
  $region44: #{vit_regressor_forward.1} parent=0 // pred_region
    _
  $region45: #{vit_regressor_forward.1} parent=0 // pred_fallthru
    _
  // Predicated region
  $region46: #{vit_regressor_forward.1} parent=0 // pred_check
    _
  $region47: #{vit_regressor_forward.1} parent=0 // pred_check_branch
    %52 = sbr.rel (0) target = $region49
  $region48: #{vit_regressor_forward.1} parent=0 // pred_region
    _
  $region49: #{vit_regressor_forward.1} parent=0 // pred_fallthru
    _
  // Predicated region
  $region50: #{vit_regressor_forward.1} parent=0 // pred_check
    _
  $region51: #{vit_regressor_forward.1} parent=0 // pred_check_branch
    %54 = sbr.rel (0) target = $region53
  $region52: #{vit_regressor_forward.1} parent=0 // pred_region
    _
  $region53: #{vit_regressor_forward.1} parent=0 // pred_fallthru
    _
  // Predicated region
  $region54: #{vit_regressor_forward.1} parent=0 // pred_check
    _
  $region55: #{vit_regressor_forward.1} parent=0 // pred_check_branch
    %56 = sbr.rel (0) target = $region57
  $region56: #{vit_regressor_forward.1} parent=0 // pred_region
    _
  $region57: #{vit_regressor_forward.1} parent=0 // pred_fallthru
    _
  // Predicated region
  $region58: #{vit_regressor_forward.1} parent=0 // pred_check
    _
  $region59: #{vit_regressor_forward.1} parent=0 // pred_check_branch
    %58 = sbr.rel (0) target = $region61
  $region60: #{vit_regressor_forward.1} parent=0 // pred_region
    _
  $region61: #{vit_regressor_forward.1} parent=0 // pred_fallthru
    _
  // Predicated region
  $region62: #{vit_regressor_forward.1} parent=0 // pred_check
    _
  $region63: #{vit_regressor_forward.1} parent=0 // pred_check_branch
    %60 = sbr.rel (0) target = $region65
  $region64: #{vit_regressor_forward.1} parent=0 // pred_region
    _
  $region65: #{vit_regressor_forward.1} parent=0 // pred_fallthru
    _
  // Predicated region
  $region66: #{vit_regressor_forward.1} parent=0 // pred_check
    _
  $region67: #{vit_regressor_forward.1} parent=0 // pred_check_branch
    %62 = sbr.rel (0) target = $region69
  $region68: #{vit_regressor_forward.1} parent=0 // pred_region
    _
  $region69: #{vit_regressor_forward.1} parent=0 // pred_fallthru
    _
  // Predicated region
  $region70: #{vit_regressor_forward.1} parent=0 // pred_check
    _
  $region71: #{vit_regressor_forward.1} parent=0 // pred_check_branch
    %64 = sbr.rel (0) target = $region73
  $region72: #{vit_regressor_forward.1} parent=0 // pred_region
    _
  $region73: #{vit_regressor_forward.1} parent=0 // pred_fallthru
    _
  // Predicated region
  $region74: #{vit_regressor_forward.1} parent=0 // pred_check
    _
  $region75: #{vit_regressor_forward.1} parent=0 // pred_check_branch
    %66 = sbr.rel (0) target = $region77
  $region76: #{vit_regressor_forward.1} parent=0 // pred_region
    _
  $region77: #{vit_regressor_forward.1} parent=0 // pred_fallthru
    _
  // Predicated region
  $region78: #{vit_regressor_forward.1} parent=0 // pred_check
    _
  $region79: #{vit_regressor_forward.1} parent=0 // pred_check_branch
    %68 = sbr.rel (0) target = $region81
  $region80: #{vit_regressor_forward.1} parent=0 // pred_region
    _
  $region81: #{vit_regressor_forward.1} parent=0 // pred_fallthru
    _
  // Predicated region
  $region82: #{vit_regressor_forward.1} parent=0 // pred_check
    _
  $region83: #{vit_regressor_forward.1} parent=0 // pred_check_branch
    %70 = sbr.rel (0) target = $region85
  $region84: #{vit_regressor_forward.1} parent=0 // pred_region
    _
  $region85: #{vit_regressor_forward.1} parent=0 // pred_fallthru
    _
  // Predicated region
  $region86: #{vit_regressor_forward.1} parent=0 // pred_check
    _
  $region87: #{vit_regressor_forward.1} parent=0 // pred_check_branch
    %72 = sbr.rel (0) target = $region89
  $region88: #{vit_regressor_forward.1} parent=0 // pred_region
    _
  $region89: #{vit_regressor_forward.1} parent=0 // pred_fallthru
    _
  %v73 = vld [vmem:[%s0] sm:$0xff]
  %v74 = vld [vmem:[%s0 + $0x8] sm:$0xff]
  %v75 = vld [vmem:[%s0 + $0x10] sm:$0xff]
  %v76 = vld [vmem:[%s0 + $0x18] sm:$0xff]
  %v77 = vld [vmem:[%s1] sm:$0xff]
  %v78 = vld [vmem:[%s1 + $0x8] sm:$0xff]
  %v79 = vld [vmem:[%s1 + $0x10] sm:$0xff]
  %v80 = vld [vmem:[%s1 + $0x18] sm:$0xff]
  %v81 = vld [vmem:[%s1 + $0x20] sm:$0xff]
  %v82 = vld [vmem:[%s1 + $0x28] sm:$0xff]
  %vm83 = vcmask 392192
  %v85 = vsel %vm83, %v73, 0
  %v88 = vsel %vm83, %v74, 0
  %v91 = vsel %vm83, %v75, 0
  %v94 = vsel %vm83, %v76, 0
  %96 = vmatpush.msra.mxu0 0.0
  %97 = vmatpush.msra.mxu0 0.0
  %98 = vmatpush.msra.mxu0 0.0
  %99 = vmatpush.msra.mxu0 0.0
  %100 = vmatpush.msra.mxu0 0.0
  %101 = vmatpush.msra.mxu0 0.0
  %102 = vmatpush.msra.mxu0 0.0
  %103 = vmatpush.msra.mxu0 0.0
  %104 = vmatpush.msra.mxu0 0.0
  %105 = vmatpush.msra.mxu0 0.0
  %106 = vmatpush.msra.mxu0 %v82
  %107 = vmatpush.msra.mxu0 %v81
  %108 = vmatpush.msra.mxu0 %v80
  %109 = vmatpush.msra.mxu0 %v79
  %110 = vmatpush.msra.mxu0 %v78
  %111 = vmatpush.msra.mxu0 %v77
  %112 = vmatmul.f32.gmra.mxu0 %v85
  %v113 = vpop.f32.mrf.mxu0
  %v114 = vadd.f32 0.0, %v113
  %115 = vmatmul.f32.gmra.mxu0 %v88
  %v116 = vpop.f32.mrf.mxu0
  %v117 = vadd.f32 0.0, %v116
  %118 = vmatmul.f32.gmra.mxu0 %v91
  %v119 = vpop.f32.mrf.mxu0
  %v120 = vadd.f32 0.0, %v119
  %121 = vmatmul.f32.gmra.mxu0 %v94
  %v122 = vpop.f32.mrf.mxu0
  %v123 = vadd.f32 0.0, %v122
  %124 = vdwg.mxu0
  %v125 = vld [vmem:[%s2] sm:$0x1]
  %v126 = vld [vmem:[%s3] sm:$0xff]
  %v127 = vld [vmem:[%s3 + $0x8] sm:$0xff]
  %v128 = vadd.f32 %v114, %v126
  %v129 = vadd.f32 %v117, %v127
  %v130 = vadd.f32 %v120, %v126
  %v131 = vadd.f32 %v123, %v127
  %vm134 = vcmask 1040384
  %v135 = vrot.slane %v128, 7
  %v136 = vrot.slane %v129, 7
  %v137 = vsel %vm134, %v135, %v136
  %v142 = vperm.slane %v125, 0
  %vm146 = vcmask 1041408
  %v147 = vrot.slane %v130, 6
  %v148 = vrot.slane %v131, 6
  %v149 = vsel %vm146, %v147, %v148
  %v153 = vsel %vm134, %v125, %v135
  %v154 = vsel %vm134, %v136, %v142
  %v155 = vsel %vm146, %v154, %v147
  %v156 = vld [vmem:[%s4] sm:$0x1]
  %v157 = vld [vmem:[%s5] sm:$0x1]
  %vm158 = vcmask 261120
  %v159 = vsel %vm158, %v153, 0.0
  %160 = vadd.xlane.f32.xlu0 %v159
  %v161 = vpop.xlane.xlu0 %160
  %v162 = vsel %vm158, %v137, 0.0
  %163 = vadd.xlane.f32.xlu0 %v162
  %v164 = vpop.xlane.xlu0 %163
  %v165 = vsel %vm158, %v155, 0.0
  %166 = vadd.xlane.f32.xlu0 %v165
  %v167 = vpop.xlane.xlu0 %166
  %v168 = vsel %vm158, %v149, 0.0
  %169 = vadd.xlane.f32.xlu0 %v168
  %v170 = vpop.xlane.xlu0 %169
  %vm171 = vcmask 254976
  %v172 = vsel %vm171, %v148, 0.0
  %173 = vadd.xlane.f32.xlu0 %v172
  %v174 = vpop.xlane.xlu0 %173
  %v175 = vrcp.pop 32.0
  %v176 = vmul.f32 32.0, %v175
  %v177 = vsub.f32 1.0, %v176
  %v178 = vmul.f32 %v175, %v177
  %v179 = vadd.f32 %v175, %v178
  %vm180 = vweird.f32 %v175
  %v181 = vsel %vm180, %v175, %v179
  %v182 = vmul.f32 %v161, %v181
  %v183 = vmul.f32 %v164, %v181
  %v184 = vmul.f32 %v167, %v181
  %v185 = vmul.f32 %v170, %v181
  %v186 = vmul.f32 %v174, %v181
  %v187 = vsub.f32 %v153, %v182
  %v188 = vsub.f32 %v137, %v183
  %v189 = vsub.f32 %v155, %v184
  %v190 = vsub.f32 %v149, %v185
  %v191 = vsub.f32 %v148, %v186
  %v192 = vmul.f32 %v187, %v187
  %v193 = vmul.f32 %v188, %v188
  %v194 = vmul.f32 %v189, %v189
  %v195 = vmul.f32 %v190, %v190
  %v196 = vmul.f32 %v191, %v191
  %v197 = vsel %vm158, %v192, 0.0
  %198 = vadd.xlane.f32.xlu0 %v197
  %v199 = vpop.xlane.xlu0 %198
  %v200 = vsel %vm158, %v193, 0.0
  %201 = vadd.xlane.f32.xlu0 %v200
  %v202 = vpop.xlane.xlu0 %201
  %v203 = vsel %vm158, %v194, 0.0
  %204 = vadd.xlane.f32.xlu0 %v203
  %v205 = vpop.xlane.xlu0 %204
  %v206 = vsel %vm158, %v195, 0.0
  %207 = vadd.xlane.f32.xlu0 %v206
  %v208 = vpop.xlane.xlu0 %207
  %v209 = vsel %vm171, %v196, 0.0
  %210 = vadd.xlane.f32.xlu0 %v209
  %v211 = vpop.xlane.xlu0 %210
  %v212 = vmul.f32 %v199, %v181
  %v213 = vmul.f32 %v202, %v181
  %v214 = vmul.f32 %v205, %v181
  %v215 = vmul.f32 %v208, %v181
  %v216 = vmul.f32 %v211, %v181
  %v217 = vadd.f32 %v212, 1e-12
  %v218 = vadd.f32 %v213, 1e-12
  %v219 = vadd.f32 %v214, 1e-12
  %v220 = vadd.f32 %v215, 1e-12
  %v221 = vadd.f32 %v216, 1e-12
  %v222 = vrsqrt.pop %v217
  %v223 = vmul.f32 %v222, %v217
  %v224 = vmul.f32 %v223, %v222
  %v225 = vmul.f32 0.5, %v224
  %v226 = vsub.f32 1.5, %v225
  %v227 = vmul.f32 %v222, %v226
  %vm228 = vweird.f32 %v217
  %vm229 = vweird.f32 %v222
  %vm230 = vmor %vm228, %vm229
  %v231 = vsel %vm230, %v222, %v227
  %v232 = vrsqrt.pop %v218
  %v233 = vmul.f32 %v232, %v218
  %v234 = vmul.f32 %v233, %v232
  %v235 = vmul.f32 0.5, %v234
  %v236 = vsub.f32 1.5, %v235
  %v237 = vmul.f32 %v232, %v236
  %vm238 = vweird.f32 %v218
  %vm239 = vweird.f32 %v232
  %vm240 = vmor %vm238, %vm239
  %v241 = vsel %vm240, %v232, %v237
  %v242 = vrsqrt.pop %v219
  %v243 = vmul.f32 %v242, %v219
  %v244 = vmul.f32 %v243, %v242
  %v245 = vmul.f32 0.5, %v244
  %v246 = vsub.f32 1.5, %v245
  %v247 = vmul.f32 %v242, %v246
  %vm248 = vweird.f32 %v219
  %vm249 = vweird.f32 %v242
  %vm250 = vmor %vm248, %vm249
  %v251 = vsel %vm250, %v242, %v247
  %v252 = vrsqrt.pop %v220
  %v253 = vmul.f32 %v252, %v220
  %v254 = vmul.f32 %v253, %v252
  %v255 = vmul.f32 0.5, %v254
  %v256 = vsub.f32 1.5, %v255
  %v257 = vmul.f32 %v252, %v256
  %vm258 = vweird.f32 %v220
  %vm259 = vweird.f32 %v252
  %vm260 = vmor %vm258, %vm259
  %v261 = vsel %vm260, %v252, %v257
  %v262 = vrsqrt.pop %v221
  %v263 = vmul.f32 %v262, %v221
  %v264 = vmul.f32 %v263, %v262
  %v265 = vmul.f32 0.5, %v264
  %v266 = vsub.f32 1.5, %v265
  %v267 = vmul.f32 %v262, %v266
  %vm268 = vweird.f32 %v221
  %vm269 = vweird.f32 %v262
  %vm270 = vmor %vm268, %vm269
  %v271 = vsel %vm270, %v262, %v267
  %v272 = vmul.f32 %v187, %v231
  %v273 = vmul.f32 %v188, %v241
  %v274 = vmul.f32 %v189, %v251
  %v275 = vmul.f32 %v190, %v261
  %v276 = vmul.f32 %v191, %v271
  %v278 = vperm.slane %v156, 0
  %v280 = vmul.f32 %v272, %v278
  %v281 = vmul.f32 %v273, %v278
  %v282 = vmul.f32 %v274, %v278
  %v283 = vmul.f32 %v275, %v278
  %v284 = vmul.f32 %v276, %v278
  %v286 = vperm.slane %v157, 0
  %v288 = vadd.f32 %v280, %v286
  %v289 = vadd.f32 %v281, %v286
  %v290 = vadd.f32 %v282, %v286
  %v291 = vadd.f32 %v283, %v286
  %v292 = vadd.f32 %v284, %v286
  %v293 = vld [vmem:[%s6] sm:$0xff]
  %v294 = vld [vmem:[%s6 + $0x8] sm:$0xff]
  %v295 = vld [vmem:[%s6 + $0x10] sm:$0xff]
  %v296 = vld [vmem:[%s6 + $0x18] sm:$0xff]
  %v297 = vld [vmem:[%s7] sm:$0x1]
  %v299 = vperm.slane %v297, 0
  %v302 = vsel %vm158, %v288, 0
  %v305 = vsel %vm158, %v289, 0
  %v308 = vsel %vm158, %v290, 0
  %v311 = vsel %vm158, %v291, 0
  %v314 = vsel %vm158, %v292, 0
  %316 = vmatpush.msra.mxu0 0.0
  %317 = vmatpush.msra.mxu0 0.0
  %318 = vmatpush.msra.mxu0 0.0
  %319 = vmatpush.msra.mxu0 0.0
  %320 = vmatpush.msra.mxu0 0.0
  %321 = vmatpush.msra.mxu0 0.0
  %322 = vmatpush.msra.mxu0 0.0
  %323 = vmatpush.msra.mxu0 0.0
  %324 = vmatpush.msra.mxu0 0.0
  %325 = vmatpush.msra.mxu0 0.0
  %326 = vmatpush.msra.mxu0 0.0
  %327 = vmatpush.msra.mxu0 0.0
  %328 = vmatpush.msra.mxu0 %v296
  %329 = vmatpush.msra.mxu0 %v295
  %330 = vmatpush.msra.mxu0 %v294
  %331 = vmatpush.msra.mxu0 %v293
  %332 = vmatmul.f32.gmra.mxu0 %v302
  %v333 = vpop.f32.mrf.mxu0
  %v334 = vadd.f32 %v299, %v333
  %335 = vmatmul.f32.gmra.mxu0 %v305
  %v336 = vpop.f32.mrf.mxu0
  %v337 = vadd.f32 %v299, %v336
  %338 = vmatmul.f32.gmra.mxu0 %v308
  %v339 = vpop.f32.mrf.mxu0
  %v340 = vadd.f32 %v299, %v339
  %341 = vmatmul.f32.gmra.mxu0 %v311
  %v342 = vpop.f32.mrf.mxu0
  %v343 = vadd.f32 %v299, %v342
  %344 = vmatmul.f32.gmra.mxu0 %v314
  %v345 = vpop.f32.mrf.mxu0
  %v346 = vadd.f32 %v299, %v345
  %347 = vdwg.mxu0
  %v348 = vld [vmem:[%s8] sm:$0xff]
  %v349 = vld [vmem:[%s8 + $0x8] sm:$0xff]
  %v350 = vld [vmem:[%s8 + $0x10] sm:$0xff]
  %v351 = vld [vmem:[%s8 + $0x18] sm:$0xff]
  %355 = vrot.lane.b32.xlu0 %v334, 96
  %v356 = vpop.permute.xlu0 %355
  %357 = vrot.lane.b32.xlu0 %v337, 96
  %v358 = vpop.permute.xlu0 %357
  %359 = vrot.lane.b32.xlu0 %v340, 96
  %v360 = vpop.permute.xlu0 %359
  %vm361 = vcmask 64512
  %v362 = vsel %vm361, %v334, 0
  %v364 = vsel %vm361, %v337, 0
  %v366 = vsel %vm361, %v340, 0
  %v368 = vsel %vm361, %v356, 0
  %v370 = vsel %vm361, %v358, 0
  %v372 = vsel %vm361, %v360, 0
  %374 = vmatpush.xpose.msra.mxu0 0.0
  %375 = vmatpush.xpose.msra.mxu0 0.0
  %376 = vmatpush.xpose.msra.mxu0 0.0
  %377 = vmatpush.xpose.msra.mxu0 0.0
  %378 = vmatpush.xpose.msra.mxu0 0.0
  %379 = vmatpush.xpose.msra.mxu0 0.0
  %380 = vmatpush.xpose.msra.mxu0 0.0
  %381 = vmatpush.xpose.msra.mxu0 0.0
  %382 = vmatpush.xpose.msra.mxu0 0.0
  %383 = vmatpush.xpose.msra.mxu0 0.0
  %384 = vmatpush.xpose.msra.mxu0 0.0
  %385 = vmatpush.xpose.msra.mxu0 0.0
  %386 = vmatpush.xpose.msra.mxu0 0.0
  %387 = vmatpush.xpose.msra.mxu0 %v372
  %388 = vmatpush.xpose.msra.mxu0 %v370
  %389 = vmatpush.xpose.msra.mxu0 %v368
  %390 = vmatmul.f32.gmra.mxu0 %v362
  %v391 = vpop.f32.mrf.mxu0
  %v392 = vadd.f32 0.0, %v391
  %393 = vmatmul.f32.gmra.mxu0 %v364
  %v394 = vpop.f32.mrf.mxu0
  %v395 = vadd.f32 0.0, %v394
  %396 = vmatmul.f32.gmra.mxu0 %v366
  %v397 = vpop.f32.mrf.mxu0
  %v398 = vadd.f32 0.0, %v397
  %399 = vdwg.mxu0
  %v400 = vmul.f32 %v392, 0.35355338
  %v401 = vmul.f32 %v395, 0.35355338
  %v402 = vmul.f32 %v398, 0.35355338
  %vm403 = vcmask 138240
  %v404 = vsel %vm403, %v400, -inf
  %405 = vmax.xlane.f32.xlu0 %v404
  %v406 = vpop.xlane.xlu0 %405
  %v407 = vsel %vm403, %v401, -inf
  %408 = vmax.xlane.f32.xlu0 %v407
  %v409 = vpop.xlane.xlu0 %408
  %vm410 = vcmask 131072
  %v411 = vsel %vm410, %v402, -inf
  %412 = vmax.xlane.f32.xlu0 %v411
  %v413 = vpop.xlane.xlu0 %412
  %v414 = vsub.f32 %v400, %v406
  %v415 = vsub.f32 %v401, %v409
  %v416 = vsub.f32 %v402, %v413
  %v417 = vmul.f32 %v414, 1.442695
  %v418 = vpow.pop %v417
  %v419 = vmul.f32 %v415, 1.442695
  %v420 = vpow.pop %v419
  %v421 = vmul.f32 %v416, 1.442695
  %v422 = vpow.pop %v421
  %v423 = vsel %vm403, %v418, 0.0
  %424 = vadd.xlane.f32.xlu0 %v423
  %v425 = vpop.xlane.xlu0 %424
  %v426 = vsel %vm403, %v420, 0.0
  %427 = vadd.xlane.f32.xlu0 %v426
  %v428 = vpop.xlane.xlu0 %427
  %v429 = vsel %vm410, %v422, 0.0
  %430 = vadd.xlane.f32.xlu0 %v429
  %v431 = vpop.xlane.xlu0 %430
  %v432 = vrcp.pop %v425
  %v433 = vrcp.pop %v428
  %v434 = vrcp.pop %v431
  %v435 = vmul.f32 %v418, %v432
  %v436 = vmul.f32 %v420, %v433
  %v437 = vmul.f32 %v422, %v434
  %438 = vrot.lane.b32.xlu0 %v334, 64
  %v439 = vpop.permute.xlu0 %438
  %440 = vrot.lane.b32.xlu0 %v337, 64
  %v441 = vpop.permute.xlu0 %440
  %442 = vrot.lane.b32.xlu0 %v340, 64
  %v443 = vpop.permute.xlu0 %442
  %v447 = vsel %vm403, %v435, 0
  %v450 = vsel %vm403, %v436, 0
  %v453 = vsel %vm403, %v437, 0
  %v455 = vsel %vm134, %v443, 0
  %457 = vmatpush.msra.mxu0 0.0
  %458 = vmatpush.msra.mxu0 0.0
  %459 = vmatpush.msra.mxu0 0.0
  %460 = vmatpush.msra.mxu0 0.0
  %461 = vmatpush.msra.mxu0 0.0
  %462 = vmatpush.msra.mxu0 0.0
  %463 = vmatpush.msra.mxu0 0.0
  %464 = vmatpush.msra.mxu0 0.0
  %465 = vmatpush.msra.mxu0 0.0
  %466 = vmatpush.msra.mxu0 0.0
  %467 = vmatpush.msra.mxu0 0.0
  %468 = vmatpush.msra.mxu0 0.0
  %469 = vmatpush.msra.mxu0 0.0
  %470 = vmatpush.msra.mxu0 %v455
  %471 = vmatpush.msra.mxu0 %v441
  %472 = vmatpush.msra.mxu0 %v439
  %473 = vmatmul.f32.gmra.mxu0 %v447
  %v474 = vpop.f32.mrf.mxu0
  %v475 = vadd.f32 0.0, %v474
  %476 = vmatmul.f32.gmra.mxu0 %v450
  %v477 = vpop.f32.mrf.mxu0
  %v478 = vadd.f32 0.0, %v477
  %479 = vmatmul.f32.gmra.mxu0 %v453
  %v480 = vpop.f32.mrf.mxu0
  %v481 = vadd.f32 0.0, %v480
  %482 = vdwg.mxu0
  %483 = vrot.lane.b32.xlu0 %v334, 120
  %v484 = vpop.permute.xlu0 %483
  %485 = vrot.lane.b32.xlu0 %v337, 120
  %v486 = vpop.permute.xlu0 %485
  %487 = vrot.lane.b32.xlu0 %v340, 120
  %v488 = vpop.permute.xlu0 %487
  %489 = vrot.lane.b32.xlu0 %v334, 88
  %v490 = vpop.permute.xlu0 %489
  %491 = vrot.lane.b32.xlu0 %v337, 88
  %v492 = vpop.permute.xlu0 %491
  %493 = vrot.lane.b32.xlu0 %v340, 88
  %v494 = vpop.permute.xlu0 %493
  %v495 = vsel %vm361, %v484, 0
  %v497 = vsel %vm361, %v486, 0
  %v499 = vsel %vm361, %v488, 0
  %v501 = vsel %vm361, %v490, 0
  %v503 = vsel %vm361, %v492, 0
  %v505 = vsel %vm361, %v494, 0
  %507 = vmatpush.xpose.msra.mxu0 0.0
  %508 = vmatpush.xpose.msra.mxu0 0.0
  %509 = vmatpush.xpose.msra.mxu0 0.0
  %510 = vmatpush.xpose.msra.mxu0 0.0
  %511 = vmatpush.xpose.msra.mxu0 0.0
  %512 = vmatpush.xpose.msra.mxu0 0.0
  %513 = vmatpush.xpose.msra.mxu0 0.0
  %514 = vmatpush.xpose.msra.mxu0 0.0
  %515 = vmatpush.xpose.msra.mxu0 0.0
  %516 = vmatpush.xpose.msra.mxu0 0.0
  %517 = vmatpush.xpose.msra.mxu0 0.0
  %518 = vmatpush.xpose.msra.mxu0 0.0
  %519 = vmatpush.xpose.msra.mxu0 0.0
  %520 = vmatpush.xpose.msra.mxu0 %v505
  %521 = vmatpush.xpose.msra.mxu0 %v503
  %522 = vmatpush.xpose.msra.mxu0 %v501
  %523 = vmatmul.f32.gmra.mxu0 %v495
  %v524 = vpop.f32.mrf.mxu0
  %v525 = vadd.f32 0.0, %v524
  %526 = vmatmul.f32.gmra.mxu0 %v497
  %v527 = vpop.f32.mrf.mxu0
  %v528 = vadd.f32 0.0, %v527
  %529 = vmatmul.f32.gmra.mxu0 %v499
  %v530 = vpop.f32.mrf.mxu0
  %v531 = vadd.f32 0.0, %v530
  %532 = vdwg.mxu0
  %v533 = vmul.f32 %v525, 0.35355338
  %v534 = vmul.f32 %v528, 0.35355338
  %v535 = vmul.f32 %v531, 0.35355338
  %v536 = vsel %vm403, %v533, -inf
  %537 = vmax.xlane.f32.xlu0 %v536
  %v538 = vpop.xlane.xlu0 %537
  %v539 = vsel %vm403, %v534, -inf
  %540 = vmax.xlane.f32.xlu0 %v539
  %v541 = vpop.xlane.xlu0 %540
  %v542 = vsel %vm410, %v535, -inf
  %543 = vmax.xlane.f32.xlu0 %v542
  %v544 = vpop.xlane.xlu0 %543
  %v545 = vsub.f32 %v533, %v538
  %v546 = vsub.f32 %v534, %v541
  %v547 = vsub.f32 %v535, %v544
  %v548 = vmul.f32 %v545, 1.442695
  %v549 = vpow.pop %v548
  %v550 = vmul.f32 %v546, 1.442695
  %v551 = vpow.pop %v550
  %v552 = vmul.f32 %v547, 1.442695
  %v553 = vpow.pop %v552
  %v554 = vsel %vm403, %v549, 0.0
  %555 = vadd.xlane.f32.xlu0 %v554
  %v556 = vpop.xlane.xlu0 %555
  %v557 = vsel %vm403, %v551, 0.0
  %558 = vadd.xlane.f32.xlu0 %v557
  %v559 = vpop.xlane.xlu0 %558
  %v560 = vsel %vm410, %v553, 0.0
  %561 = vadd.xlane.f32.xlu0 %v560
  %v562 = vpop.xlane.xlu0 %561
  %v563 = vrcp.pop %v556
  %v564 = vrcp.pop %v559
  %v565 = vrcp.pop %v562
  %v566 = vmul.f32 %v549, %v563
  %v567 = vmul.f32 %v551, %v564
  %v568 = vmul.f32 %v553, %v565
  %569 = vrot.lane.b32.xlu0 %v334, 56
  %v570 = vpop.permute.xlu0 %569
  %571 = vrot.lane.b32.xlu0 %v337, 56
  %v572 = vpop.permute.xlu0 %571
  %573 = vrot.lane.b32.xlu0 %v340, 56
  %v574 = vpop.permute.xlu0 %573
  %v578 = vsel %vm403, %v566, 0
  %v581 = vsel %vm403, %v567, 0
  %v584 = vsel %vm403, %v568, 0
  %v586 = vsel %vm134, %v574, 0
  %588 = vmatpush.msra.mxu0 0.0
  %589 = vmatpush.msra.mxu0 0.0
  %590 = vmatpush.msra.mxu0 0.0
  %591 = vmatpush.msra.mxu0 0.0
  %592 = vmatpush.msra.mxu0 0.0
  %593 = vmatpush.msra.mxu0 0.0
  %594 = vmatpush.msra.mxu0 0.0
  %595 = vmatpush.msra.mxu0 0.0
  %596 = vmatpush.msra.mxu0 0.0
  %597 = vmatpush.msra.mxu0 0.0
  %598 = vmatpush.msra.mxu0 0.0
  %599 = vmatpush.msra.mxu0 0.0
  %600 = vmatpush.msra.mxu0 0.0
  %601 = vmatpush.msra.mxu0 %v586
  %602 = vmatpush.msra.mxu0 %v572
  %603 = vmatpush.msra.mxu0 %v570
  %604 = vmatmul.f32.gmra.mxu0 %v578
  %v605 = vpop.f32.mrf.mxu0
  %v606 = vadd.f32 0.0, %v605
  %607 = vmatmul.f32.gmra.mxu0 %v581
  %v608 = vpop.f32.mrf.mxu0
  %v609 = vadd.f32 0.0, %v608
  %610 = vmatmul.f32.gmra.mxu0 %v584
  %v611 = vpop.f32.mrf.mxu0
  %v612 = vadd.f32 0.0, %v611
  %613 = vdwg.mxu0
  %v615 = vsel %vm361, %v606, 0
  %v618 = vsel %vm361, %v609, 0
  %v621 = vsel %vm361, %v612, 0
  %623 = vmatpush.msra.mxu0 0.0
  %624 = vmatpush.msra.mxu0 0.0
  %625 = vmatpush.msra.mxu0 0.0
  %626 = vmatpush.msra.mxu0 0.0
  %627 = vmatpush.msra.mxu0 0.0
  %628 = vmatpush.msra.mxu0 0.0
  %629 = vmatpush.msra.mxu0 0.0
  %630 = vmatpush.msra.mxu0 0.0
  %631 = vmatpush.msra.mxu0 0.0
  %632 = vmatpush.msra.mxu0 0.0
  %633 = vmatpush.msra.mxu0 0.0
  %634 = vmatpush.msra.mxu0 0.0
  %635 = vmatpush.msra.mxu0 0.0
  %636 = vmatpush.msra.mxu0 0.0
  %637 = vmatpush.msra.mxu0 0.0
  %638 = vmatpush.msra.mxu0 %v349
  %639 = vmatmul.f32.gmra.mxu0 %v615
  %v640 = vpop.f32.mrf.mxu0
  %v641 = vadd.f32 0.0, %v640
  %642 = vmatmul.f32.gmra.mxu0 %v618
  %v643 = vpop.f32.mrf.mxu0
  %v644 = vadd.f32 0.0, %v643
  %645 = vmatmul.f32.gmra.mxu0 %v621
  %v646 = vpop.f32.mrf.mxu0
  %v647 = vadd.f32 0.0, %v646
  %648 = vdwg.mxu0
  %v650 = vsel %vm361, %v475, 0
  %v653 = vsel %vm361, %v478, 0
  %v656 = vsel %vm361, %v481, 0
  %658 = vmatpush.msra.mxu0 0.0
  %659 = vmatpush.msra.mxu0 0.0
  %660 = vmatpush.msra.mxu0 0.0
  %661 = vmatpush.msra.mxu0 0.0
  %662 = vmatpush.msra.mxu0 0.0
  %663 = vmatpush.msra.mxu0 0.0
  %664 = vmatpush.msra.mxu0 0.0
  %665 = vmatpush.msra.mxu0 0.0
  %666 = vmatpush.msra.mxu0 0.0
  %667 = vmatpush.msra.mxu0 0.0
  %668 = vmatpush.msra.mxu0 0.0
  %669 = vmatpush.msra.mxu0 0.0
  %670 = vmatpush.msra.mxu0 0.0
  %671 = vmatpush.msra.mxu0 0.0
  %672 = vmatpush.msra.mxu0 0.0
  %673 = vmatpush.msra.mxu0 %v348
  %674 = vmatmul.f32.gmra.mxu0 %v650
  %v675 = vpop.f32.mrf.mxu0
  %v676 = vadd.f32 %v641, %v675
  %677 = vmatmul.f32.gmra.mxu0 %v653
  %v678 = vpop.f32.mrf.mxu0
  %v679 = vadd.f32 %v644, %v678
  %680 = vmatmul.f32.gmra.mxu0 %v656
  %v681 = vpop.f32.mrf.mxu0
  %v682 = vadd.f32 %v647, %v681
  %683 = vdwg.mxu0
  %684 = vrot.lane.b32.xlu0 %v334, 112
  %v685 = vpop.permute.xlu0 %684
  %686 = vrot.lane.b32.xlu0 %v337, 112
  %v687 = vpop.permute.xlu0 %686
  %688 = vrot.lane.b32.xlu0 %v340, 112
  %v689 = vpop.permute.xlu0 %688
  %690 = vrot.lane.b32.xlu0 %v334, 80
  %v691 = vpop.permute.xlu0 %690
  %692 = vrot.lane.b32.xlu0 %v337, 80
  %v693 = vpop.permute.xlu0 %692
  %694 = vrot.lane.b32.xlu0 %v340, 80
  %v695 = vpop.permute.xlu0 %694
  %v696 = vsel %vm361, %v685, 0
  %v698 = vsel %vm361, %v687, 0
  %v700 = vsel %vm361, %v689, 0
  %v702 = vsel %vm361, %v691, 0
  %v704 = vsel %vm361, %v693, 0
  %v706 = vsel %vm361, %v695, 0
  %708 = vmatpush.xpose.msra.mxu0 0.0
  %709 = vmatpush.xpose.msra.mxu0 0.0
  %710 = vmatpush.xpose.msra.mxu0 0.0
  %711 = vmatpush.xpose.msra.mxu0 0.0
  %712 = vmatpush.xpose.msra.mxu0 0.0
  %713 = vmatpush.xpose.msra.mxu0 0.0
  %714 = vmatpush.xpose.msra.mxu0 0.0
  %715 = vmatpush.xpose.msra.mxu0 0.0
  %716 = vmatpush.xpose.msra.mxu0 0.0
  %717 = vmatpush.xpose.msra.mxu0 0.0
  %718 = vmatpush.xpose.msra.mxu0 0.0
  %719 = vmatpush.xpose.msra.mxu0 0.0
  %720 = vmatpush.xpose.msra.mxu0 0.0
  %721 = vmatpush.xpose.msra.mxu0 %v706
  %722 = vmatpush.xpose.msra.mxu0 %v704
  %723 = vmatpush.xpose.msra.mxu0 %v702
  %724 = vmatmul.f32.gmra.mxu0 %v696
  %v725 = vpop.f32.mrf.mxu0
  %v726 = vadd.f32 0.0, %v725
  %727 = vmatmul.f32.gmra.mxu0 %v698
  %v728 = vpop.f32.mrf.mxu0
  %v729 = vadd.f32 0.0, %v728
  %730 = vmatmul.f32.gmra.mxu0 %v700
  %v731 = vpop.f32.mrf.mxu0
  %v732 = vadd.f32 0.0, %v731
  %733 = vdwg.mxu0
  %v734 = vmul.f32 %v726, 0.35355338
  %v735 = vmul.f32 %v729, 0.35355338
  %v736 = vmul.f32 %v732, 0.35355338
  %v737 = vsel %vm403, %v734, -inf
  %738 = vmax.xlane.f32.xlu0 %v737
  %v739 = vpop.xlane.xlu0 %738
  %v740 = vsel %vm403, %v735, -inf
  %741 = vmax.xlane.f32.xlu0 %v740
  %v742 = vpop.xlane.xlu0 %741
  %v743 = vsel %vm410, %v736, -inf
  %744 = vmax.xlane.f32.xlu0 %v743
  %v745 = vpop.xlane.xlu0 %744
  %v746 = vsub.f32 %v734, %v739
  %v747 = vsub.f32 %v735, %v742
  %v748 = vsub.f32 %v736, %v745
  %v749 = vmul.f32 %v746, 1.442695
  %v750 = vpow.pop %v749
  %v751 = vmul.f32 %v747, 1.442695
  %v752 = vpow.pop %v751
  %v753 = vmul.f32 %v748, 1.442695
  %v754 = vpow.pop %v753
  %v755 = vsel %vm403, %v750, 0.0
  %756 = vadd.xlane.f32.xlu0 %v755
  %v757 = vpop.xlane.xlu0 %756
  %v758 = vsel %vm403, %v752, 0.0
  %759 = vadd.xlane.f32.xlu0 %v758
  %v760 = vpop.xlane.xlu0 %759
  %v761 = vsel %vm410, %v754, 0.0
  %762 = vadd.xlane.f32.xlu0 %v761
  %v763 = vpop.xlane.xlu0 %762
  %v764 = vrcp.pop %v757
  %v765 = vrcp.pop %v760
  %v766 = vrcp.pop %v763
  %v767 = vmul.f32 %v750, %v764
  %v768 = vmul.f32 %v752, %v765
  %v769 = vmul.f32 %v754, %v766
  %770 = vrot.lane.b32.xlu0 %v334, 48
  %v771 = vpop.permute.xlu0 %770
  %772 = vrot.lane.b32.xlu0 %v337, 48
  %v773 = vpop.permute.xlu0 %772
  %774 = vrot.lane.b32.xlu0 %v340, 48
  %v775 = vpop.permute.xlu0 %774
  %v779 = vsel %vm403, %v767, 0
  %v782 = vsel %vm403, %v768, 0
  %v785 = vsel %vm403, %v769, 0
  %v787 = vsel %vm134, %v775, 0
  %789 = vmatpush.msra.mxu0 0.0
  %790 = vmatpush.msra.mxu0 0.0
  %791 = vmatpush.msra.mxu0 0.0
  %792 = vmatpush.msra.mxu0 0.0
  %793 = vmatpush.msra.mxu0 0.0
  %794 = vmatpush.msra.mxu0 0.0
  %795 = vmatpush.msra.mxu0 0.0
  %796 = vmatpush.msra.mxu0 0.0
  %797 = vmatpush.msra.mxu0 0.0
  %798 = vmatpush.msra.mxu0 0.0
  %799 = vmatpush.msra.mxu0 0.0
  %800 = vmatpush.msra.mxu0 0.0
  %801 = vmatpush.msra.mxu0 0.0
  %802 = vmatpush.msra.mxu0 %v787
  %803 = vmatpush.msra.mxu0 %v773
  %804 = vmatpush.msra.mxu0 %v771
  %805 = vmatmul.f32.gmra.mxu0 %v779
  %v806 = vpop.f32.mrf.mxu0
  %v807 = vadd.f32 0.0, %v806
  %808 = vmatmul.f32.gmra.mxu0 %v782
  %v809 = vpop.f32.mrf.mxu0
  %v810 = vadd.f32 0.0, %v809
  %811 = vmatmul.f32.gmra.mxu0 %v785
  %v812 = vpop.f32.mrf.mxu0
  %v813 = vadd.f32 0.0, %v812
  %814 = vdwg.mxu0
  %v816 = vsel %vm361, %v807, 0
  %v819 = vsel %vm361, %v810, 0
  %v822 = vsel %vm361, %v813, 0
  %824 = vmatpush.msra.mxu0 0.0
  %825 = vmatpush.msra.mxu0 0.0
  %826 = vmatpush.msra.mxu0 0.0
  %827 = vmatpush.msra.mxu0 0.0
  %828 = vmatpush.msra.mxu0 0.0
  %829 = vmatpush.msra.mxu0 0.0
  %830 = vmatpush.msra.mxu0 0.0
  %831 = vmatpush.msra.mxu0 0.0
  %832 = vmatpush.msra.mxu0 0.0
  %833 = vmatpush.msra.mxu0 0.0
  %834 = vmatpush.msra.mxu0 0.0
  %835 = vmatpush.msra.mxu0 0.0
  %836 = vmatpush.msra.mxu0 0.0
  %837 = vmatpush.msra.mxu0 0.0
  %838 = vmatpush.msra.mxu0 0.0
  %839 = vmatpush.msra.mxu0 %v350
  %840 = vmatmul.f32.gmra.mxu0 %v816
  %v841 = vpop.f32.mrf.mxu0
  %v842 = vadd.f32 0.0, %v841
  %843 = vmatmul.f32.gmra.mxu0 %v819
  %v844 = vpop.f32.mrf.mxu0
  %v845 = vadd.f32 0.0, %v844
  %846 = vmatmul.f32.gmra.mxu0 %v822
  %v847 = vpop.f32.mrf.mxu0
  %v848 = vadd.f32 0.0, %v847
  %849 = vdwg.mxu0
  %v850 = vadd.f32 %v676, %v842
  %v851 = vadd.f32 %v679, %v845
  %v852 = vadd.f32 %v682, %v848
  %853 = vrot.lane.b32.xlu0 %v334, 104
  %v854 = vpop.permute.xlu0 %853
  %855 = vrot.lane.b32.xlu0 %v337, 104
  %v856 = vpop.permute.xlu0 %855
  %857 = vrot.lane.b32.xlu0 %v340, 104
  %v858 = vpop.permute.xlu0 %857
  %859 = vrot.lane.b32.xlu0 %v334, 72
  %v860 = vpop.permute.xlu0 %859
  %861 = vrot.lane.b32.xlu0 %v337, 72
  %v862 = vpop.permute.xlu0 %861
  %863 = vrot.lane.b32.xlu0 %v340, 72
  %v864 = vpop.permute.xlu0 %863
  %v865 = vsel %vm361, %v854, 0
  %v867 = vsel %vm361, %v856, 0
  %v869 = vsel %vm361, %v858, 0
  %v871 = vsel %vm361, %v860, 0
  %v873 = vsel %vm361, %v862, 0
  %v875 = vsel %vm361, %v864, 0
  %877 = vmatpush.xpose.msra.mxu0 0.0
  %878 = vmatpush.xpose.msra.mxu0 0.0
  %879 = vmatpush.xpose.msra.mxu0 0.0
  %880 = vmatpush.xpose.msra.mxu0 0.0
  %881 = vmatpush.xpose.msra.mxu0 0.0
  %882 = vmatpush.xpose.msra.mxu0 0.0
  %883 = vmatpush.xpose.msra.mxu0 0.0
  %884 = vmatpush.xpose.msra.mxu0 0.0
  %885 = vmatpush.xpose.msra.mxu0 0.0
  %886 = vmatpush.xpose.msra.mxu0 0.0
  %887 = vmatpush.xpose.msra.mxu0 0.0
  %888 = vmatpush.xpose.msra.mxu0 0.0
  %889 = vmatpush.xpose.msra.mxu0 0.0
  %890 = vmatpush.xpose.msra.mxu0 %v875
  %891 = vmatpush.xpose.msra.mxu0 %v873
  %892 = vmatpush.xpose.msra.mxu0 %v871
  %893 = vmatmul.f32.gmra.mxu0 %v865
  %v894 = vpop.f32.mrf.mxu0
  %v895 = vadd.f32 0.0, %v894
  %896 = vmatmul.f32.gmra.mxu0 %v867
  %v897 = vpop.f32.mrf.mxu0
  %v898 = vadd.f32 0.0, %v897
  %899 = vmatmul.f32.gmra.mxu0 %v869
  %v900 = vpop.f32.mrf.mxu0
  %v901 = vadd.f32 0.0, %v900
  %902 = vdwg.mxu0
  %v903 = vmul.f32 %v895, 0.35355338
  %v904 = vmul.f32 %v898, 0.35355338
  %v905 = vmul.f32 %v901, 0.35355338
  %v906 = vsel %vm403, %v903, -inf
  %907 = vmax.xlane.f32.xlu0 %v906
  %v908 = vpop.xlane.xlu0 %907
  %v909 = vsel %vm403, %v904, -inf
  %910 = vmax.xlane.f32.xlu0 %v909
  %v911 = vpop.xlane.xlu0 %910
  %v912 = vsel %vm410, %v905, -inf
  %913 = vmax.xlane.f32.xlu0 %v912
  %v914 = vpop.xlane.xlu0 %913
  %v915 = vsub.f32 %v903, %v908
  %v916 = vsub.f32 %v904, %v911
  %v917 = vsub.f32 %v905, %v914
  %v918 = vmul.f32 %v915, 1.442695
  %v919 = vpow.pop %v918
  %v920 = vmul.f32 %v916, 1.442695
  %v921 = vpow.pop %v920
  %v922 = vmul.f32 %v917, 1.442695
  %v923 = vpow.pop %v922
  %v924 = vsel %vm403, %v919, 0.0
  %925 = vadd.xlane.f32.xlu0 %v924
  %v926 = vpop.xlane.xlu0 %925
  %v927 = vsel %vm403, %v921, 0.0
  %928 = vadd.xlane.f32.xlu0 %v927
  %v929 = vpop.xlane.xlu0 %928
  %v930 = vsel %vm410, %v923, 0.0
  %931 = vadd.xlane.f32.xlu0 %v930
  %v932 = vpop.xlane.xlu0 %931
  %v933 = vrcp.pop %v926
  %v934 = vrcp.pop %v929
  %v935 = vrcp.pop %v932
  %v936 = vmul.f32 %v919, %v933
  %v937 = vmul.f32 %v921, %v934
  %v938 = vmul.f32 %v923, %v935
  %939 = vrot.lane.b32.xlu0 %v334, 40
  %v940 = vpop.permute.xlu0 %939
  %941 = vrot.lane.b32.xlu0 %v337, 40
  %v942 = vpop.permute.xlu0 %941
  %943 = vrot.lane.b32.xlu0 %v340, 40
  %v944 = vpop.permute.xlu0 %943
  %v948 = vsel %vm403, %v936, 0
  %v951 = vsel %vm403, %v937, 0
  %v954 = vsel %vm403, %v938, 0
  %v956 = vsel %vm134, %v944, 0
  %958 = vmatpush.msra.mxu0 0.0
  %959 = vmatpush.msra.mxu0 0.0
  %960 = vmatpush.msra.mxu0 0.0
  %961 = vmatpush.msra.mxu0 0.0
  %962 = vmatpush.msra.mxu0 0.0
  %963 = vmatpush.msra.mxu0 0.0
  %964 = vmatpush.msra.mxu0 0.0
  %965 = vmatpush.msra.mxu0 0.0
  %966 = vmatpush.msra.mxu0 0.0
  %967 = vmatpush.msra.mxu0 0.0
  %968 = vmatpush.msra.mxu0 0.0
  %969 = vmatpush.msra.mxu0 0.0
  %970 = vmatpush.msra.mxu0 0.0
  %971 = vmatpush.msra.mxu0 %v956
  %972 = vmatpush.msra.mxu0 %v942
  %973 = vmatpush.msra.mxu0 %v940
  %974 = vmatmul.f32.gmra.mxu0 %v948
  %v975 = vpop.f32.mrf.mxu0
  %v976 = vadd.f32 0.0, %v975
  %977 = vmatmul.f32.gmra.mxu0 %v951
  %v978 = vpop.f32.mrf.mxu0
  %v979 = vadd.f32 0.0, %v978
  %980 = vmatmul.f32.gmra.mxu0 %v954
  %v981 = vpop.f32.mrf.mxu0
  %v982 = vadd.f32 0.0, %v981
  %983 = vdwg.mxu0
  %v985 = vsel %vm361, %v976, 0
  %v988 = vsel %vm361, %v979, 0
  %v991 = vsel %vm361, %v982, 0
  %993 = vmatpush.msra.mxu0 0.0
  %994 = vmatpush.msra.mxu0 0.0
  %995 = vmatpush.msra.mxu0 0.0
  %996 = vmatpush.msra.mxu0 0.0
  %997 = vmatpush.msra.mxu0 0.0
  %998 = vmatpush.msra.mxu0 0.0
  %999 = vmatpush.msra.mxu0 0.0
  %1000 = vmatpush.msra.mxu0 0.0
  %1001 = vmatpush.msra.mxu0 0.0
  %1002 = vmatpush.msra.mxu0 0.0
  %1003 = vmatpush.msra.mxu0 0.0
  %1004 = vmatpush.msra.mxu0 0.0
  %1005 = vmatpush.msra.mxu0 0.0
  %1006 = vmatpush.msra.mxu0 0.0
  %1007 = vmatpush.msra.mxu0 0.0
  %1008 = vmatpush.msra.mxu0 %v351
  %1009 = vmatmul.f32.gmra.mxu0 %v985
  %v1010 = vpop.f32.mrf.mxu0
  %v1011 = vadd.f32 0.0, %v1010
  %1012 = vmatmul.f32.gmra.mxu0 %v988
  %v1013 = vpop.f32.mrf.mxu0
  %v1014 = vadd.f32 0.0, %v1013
  %1015 = vmatmul.f32.gmra.mxu0 %v991
  %v1016 = vpop.f32.mrf.mxu0
  %v1017 = vadd.f32 0.0, %v1016
  %1018 = vdwg.mxu0
  %v1019 = vadd.f32 %v850, %v1011
  %v1020 = vadd.f32 %v851, %v1014
  %v1021 = vadd.f32 %v852, %v1017
  %vm1024 = vcmask 1046528
  %v1025 = vrot.slane %v340, 1
  %v1026 = vrot.slane %v343, 1
  %v1027 = vsel %vm1024, %v1025, %v1026
  %v1028 = vrot.slane %v346, 1
  %v1029 = vsel %vm1024, %v1026, %v1028
  %1030 = vrot.lane.b32.xlu0 %v1027, 96
  %v1031 = vpop.permute.xlu0 %1030
  %1032 = vrot.lane.b32.xlu0 %v1029, 96
  %v1033 = vpop.permute.xlu0 %1032
  %1034 = vrot.lane.b32.xlu0 %v1028, 96
  %v1035 = vpop.permute.xlu0 %1034
  %v1036 = vsel %vm361, %v1027, 0
  %v1038 = vsel %vm361, %v1029, 0
  %v1040 = vsel %vm361, %v1028, 0
  %v1042 = vsel %vm361, %v1031, 0
  %v1044 = vsel %vm361, %v1033, 0
  %v1046 = vsel %vm361, %v1035, 0
  %1048 = vmatpush.xpose.msra.mxu0 0.0
  %1049 = vmatpush.xpose.msra.mxu0 0.0
  %1050 = vmatpush.xpose.msra.mxu0 0.0
  %1051 = vmatpush.xpose.msra.mxu0 0.0
  %1052 = vmatpush.xpose.msra.mxu0 0.0
  %1053 = vmatpush.xpose.msra.mxu0 0.0
  %1054 = vmatpush.xpose.msra.mxu0 0.0
  %1055 = vmatpush.xpose.msra.mxu0 0.0
  %1056 = vmatpush.xpose.msra.mxu0 0.0
  %1057 = vmatpush.xpose.msra.mxu0 0.0
  %1058 = vmatpush.xpose.msra.mxu0 0.0
  %1059 = vmatpush.xpose.msra.mxu0 0.0
  %1060 = vmatpush.xpose.msra.mxu0 0.0
  %1061 = vmatpush.xpose.msra.mxu0 %v1046
  %1062 = vmatpush.xpose.msra.mxu0 %v1044
  %1063 = vmatpush.xpose.msra.mxu0 %v1042
  %1064 = vmatmul.f32.gmra.mxu0 %v1036
  %v1065 = vpop.f32.mrf.mxu0
  %v1066 = vadd.f32 0.0, %v1065
  %1067 = vmatmul.f32.gmra.mxu0 %v1038
  %v1068 = vpop.f32.mrf.mxu0
  %v1069 = vadd.f32 0.0, %v1068
  %1070 = vmatmul.f32.gmra.mxu0 %v1040
  %v1071 = vpop.f32.mrf.mxu0
  %v1072 = vadd.f32 0.0, %v1071
  %1073 = vdwg.mxu0
  %v1074 = vmul.f32 %v1066, 0.35355338
  %v1075 = vmul.f32 %v1069, 0.35355338
  %v1076 = vmul.f32 %v1072, 0.35355338
  %v1077 = vsel %vm403, %v1074, -inf
  %1078 = vmax.xlane.f32.xlu0 %v1077
  %v1079 = vpop.xlane.xlu0 %1078
  %v1080 = vsel %vm403, %v1075, -inf
  %1081 = vmax.xlane.f32.xlu0 %v1080
  %v1082 = vpop.xlane.xlu0 %1081
  %v1083 = vsel %vm410, %v1076, -inf
  %1084 = vmax.xlane.f32.xlu0 %v1083
  %v1085 = vpop.xlane.xlu0 %1084
  %v1086 = vsub.f32 %v1074, %v1079
  %v1087 = vsub.f32 %v1075, %v1082
  %v1088 = vsub.f32 %v1076, %v1085
  %v1089 = vmul.f32 %v1086, 1.442695
  %v1090 = vpow.pop %v1089
  %v1091 = vmul.f32 %v1087, 1.442695
  %v1092 = vpow.pop %v1091
  %v1093 = vmul.f32 %v1088, 1.442695
  %v1094 = vpow.pop %v1093
  %v1095 = vsel %vm403, %v1090, 0.0
  %1096 = vadd.xlane.f32.xlu0 %v1095
  %v1097 = vpop.xlane.xlu0 %1096
  %v1098 = vsel %vm403, %v1092, 0.0
  %1099 = vadd.xlane.f32.xlu0 %v1098
  %v1100 = vpop.xlane.xlu0 %1099
  %v1101 = vsel %vm410, %v1094, 0.0
  %1102 = vadd.xlane.f32.xlu0 %v1101
  %v1103 = vpop.xlane.xlu0 %1102
  %v1104 = vrcp.pop %v1097
  %v1105 = vrcp.pop %v1100
  %v1106 = vrcp.pop %v1103
  %v1107 = vmul.f32 %v1090, %v1104
  %v1108 = vmul.f32 %v1092, %v1105
  %v1109 = vmul.f32 %v1094, %v1106
  %1110 = vrot.lane.b32.xlu0 %v1027, 64
  %v1111 = vpop.permute.xlu0 %1110
  %1112 = vrot.lane.b32.xlu0 %v1029, 64
  %v1113 = vpop.permute.xlu0 %1112
  %1114 = vrot.lane.b32.xlu0 %v1028, 64
  %v1115 = vpop.permute.xlu0 %1114
  %v1119 = vsel %vm403, %v1107, 0
  %v1122 = vsel %vm403, %v1108, 0
  %v1125 = vsel %vm403, %v1109, 0
  %v1127 = vsel %vm134, %v1115, 0
  %1129 = vmatpush.msra.mxu0 0.0
  %1130 = vmatpush.msra.mxu0 0.0
  %1131 = vmatpush.msra.mxu0 0.0
  %1132 = vmatpush.msra.mxu0 0.0
  %1133 = vmatpush.msra.mxu0 0.0
  %1134 = vmatpush.msra.mxu0 0.0
  %1135 = vmatpush.msra.mxu0 0.0
  %1136 = vmatpush.msra.mxu0 0.0
  %1137 = vmatpush.msra.mxu0 0.0
  %1138 = vmatpush.msra.mxu0 0.0
  %1139 = vmatpush.msra.mxu0 0.0
  %1140 = vmatpush.msra.mxu0 0.0
  %1141 = vmatpush.msra.mxu0 0.0
  %1142 = vmatpush.msra.mxu0 %v1127
  %1143 = vmatpush.msra.mxu0 %v1113
  %1144 = vmatpush.msra.mxu0 %v1111
  %1145 = vmatmul.f32.gmra.mxu0 %v1119
  %v1146 = vpop.f32.mrf.mxu0
  %v1147 = vadd.f32 0.0, %v1146
  %1148 = vmatmul.f32.gmra.mxu0 %v1122
  %v1149 = vpop.f32.mrf.mxu0
  %v1150 = vadd.f32 0.0, %v1149
  %1151 = vmatmul.f32.gmra.mxu0 %v1125
  %v1152 = vpop.f32.mrf.mxu0
  %v1153 = vadd.f32 0.0, %v1152
  %1154 = vdwg.mxu0
  %1155 = vrot.lane.b32.xlu0 %v1027, 120
  %v1156 = vpop.permute.xlu0 %1155
  %1157 = vrot.lane.b32.xlu0 %v1029, 120
  %v1158 = vpop.permute.xlu0 %1157
  %1159 = vrot.lane.b32.xlu0 %v1028, 120
  %v1160 = vpop.permute.xlu0 %1159
  %1161 = vrot.lane.b32.xlu0 %v1027, 88
  %v1162 = vpop.permute.xlu0 %1161
  %1163 = vrot.lane.b32.xlu0 %v1029, 88
  %v1164 = vpop.permute.xlu0 %1163
  %1165 = vrot.lane.b32.xlu0 %v1028, 88
  %v1166 = vpop.permute.xlu0 %1165
  %v1167 = vsel %vm361, %v1156, 0
  %v1169 = vsel %vm361, %v1158, 0
  %v1171 = vsel %vm361, %v1160, 0
  %v1173 = vsel %vm361, %v1162, 0
  %v1175 = vsel %vm361, %v1164, 0
  %v1177 = vsel %vm361, %v1166, 0
  %1179 = vmatpush.xpose.msra.mxu0 0.0
  %1180 = vmatpush.xpose.msra.mxu0 0.0
  %1181 = vmatpush.xpose.msra.mxu0 0.0
  %1182 = vmatpush.xpose.msra.mxu0 0.0
  %1183 = vmatpush.xpose.msra.mxu0 0.0
  %1184 = vmatpush.xpose.msra.mxu0 0.0
  %1185 = vmatpush.xpose.msra.mxu0 0.0
  %1186 = vmatpush.xpose.msra.mxu0 0.0
  %1187 = vmatpush.xpose.msra.mxu0 0.0
  %1188 = vmatpush.xpose.msra.mxu0 0.0
  %1189 = vmatpush.xpose.msra.mxu0 0.0
  %1190 = vmatpush.xpose.msra.mxu0 0.0
  %1191 = vmatpush.xpose.msra.mxu0 0.0
  %1192 = vmatpush.xpose.msra.mxu0 %v1177
  %1193 = vmatpush.xpose.msra.mxu0 %v1175
  %1194 = vmatpush.xpose.msra.mxu0 %v1173
  %1195 = vmatmul.f32.gmra.mxu0 %v1167
  %v1196 = vpop.f32.mrf.mxu0
  %v1197 = vadd.f32 0.0, %v1196
  %1198 = vmatmul.f32.gmra.mxu0 %v1169
  %v1199 = vpop.f32.mrf.mxu0
  %v1200 = vadd.f32 0.0, %v1199
  %1201 = vmatmul.f32.gmra.mxu0 %v1171
  %v1202 = vpop.f32.mrf.mxu0
  %v1203 = vadd.f32 0.0, %v1202
  %1204 = vdwg.mxu0
  %v1205 = vmul.f32 %v1197, 0.35355338
  %v1206 = vmul.f32 %v1200, 0.35355338
  %v1207 = vmul.f32 %v1203, 0.35355338
  %v1208 = vsel %vm403, %v1205, -inf
  %1209 = vmax.xlane.f32.xlu0 %v1208
  %v1210 = vpop.xlane.xlu0 %1209
  %v1211 = vsel %vm403, %v1206, -inf
  %1212 = vmax.xlane.f32.xlu0 %v1211
  %v1213 = vpop.xlane.xlu0 %1212
  %v1214 = vsel %vm410, %v1207, -inf
  %1215 = vmax.xlane.f32.xlu0 %v1214
  %v1216 = vpop.xlane.xlu0 %1215
  %v1217 = vsub.f32 %v1205, %v1210
  %v1218 = vsub.f32 %v1206, %v1213
  %v1219 = vsub.f32 %v1207, %v1216
  %v1220 = vmul.f32 %v1217, 1.442695
  %v1221 = vpow.pop %v1220
  %v1222 = vmul.f32 %v1218, 1.442695
  %v1223 = vpow.pop %v1222
  %v1224 = vmul.f32 %v1219, 1.442695
  %v1225 = vpow.pop %v1224
  %v1226 = vsel %vm403, %v1221, 0.0
  %1227 = vadd.xlane.f32.xlu0 %v1226
  %v1228 = vpop.xlane.xlu0 %1227
  %v1229 = vsel %vm403, %v1223, 0.0
  %1230 = vadd.xlane.f32.xlu0 %v1229
  %v1231 = vpop.xlane.xlu0 %1230
  %v1232 = vsel %vm410, %v1225, 0.0
  %1233 = vadd.xlane.f32.xlu0 %v1232
  %v1234 = vpop.xlane.xlu0 %1233
  %v1235 = vrcp.pop %v1228
  %v1236 = vrcp.pop %v1231
  %v1237 = vrcp.pop %v1234
  %v1238 = vmul.f32 %v1221, %v1235
  %v1239 = vmul.f32 %v1223, %v1236
  %v1240 = vmul.f32 %v1225, %v1237
  %1241 = vrot.lane.b32.xlu0 %v1027, 56
  %v1242 = vpop.permute.xlu0 %1241
  %1243 = vrot.lane.b32.xlu0 %v1029, 56
  %v1244 = vpop.permute.xlu0 %1243
  %1245 = vrot.lane.b32.xlu0 %v1028, 56
  %v1246 = vpop.permute.xlu0 %1245
  %v1250 = vsel %vm403, %v1238, 0
  %v1253 = vsel %vm403, %v1239, 0
  %v1256 = vsel %vm403, %v1240, 0
  %v1258 = vsel %vm134, %v1246, 0
  %1260 = vmatpush.msra.mxu0 0.0
  %1261 = vmatpush.msra.mxu0 0.0
  %1262 = vmatpush.msra.mxu0 0.0
  %1263 = vmatpush.msra.mxu0 0.0
  %1264 = vmatpush.msra.mxu0 0.0
  %1265 = vmatpush.msra.mxu0 0.0
  %1266 = vmatpush.msra.mxu0 0.0
  %1267 = vmatpush.msra.mxu0 0.0
  %1268 = vmatpush.msra.mxu0 0.0
  %1269 = vmatpush.msra.mxu0 0.0
  %1270 = vmatpush.msra.mxu0 0.0
  %1271 = vmatpush.msra.mxu0 0.0
  %1272 = vmatpush.msra.mxu0 0.0
  %1273 = vmatpush.msra.mxu0 %v1258
  %1274 = vmatpush.msra.mxu0 %v1244
  %1275 = vmatpush.msra.mxu0 %v1242
  %1276 = vmatmul.f32.gmra.mxu0 %v1250
  %v1277 = vpop.f32.mrf.mxu0
  %v1278 = vadd.f32 0.0, %v1277
  %1279 = vmatmul.f32.gmra.mxu0 %v1253
  %v1280 = vpop.f32.mrf.mxu0
  %v1281 = vadd.f32 0.0, %v1280
  %1282 = vmatmul.f32.gmra.mxu0 %v1256
  %v1283 = vpop.f32.mrf.mxu0
  %v1284 = vadd.f32 0.0, %v1283
  %1285 = vdwg.mxu0
  %v1287 = vsel %vm361, %v1278, 0
  %v1290 = vsel %vm361, %v1281, 0
  %v1293 = vsel %vm361, %v1284, 0
  %1295 = vmatpush.msra.mxu0 0.0
  %1296 = vmatpush.msra.mxu0 0.0
  %1297 = vmatpush.msra.mxu0 0.0
  %1298 = vmatpush.msra.mxu0 0.0
  %1299 = vmatpush.msra.mxu0 0.0
  %1300 = vmatpush.msra.mxu0 0.0
  %1301 = vmatpush.msra.mxu0 0.0
  %1302 = vmatpush.msra.mxu0 0.0
  %1303 = vmatpush.msra.mxu0 0.0
  %1304 = vmatpush.msra.mxu0 0.0
  %1305 = vmatpush.msra.mxu0 0.0
  %1306 = vmatpush.msra.mxu0 0.0
  %1307 = vmatpush.msra.mxu0 0.0
  %1308 = vmatpush.msra.mxu0 0.0
  %1309 = vmatpush.msra.mxu0 0.0
  %1310 = vmatpush.msra.mxu0 %v349
  %1311 = vmatmul.f32.gmra.mxu0 %v1287
  %v1312 = vpop.f32.mrf.mxu0
  %v1313 = vadd.f32 0.0, %v1312
  %1314 = vmatmul.f32.gmra.mxu0 %v1290
  %v1315 = vpop.f32.mrf.mxu0
  %v1316 = vadd.f32 0.0, %v1315
  %1317 = vmatmul.f32.gmra.mxu0 %v1293
  %v1318 = vpop.f32.mrf.mxu0
  %v1319 = vadd.f32 0.0, %v1318
  %1320 = vdwg.mxu0
  %v1322 = vsel %vm361, %v1147, 0
  %v1325 = vsel %vm361, %v1150, 0
  %v1328 = vsel %vm361, %v1153, 0
  %1330 = vmatpush.msra.mxu0 0.0
  %1331 = vmatpush.msra.mxu0 0.0
  %1332 = vmatpush.msra.mxu0 0.0
  %1333 = vmatpush.msra.mxu0 0.0
  %1334 = vmatpush.msra.mxu0 0.0
  %1335 = vmatpush.msra.mxu0 0.0
  %1336 = vmatpush.msra.mxu0 0.0
  %1337 = vmatpush.msra.mxu0 0.0
  %1338 = vmatpush.msra.mxu0 0.0
  %1339 = vmatpush.msra.mxu0 0.0
  %1340 = vmatpush.msra.mxu0 0.0
  %1341 = vmatpush.msra.mxu0 0.0
  %1342 = vmatpush.msra.mxu0 0.0
  %1343 = vmatpush.msra.mxu0 0.0
  %1344 = vmatpush.msra.mxu0 0.0
  %1345 = vmatpush.msra.mxu0 %v348
  %1346 = vmatmul.f32.gmra.mxu0 %v1322
  %v1347 = vpop.f32.mrf.mxu0
  %v1348 = vadd.f32 %v1313, %v1347
  %1349 = vmatmul.f32.gmra.mxu0 %v1325
  %v1350 = vpop.f32.mrf.mxu0
  %v1351 = vadd.f32 %v1316, %v1350
  %1352 = vmatmul.f32.gmra.mxu0 %v1328
  %v1353 = vpop.f32.mrf.mxu0
  %v1354 = vadd.f32 %v1319, %v1353
  %1355 = vdwg.mxu0
  %1356 = vrot.lane.b32.xlu0 %v1027, 112
  %v1357 = vpop.permute.xlu0 %1356
  %1358 = vrot.lane.b32.xlu0 %v1029, 112
  %v1359 = vpop.permute.xlu0 %1358
  %1360 = vrot.lane.b32.xlu0 %v1028, 112
  %v1361 = vpop.permute.xlu0 %1360
  %1362 = vrot.lane.b32.xlu0 %v1027, 80
  %v1363 = vpop.permute.xlu0 %1362
  %1364 = vrot.lane.b32.xlu0 %v1029, 80
  %v1365 = vpop.permute.xlu0 %1364
  %1366 = vrot.lane.b32.xlu0 %v1028, 80
  %v1367 = vpop.permute.xlu0 %1366
  %v1368 = vsel %vm361, %v1357, 0
  %v1370 = vsel %vm361, %v1359, 0
  %v1372 = vsel %vm361, %v1361, 0
  %v1374 = vsel %vm361, %v1363, 0
  %v1376 = vsel %vm361, %v1365, 0
  %v1378 = vsel %vm361, %v1367, 0
  %1380 = vmatpush.xpose.msra.mxu0 0.0
  %1381 = vmatpush.xpose.msra.mxu0 0.0
  %1382 = vmatpush.xpose.msra.mxu0 0.0
  %1383 = vmatpush.xpose.msra.mxu0 0.0
  %1384 = vmatpush.xpose.msra.mxu0 0.0
  %1385 = vmatpush.xpose.msra.mxu0 0.0
  %1386 = vmatpush.xpose.msra.mxu0 0.0
  %1387 = vmatpush.xpose.msra.mxu0 0.0
  %1388 = vmatpush.xpose.msra.mxu0 0.0
  %1389 = vmatpush.xpose.msra.mxu0 0.0
  %1390 = vmatpush.xpose.msra.mxu0 0.0
  %1391 = vmatpush.xpose.msra.mxu0 0.0
  %1392 = vmatpush.xpose.msra.mxu0 0.0
  %1393 = vmatpush.xpose.msra.mxu0 %v1378
  %1394 = vmatpush.xpose.msra.mxu0 %v1376
  %1395 = vmatpush.xpose.msra.mxu0 %v1374
  %1396 = vmatmul.f32.gmra.mxu0 %v1368
  %v1397 = vpop.f32.mrf.mxu0
  %v1398 = vadd.f32 0.0, %v1397
  %1399 = vmatmul.f32.gmra.mxu0 %v1370
  %v1400 = vpop.f32.mrf.mxu0
  %v1401 = vadd.f32 0.0, %v1400
  %1402 = vmatmul.f32.gmra.mxu0 %v1372
  %v1403 = vpop.f32.mrf.mxu0
  %v1404 = vadd.f32 0.0, %v1403
  %1405 = vdwg.mxu0
  %v1406 = vmul.f32 %v1398, 0.35355338
  %v1407 = vmul.f32 %v1401, 0.35355338
  %v1408 = vmul.f32 %v1404, 0.35355338
  %v1409 = vsel %vm403, %v1406, -inf
  %1410 = vmax.xlane.f32.xlu0 %v1409
  %v1411 = vpop.xlane.xlu0 %1410
  %v1412 = vsel %vm403, %v1407, -inf
  %1413 = vmax.xlane.f32.xlu0 %v1412
  %v1414 = vpop.xlane.xlu0 %1413
  %v1415 = vsel %vm410, %v1408, -inf
  %1416 = vmax.xlane.f32.xlu0 %v1415
  %v1417 = vpop.xlane.xlu0 %1416
  %v1418 = vsub.f32 %v1406, %v1411
  %v1419 = vsub.f32 %v1407, %v1414
  %v1420 = vsub.f32 %v1408, %v1417
  %v1421 = vmul.f32 %v1418, 1.442695
  %v1422 = vpow.pop %v1421
  %v1423 = vmul.f32 %v1419, 1.442695
  %v1424 = vpow.pop %v1423
  %v1425 = vmul.f32 %v1420, 1.442695
  %v1426 = vpow.pop %v1425
  %v1427 = vsel %vm403, %v1422, 0.0
  %1428 = vadd.xlane.f32.xlu0 %v1427
  %v1429 = vpop.xlane.xlu0 %1428
  %v1430 = vsel %vm403, %v1424, 0.0
  %1431 = vadd.xlane.f32.xlu0 %v1430
  %v1432 = vpop.xlane.xlu0 %1431
  %v1433 = vsel %vm410, %v1426, 0.0
  %1434 = vadd.xlane.f32.xlu0 %v1433
  %v1435 = vpop.xlane.xlu0 %1434
  %v1436 = vrcp.pop %v1429
  %v1437 = vrcp.pop %v1432
  %v1438 = vrcp.pop %v1435
  %v1439 = vmul.f32 %v1422, %v1436
  %v1440 = vmul.f32 %v1424, %v1437
  %v1441 = vmul.f32 %v1426, %v1438
  %1442 = vrot.lane.b32.xlu0 %v1027, 48
  %v1443 = vpop.permute.xlu0 %1442
  %1444 = vrot.lane.b32.xlu0 %v1029, 48
  %v1445 = vpop.permute.xlu0 %1444
  %1446 = vrot.lane.b32.xlu0 %v1028, 48
  %v1447 = vpop.permute.xlu0 %1446
  %v1451 = vsel %vm403, %v1439, 0
  %v1454 = vsel %vm403, %v1440, 0
  %v1457 = vsel %vm403, %v1441, 0
  %v1459 = vsel %vm134, %v1447, 0
  %1461 = vmatpush.msra.mxu0 0.0
  %1462 = vmatpush.msra.mxu0 0.0
  %1463 = vmatpush.msra.mxu0 0.0
  %1464 = vmatpush.msra.mxu0 0.0
  %1465 = vmatpush.msra.mxu0 0.0
  %1466 = vmatpush.msra.mxu0 0.0
  %1467 = vmatpush.msra.mxu0 0.0
  %1468 = vmatpush.msra.mxu0 0.0
  %1469 = vmatpush.msra.mxu0 0.0
  %1470 = vmatpush.msra.mxu0 0.0
  %1471 = vmatpush.msra.mxu0 0.0
  %1472 = vmatpush.msra.mxu0 0.0
  %1473 = vmatpush.msra.mxu0 0.0
  %1474 = vmatpush.msra.mxu0 %v1459
  %1475 = vmatpush.msra.mxu0 %v1445
  %1476 = vmatpush.msra.mxu0 %v1443
  %1477 = vmatmul.f32.gmra.mxu0 %v1451
  %v1478 = vpop.f32.mrf.mxu0
  %v1479 = vadd.f32 0.0, %v1478
  %1480 = vmatmul.f32.gmra.mxu0 %v1454
  %v1481 = vpop.f32.mrf.mxu0
  %v1482 = vadd.f32 0.0, %v1481
  %1483 = vmatmul.f32.gmra.mxu0 %v1457
  %v1484 = vpop.f32.mrf.mxu0
  %v1485 = vadd.f32 0.0, %v1484
  %1486 = vdwg.mxu0
  %v1488 = vsel %vm361, %v1479, 0
  %v1491 = vsel %vm361, %v1482, 0
  %v1494 = vsel %vm361, %v1485, 0
  %1496 = vmatpush.msra.mxu0 0.0
  %1497 = vmatpush.msra.mxu0 0.0
  %1498 = vmatpush.msra.mxu0 0.0
  %1499 = vmatpush.msra.mxu0 0.0
  %1500 = vmatpush.msra.mxu0 0.0
  %1501 = vmatpush.msra.mxu0 0.0
  %1502 = vmatpush.msra.mxu0 0.0
  %1503 = vmatpush.msra.mxu0 0.0
  %1504 = vmatpush.msra.mxu0 0.0
  %1505 = vmatpush.msra.mxu0 0.0
  %1506 = vmatpush.msra.mxu0 0.0
  %1507 = vmatpush.msra.mxu0 0.0
  %1508 = vmatpush.msra.mxu0 0.0
  %1509 = vmatpush.msra.mxu0 0.0
  %1510 = vmatpush.msra.mxu0 0.0
  %1511 = vmatpush.msra.mxu0 %v350
  %1512 = vmatmul.f32.gmra.mxu0 %v1488
  %v1513 = vpop.f32.mrf.mxu0
  %v1514 = vadd.f32 0.0, %v1513
  %1515 = vmatmul.f32.gmra.mxu0 %v1491
  %v1516 = vpop.f32.mrf.mxu0
  %v1517 = vadd.f32 0.0, %v1516
  %1518 = vmatmul.f32.gmra.mxu0 %v1494
  %v1519 = vpop.f32.mrf.mxu0
  %v1520 = vadd.f32 0.0, %v1519
  %1521 = vdwg.mxu0
  %v1522 = vadd.f32 %v1348, %v1514
  %v1523 = vadd.f32 %v1351, %v1517
  %v1524 = vadd.f32 %v1354, %v1520
  %1525 = vrot.lane.b32.xlu0 %v1027, 104
  %v1526 = vpop.permute.xlu0 %1525
  %1527 = vrot.lane.b32.xlu0 %v1029, 104
  %v1528 = vpop.permute.xlu0 %1527
  %1529 = vrot.lane.b32.xlu0 %v1028, 104
  %v1530 = vpop.permute.xlu0 %1529
  %1531 = vrot.lane.b32.xlu0 %v1027, 72
  %v1532 = vpop.permute.xlu0 %1531
  %1533 = vrot.lane.b32.xlu0 %v1029, 72
  %v1534 = vpop.permute.xlu0 %1533
  %1535 = vrot.lane.b32.xlu0 %v1028, 72
  %v1536 = vpop.permute.xlu0 %1535
  %v1537 = vsel %vm361, %v1526, 0
  %v1539 = vsel %vm361, %v1528, 0
  %v1541 = vsel %vm361, %v1530, 0
  %v1543 = vsel %vm361, %v1532, 0
  %v1545 = vsel %vm361, %v1534, 0
  %v1547 = vsel %vm361, %v1536, 0
  %1549 = vmatpush.xpose.msra.mxu0 0.0
  %1550 = vmatpush.xpose.msra.mxu0 0.0
  %1551 = vmatpush.xpose.msra.mxu0 0.0
  %1552 = vmatpush.xpose.msra.mxu0 0.0
  %1553 = vmatpush.xpose.msra.mxu0 0.0
  %1554 = vmatpush.xpose.msra.mxu0 0.0
  %1555 = vmatpush.xpose.msra.mxu0 0.0
  %1556 = vmatpush.xpose.msra.mxu0 0.0
  %1557 = vmatpush.xpose.msra.mxu0 0.0
  %1558 = vmatpush.xpose.msra.mxu0 0.0
  %1559 = vmatpush.xpose.msra.mxu0 0.0
  %1560 = vmatpush.xpose.msra.mxu0 0.0
  %1561 = vmatpush.xpose.msra.mxu0 0.0
  %1562 = vmatpush.xpose.msra.mxu0 %v1547
  %1563 = vmatpush.xpose.msra.mxu0 %v1545
  %1564 = vmatpush.xpose.msra.mxu0 %v1543
  %1565 = vmatmul.f32.gmra.mxu0 %v1537
  %v1566 = vpop.f32.mrf.mxu0
  %v1567 = vadd.f32 0.0, %v1566
  %1568 = vmatmul.f32.gmra.mxu0 %v1539
  %v1569 = vpop.f32.mrf.mxu0
  %v1570 = vadd.f32 0.0, %v1569
  %1571 = vmatmul.f32.gmra.mxu0 %v1541
  %v1572 = vpop.f32.mrf.mxu0
  %v1573 = vadd.f32 0.0, %v1572
  %1574 = vdwg.mxu0
  %v1575 = vmul.f32 %v1567, 0.35355338
  %v1576 = vmul.f32 %v1570, 0.35355338
  %v1577 = vmul.f32 %v1573, 0.35355338
  %v1578 = vsel %vm403, %v1575, -inf
  %1579 = vmax.xlane.f32.xlu0 %v1578
  %v1580 = vpop.xlane.xlu0 %1579
  %v1581 = vsel %vm403, %v1576, -inf
  %1582 = vmax.xlane.f32.xlu0 %v1581
  %v1583 = vpop.xlane.xlu0 %1582
  %v1584 = vsel %vm410, %v1577, -inf
  %1585 = vmax.xlane.f32.xlu0 %v1584
  %v1586 = vpop.xlane.xlu0 %1585
  %v1587 = vsub.f32 %v1575, %v1580
  %v1588 = vsub.f32 %v1576, %v1583
  %v1589 = vsub.f32 %v1577, %v1586
  %v1590 = vmul.f32 %v1587, 1.442695
  %v1591 = vpow.pop %v1590
  %v1592 = vmul.f32 %v1588, 1.442695
  %v1593 = vpow.pop %v1592
  %v1594 = vmul.f32 %v1589, 1.442695
  %v1595 = vpow.pop %v1594
  %v1596 = vsel %vm403, %v1591, 0.0
  %1597 = vadd.xlane.f32.xlu0 %v1596
  %v1598 = vpop.xlane.xlu0 %1597
  %v1599 = vsel %vm403, %v1593, 0.0
  %1600 = vadd.xlane.f32.xlu0 %v1599
  %v1601 = vpop.xlane.xlu0 %1600
  %v1602 = vsel %vm410, %v1595, 0.0
  %1603 = vadd.xlane.f32.xlu0 %v1602
  %v1604 = vpop.xlane.xlu0 %1603
  %v1605 = vrcp.pop %v1598
  %v1606 = vrcp.pop %v1601
  %v1607 = vrcp.pop %v1604
  %v1608 = vmul.f32 %v1591, %v1605
  %v1609 = vmul.f32 %v1593, %v1606
  %v1610 = vmul.f32 %v1595, %v1607
  %1611 = vrot.lane.b32.xlu0 %v1027, 40
  %v1612 = vpop.permute.xlu0 %1611
  %1613 = vrot.lane.b32.xlu0 %v1029, 40
  %v1614 = vpop.permute.xlu0 %1613
  %1615 = vrot.lane.b32.xlu0 %v1028, 40
  %v1616 = vpop.permute.xlu0 %1615
  %v1620 = vsel %vm403, %v1608, 0
  %v1623 = vsel %vm403, %v1609, 0
  %v1626 = vsel %vm403, %v1610, 0
  %v1628 = vsel %vm134, %v1616, 0
  %1630 = vmatpush.msra.mxu0 0.0
  %1631 = vmatpush.msra.mxu0 0.0
  %1632 = vmatpush.msra.mxu0 0.0
  %1633 = vmatpush.msra.mxu0 0.0
  %1634 = vmatpush.msra.mxu0 0.0
  %1635 = vmatpush.msra.mxu0 0.0
  %1636 = vmatpush.msra.mxu0 0.0
  %1637 = vmatpush.msra.mxu0 0.0
  %1638 = vmatpush.msra.mxu0 0.0
  %1639 = vmatpush.msra.mxu0 0.0
  %1640 = vmatpush.msra.mxu0 0.0
  %1641 = vmatpush.msra.mxu0 0.0
  %1642 = vmatpush.msra.mxu0 0.0
  %1643 = vmatpush.msra.mxu0 %v1628
  %1644 = vmatpush.msra.mxu0 %v1614
  %1645 = vmatpush.msra.mxu0 %v1612
  %1646 = vmatmul.f32.gmra.mxu0 %v1620
  %v1647 = vpop.f32.mrf.mxu0
  %v1648 = vadd.f32 0.0, %v1647
  %1649 = vmatmul.f32.gmra.mxu0 %v1623
  %v1650 = vpop.f32.mrf.mxu0
  %v1651 = vadd.f32 0.0, %v1650
  %1652 = vmatmul.f32.gmra.mxu0 %v1626
  %v1653 = vpop.f32.mrf.mxu0
  %v1654 = vadd.f32 0.0, %v1653
  %1655 = vdwg.mxu0
  %v1657 = vsel %vm361, %v1648, 0
  %v1660 = vsel %vm361, %v1651, 0
  %v1663 = vsel %vm361, %v1654, 0
  %1665 = vmatpush.msra.mxu0 0.0
  %1666 = vmatpush.msra.mxu0 0.0
  %1667 = vmatpush.msra.mxu0 0.0
  %1668 = vmatpush.msra.mxu0 0.0
  %1669 = vmatpush.msra.mxu0 0.0
  %1670 = vmatpush.msra.mxu0 0.0
  %1671 = vmatpush.msra.mxu0 0.0
  %1672 = vmatpush.msra.mxu0 0.0
  %1673 = vmatpush.msra.mxu0 0.0
  %1674 = vmatpush.msra.mxu0 0.0
  %1675 = vmatpush.msra.mxu0 0.0
  %1676 = vmatpush.msra.mxu0 0.0
  %1677 = vmatpush.msra.mxu0 0.0
  %1678 = vmatpush.msra.mxu0 0.0
  %1679 = vmatpush.msra.mxu0 0.0
  %1680 = vmatpush.msra.mxu0 %v351
  %1681 = vmatmul.f32.gmra.mxu0 %v1657
  %v1682 = vpop.f32.mrf.mxu0
  %v1683 = vadd.f32 0.0, %v1682
  %1684 = vmatmul.f32.gmra.mxu0 %v1660
  %v1685 = vpop.f32.mrf.mxu0
  %v1686 = vadd.f32 0.0, %v1685
  %1687 = vmatmul.f32.gmra.mxu0 %v1663
  %v1688 = vpop.f32.mrf.mxu0
  %v1689 = vadd.f32 0.0, %v1688
  %1690 = vdwg.mxu0
  %v1691 = vadd.f32 %v1522, %v1683
  %v1692 = vadd.f32 %v1523, %v1686
  %v1693 = vadd.f32 %v1524, %v1689
  %v1697 = vrot.slane %v1691, 7
  %v1698 = vrot.slane %v1692, 7
  %v1699 = vsel %vm134, %v1697, %v1698
  %v1700 = vrot.slane %v1693, 7
  %v1701 = vsel %vm134, %v1698, %v1700
  %v1705 = vsel %vm134, %v1021, %v1697
  %v1706 = vadd.f32 %v153, %v1019
  %v1707 = vadd.f32 %v137, %v1020
  %v1708 = vadd.f32 %v155, %v1705
  %v1709 = vadd.f32 %v149, %v1699
  %v1710 = vadd.f32 %v148, %v1701
  %v1711 = vld [vmem:[%s9] sm:$0x1]
  %v1713 = vperm.slane %v1711, 0
  %v1715 = vadd.f32 %v1706, %v1713
  %v1716 = vadd.f32 %v1707, %v1713
  %v1717 = vadd.f32 %v1708, %v1713
  %v1718 = vadd.f32 %v1709, %v1713
  %v1719 = vadd.f32 %v1710, %v1713
  %v1720 = vld [vmem:[%s10] sm:$0x1]
  %v1721 = vld [vmem:[%s11] sm:$0x1]
  %v1722 = vsel %vm158, %v1715, 0.0
  %1723 = vadd.xlane.f32.xlu0 %v1722
  %v1724 = vpop.xlane.xlu0 %1723
  %v1725 = vsel %vm158, %v1716, 0.0
  %1726 = vadd.xlane.f32.xlu0 %v1725
  %v1727 = vpop.xlane.xlu0 %1726
  %v1728 = vsel %vm158, %v1717, 0.0
  %1729 = vadd.xlane.f32.xlu0 %v1728
  %v1730 = vpop.xlane.xlu0 %1729
  %v1731 = vsel %vm158, %v1718, 0.0
  %1732 = vadd.xlane.f32.xlu0 %v1731
  %v1733 = vpop.xlane.xlu0 %1732
  %v1734 = vsel %vm171, %v1719, 0.0
  %1735 = vadd.xlane.f32.xlu0 %v1734
  %v1736 = vpop.xlane.xlu0 %1735
  %v1737 = vmul.f32 %v1724, %v181
  %v1738 = vmul.f32 %v1727, %v181
  %v1739 = vmul.f32 %v1730, %v181
  %v1740 = vmul.f32 %v1733, %v181
  %v1741 = vmul.f32 %v1736, %v181
  %v1742 = vsub.f32 %v1715, %v1737
  %v1743 = vsub.f32 %v1716, %v1738
  %v1744 = vsub.f32 %v1717, %v1739
  %v1745 = vsub.f32 %v1718, %v1740
  %v1746 = vsub.f32 %v1719, %v1741
  %v1747 = vmul.f32 %v1742, %v1742
  %v1748 = vmul.f32 %v1743, %v1743
  %v1749 = vmul.f32 %v1744, %v1744
  %v1750 = vmul.f32 %v1745, %v1745
  %v1751 = vmul.f32 %v1746, %v1746
  %v1752 = vsel %vm158, %v1747, 0.0
  %1753 = vadd.xlane.f32.xlu0 %v1752
  %v1754 = vpop.xlane.xlu0 %1753
  %v1755 = vsel %vm158, %v1748, 0.0
  %1756 = vadd.xlane.f32.xlu0 %v1755
  %v1757 = vpop.xlane.xlu0 %1756
  %v1758 = vsel %vm158, %v1749, 0.0
  %1759 = vadd.xlane.f32.xlu0 %v1758
  %v1760 = vpop.xlane.xlu0 %1759
  %v1761 = vsel %vm158, %v1750, 0.0
  %1762 = vadd.xlane.f32.xlu0 %v1761
  %v1763 = vpop.xlane.xlu0 %1762
  %v1764 = vsel %vm171, %v1751, 0.0
  %1765 = vadd.xlane.f32.xlu0 %v1764
  %v1766 = vpop.xlane.xlu0 %1765
  %v1767 = vmul.f32 %v1754, %v181
  %v1768 = vmul.f32 %v1757, %v181
  %v1769 = vmul.f32 %v1760, %v181
  %v1770 = vmul.f32 %v1763, %v181
  %v1771 = vmul.f32 %v1766, %v181
  %v1772 = vadd.f32 %v1767, 1e-12
  %v1773 = vadd.f32 %v1768, 1e-12
  %v1774 = vadd.f32 %v1769, 1e-12
  %v1775 = vadd.f32 %v1770, 1e-12
  %v1776 = vadd.f32 %v1771, 1e-12
  %v1777 = vrsqrt.pop %v1772
  %v1778 = vmul.f32 %v1777, %v1772
  %v1779 = vmul.f32 %v1778, %v1777
  %v1780 = vmul.f32 0.5, %v1779
  %v1781 = vsub.f32 1.5, %v1780
  %v1782 = vmul.f32 %v1777, %v1781
  %vm1783 = vweird.f32 %v1772
  %vm1784 = vweird.f32 %v1777
  %vm1785 = vmor %vm1783, %vm1784
  %v1786 = vsel %vm1785, %v1777, %v1782
  %v1787 = vrsqrt.pop %v1773
  %v1788 = vmul.f32 %v1787, %v1773
  %v1789 = vmul.f32 %v1788, %v1787
  %v1790 = vmul.f32 0.5, %v1789
  %v1791 = vsub.f32 1.5, %v1790
  %v1792 = vmul.f32 %v1787, %v1791
  %vm1793 = vweird.f32 %v1773
  %vm1794 = vweird.f32 %v1787
  %vm1795 = vmor %vm1793, %vm1794
  %v1796 = vsel %vm1795, %v1787, %v1792
  %v1797 = vrsqrt.pop %v1774
  %v1798 = vmul.f32 %v1797, %v1774
  %v1799 = vmul.f32 %v1798, %v1797
  %v1800 = vmul.f32 0.5, %v1799
  %v1801 = vsub.f32 1.5, %v1800
  %v1802 = vmul.f32 %v1797, %v1801
  %vm1803 = vweird.f32 %v1774
  %vm1804 = vweird.f32 %v1797
  %vm1805 = vmor %vm1803, %vm1804
  %v1806 = vsel %vm1805, %v1797, %v1802
  %v1807 = vrsqrt.pop %v1775
  %v1808 = vmul.f32 %v1807, %v1775
  %v1809 = vmul.f32 %v1808, %v1807
  %v1810 = vmul.f32 0.5, %v1809
  %v1811 = vsub.f32 1.5, %v1810
  %v1812 = vmul.f32 %v1807, %v1811
  %vm1813 = vweird.f32 %v1775
  %vm1814 = vweird.f32 %v1807
  %vm1815 = vmor %vm1813, %vm1814
  %v1816 = vsel %vm1815, %v1807, %v1812
  %v1817 = vrsqrt.pop %v1776
  %v1818 = vmul.f32 %v1817, %v1776
  %v1819 = vmul.f32 %v1818, %v1817
  %v1820 = vmul.f32 0.5, %v1819
  %v1821 = vsub.f32 1.5, %v1820
  %v1822 = vmul.f32 %v1817, %v1821
  %vm1823 = vweird.f32 %v1776
  %vm1824 = vweird.f32 %v1817
  %vm1825 = vmor %vm1823, %vm1824
  %v1826 = vsel %vm1825, %v1817, %v1822
  %v1827 = vmul.f32 %v1742, %v1786
  %v1828 = vmul.f32 %v1743, %v1796
  %v1829 = vmul.f32 %v1744, %v1806
  %v1830 = vmul.f32 %v1745, %v1816
  %v1831 = vmul.f32 %v1746, %v1826
  %v1833 = vperm.slane %v1720, 0
  %v1835 = vmul.f32 %v1827, %v1833
  %v1836 = vmul.f32 %v1828, %v1833
  %v1837 = vmul.f32 %v1829, %v1833
  %v1838 = vmul.f32 %v1830, %v1833
  %v1839 = vmul.f32 %v1831, %v1833
  %v1841 = vperm.slane %v1721, 0
  %v1843 = vadd.f32 %v1835, %v1841
  %v1844 = vadd.f32 %v1836, %v1841
  %v1845 = vadd.f32 %v1837, %v1841
  %v1846 = vadd.f32 %v1838, %v1841
  %v1847 = vadd.f32 %v1839, %v1841
  %v1848 = vld [vmem:[%s12] sm:$0xff]
  %v1849 = vld [vmem:[%s12 + $0x8] sm:$0xff]
  %v1850 = vld [vmem:[%s12 + $0x10] sm:$0xff]
  %v1851 = vld [vmem:[%s12 + $0x18] sm:$0xff]
  %v1852 = vld [vmem:[%s13] sm:$0x1]
  %v1854 = vperm.slane %v1852, 0
  %v1857 = vsel %vm158, %v1843, 0
  %v1860 = vsel %vm158, %v1844, 0
  %v1863 = vsel %vm158, %v1845, 0
  %v1866 = vsel %vm158, %v1846, 0
  %v1869 = vsel %vm158, %v1847, 0
  %1871 = vmatpush.msra.mxu0 0.0
  %1872 = vmatpush.msra.mxu0 0.0
  %1873 = vmatpush.msra.mxu0 0.0
  %1874 = vmatpush.msra.mxu0 0.0
  %1875 = vmatpush.msra.mxu0 0.0
  %1876 = vmatpush.msra.mxu0 0.0
  %1877 = vmatpush.msra.mxu0 0.0
  %1878 = vmatpush.msra.mxu0 0.0
  %1879 = vmatpush.msra.mxu0 0.0
  %1880 = vmatpush.msra.mxu0 0.0
  %1881 = vmatpush.msra.mxu0 0.0
  %1882 = vmatpush.msra.mxu0 0.0
  %1883 = vmatpush.msra.mxu0 %v1851
  %1884 = vmatpush.msra.mxu0 %v1850
  %1885 = vmatpush.msra.mxu0 %v1849
  %1886 = vmatpush.msra.mxu0 %v1848
  %1887 = vmatmul.f32.gmra.mxu0 %v1857
  %v1888 = vpop.f32.mrf.mxu0
  %v1889 = vadd.f32 %v1854, %v1888
  %1890 = vmatmul.f32.gmra.mxu0 %v1860
  %v1891 = vpop.f32.mrf.mxu0
  %v1892 = vadd.f32 %v1854, %v1891
  %1893 = vmatmul.f32.gmra.mxu0 %v1863
  %v1894 = vpop.f32.mrf.mxu0
  %v1895 = vadd.f32 %v1854, %v1894
  %1896 = vmatmul.f32.gmra.mxu0 %v1866
  %v1897 = vpop.f32.mrf.mxu0
  %v1898 = vadd.f32 %v1854, %v1897
  %1899 = vmatmul.f32.gmra.mxu0 %v1869
  %v1900 = vpop.f32.mrf.mxu0
  %v1901 = vadd.f32 %v1854, %v1900
  %1902 = vdwg.mxu0
  %v1903 = vmul.f32 %v1889, 0.5
  %v1904 = vmul.f32 %v1892, 0.5
  %v1905 = vmul.f32 %v1895, 0.5
  %v1906 = vmul.f32 %v1898, 0.5
  %v1907 = vmul.f32 %v1901, 0.5
  %v1908 = vmul.f32 %v1889, 0.044715
  %v1909 = vmul.f32 %v1892, 0.044715
  %v1910 = vmul.f32 %v1895, 0.044715
  %v1911 = vmul.f32 %v1898, 0.044715
  %v1912 = vmul.f32 %v1901, 0.044715
  %v1913 = vmul.f32 %v1908, %v1889
  %v1914 = vmul.f32 %v1909, %v1892
  %v1915 = vmul.f32 %v1910, %v1895
  %v1916 = vmul.f32 %v1911, %v1898
  %v1917 = vmul.f32 %v1912, %v1901
  %v1918 = vmul.f32 %v1913, %v1889
  %v1919 = vmul.f32 %v1914, %v1892
  %v1920 = vmul.f32 %v1915, %v1895
  %v1921 = vmul.f32 %v1916, %v1898
  %v1922 = vmul.f32 %v1917, %v1901
  %v1923 = vadd.f32 %v1889, %v1918
  %v1924 = vadd.f32 %v1892, %v1919
  %v1925 = vadd.f32 %v1895, %v1920
  %v1926 = vadd.f32 %v1898, %v1921
  %v1927 = vadd.f32 %v1901, %v1922
  %v1928 = vmul.f32 %v1923, 0.7978846
  %v1929 = vmul.f32 %v1924, 0.7978846
  %v1930 = vmul.f32 %v1925, 0.7978846
  %v1931 = vmul.f32 %v1926, 0.7978846
  %v1932 = vmul.f32 %v1927, 0.7978846
  %v1933 = vtanh.pop %v1928
  %v1934 = vtanh.pop %v1929
  %v1935 = vtanh.pop %v1930
  %v1936 = vtanh.pop %v1931
  %v1937 = vtanh.pop %v1932
  %v1938 = vadd.f32 %v1933, 1.0
  %v1939 = vadd.f32 %v1934, 1.0
  %v1940 = vadd.f32 %v1935, 1.0
  %v1941 = vadd.f32 %v1936, 1.0
  %v1942 = vadd.f32 %v1937, 1.0
  %v1943 = vmul.f32 %v1903, %v1938
  %v1944 = vmul.f32 %v1904, %v1939
  %v1945 = vmul.f32 %v1905, %v1940
  %v1946 = vmul.f32 %v1906, %v1941
  %v1947 = vmul.f32 %v1907, %v1942
  %v1948 = vld [vmem:[%s14] sm:$0xff]
  %v1949 = vld [vmem:[%s14 + $0x8] sm:$0xff]
  %v1950 = vld [vmem:[%s14 + $0x10] sm:$0xff]
  %v1951 = vld [vmem:[%s14 + $0x18] sm:$0xff]
  %v1952 = vld [vmem:[%s14 + $0x20] sm:$0xff]
  %v1953 = vld [vmem:[%s14 + $0x28] sm:$0xff]
  %v1954 = vld [vmem:[%s14 + $0x30] sm:$0xff]
  %v1955 = vld [vmem:[%s14 + $0x38] sm:$0xff]
  %vm1956 = vcmask 523264
  %v1958 = vsel %vm1956, %v1943, 0
  %v1961 = vsel %vm1956, %v1944, 0
  %v1964 = vsel %vm1956, %v1945, 0
  %v1967 = vsel %vm1956, %v1946, 0
  %v1970 = vsel %vm1956, %v1947, 0
  %1972 = vmatpush.msra.mxu0 0.0
  %1973 = vmatpush.msra.mxu0 0.0
  %1974 = vmatpush.msra.mxu0 0.0
  %1975 = vmatpush.msra.mxu0 0.0
  %1976 = vmatpush.msra.mxu0 0.0
  %1977 = vmatpush.msra.mxu0 0.0
  %1978 = vmatpush.msra.mxu0 0.0
  %1979 = vmatpush.msra.mxu0 0.0
  %1980 = vmatpush.msra.mxu0 %v1955
  %1981 = vmatpush.msra.mxu0 %v1954
  %1982 = vmatpush.msra.mxu0 %v1953
  %1983 = vmatpush.msra.mxu0 %v1952
  %1984 = vmatpush.msra.mxu0 %v1951
  %1985 = vmatpush.msra.mxu0 %v1950
  %1986 = vmatpush.msra.mxu0 %v1949
  %1987 = vmatpush.msra.mxu0 %v1948
  %1988 = vmatmul.f32.gmra.mxu0 %v1958
  %v1989 = vpop.f32.mrf.mxu0
  %v1990 = vadd.f32 0.0, %v1989
  %1991 = vmatmul.f32.gmra.mxu0 %v1961
  %v1992 = vpop.f32.mrf.mxu0
  %v1993 = vadd.f32 0.0, %v1992
  %1994 = vmatmul.f32.gmra.mxu0 %v1964
  %v1995 = vpop.f32.mrf.mxu0
  %v1996 = vadd.f32 0.0, %v1995
  %1997 = vmatmul.f32.gmra.mxu0 %v1967
  %v1998 = vpop.f32.mrf.mxu0
  %v1999 = vadd.f32 0.0, %v1998
  %2000 = vmatmul.f32.gmra.mxu0 %v1970
  %v2001 = vpop.f32.mrf.mxu0
  %v2002 = vadd.f32 0.0, %v2001
  %2003 = vdwg.mxu0
  %v2004 = vadd.f32 %v1715, %v1990
  %v2005 = vadd.f32 %v1716, %v1993
  %v2006 = vadd.f32 %v1717, %v1996
  %v2007 = vadd.f32 %v1718, %v1999
  %v2008 = vadd.f32 %v1719, %v2002
  %v2009 = vld [vmem:[%s15] sm:$0x1]
  %v2011 = vperm.slane %v2009, 0
  %v2013 = vadd.f32 %v2004, %v2011
  %v2014 = vadd.f32 %v2005, %v2011
  %v2015 = vadd.f32 %v2006, %v2011
  %v2016 = vadd.f32 %v2007, %v2011
  %v2017 = vadd.f32 %v2008, %v2011
  %s2018 = scalar_lea.vmem %s4, 1
  %v2019 = vld [vmem:[%s2018] sm:$0x1]
  %s2020 = scalar_lea.vmem %s5, 1
  %v2021 = vld [vmem:[%s2020] sm:$0x1]
  %v2022 = vsel %vm158, %v2013, 0.0
  %2023 = vadd.xlane.f32.xlu0 %v2022
  %v2024 = vpop.xlane.xlu0 %2023
  %v2025 = vsel %vm158, %v2014, 0.0
  %2026 = vadd.xlane.f32.xlu0 %v2025
  %v2027 = vpop.xlane.xlu0 %2026
  %v2028 = vsel %vm158, %v2015, 0.0
  %2029 = vadd.xlane.f32.xlu0 %v2028
  %v2030 = vpop.xlane.xlu0 %2029
  %v2031 = vsel %vm158, %v2016, 0.0
  %2032 = vadd.xlane.f32.xlu0 %v2031
  %v2033 = vpop.xlane.xlu0 %2032
  %v2034 = vsel %vm171, %v2017, 0.0
  %2035 = vadd.xlane.f32.xlu0 %v2034
  %v2036 = vpop.xlane.xlu0 %2035
  %v2037 = vmul.f32 %v2024, %v181
  %v2038 = vmul.f32 %v2027, %v181
  %v2039 = vmul.f32 %v2030, %v181
  %v2040 = vmul.f32 %v2033, %v181
  %v2041 = vmul.f32 %v2036, %v181
  %v2042 = vsub.f32 %v2013, %v2037
  %v2043 = vsub.f32 %v2014, %v2038
  %v2044 = vsub.f32 %v2015, %v2039
  %v2045 = vsub.f32 %v2016, %v2040
  %v2046 = vsub.f32 %v2017, %v2041
  %v2047 = vmul.f32 %v2042, %v2042
  %v2048 = vmul.f32 %v2043, %v2043
  %v2049 = vmul.f32 %v2044, %v2044
  %v2050 = vmul.f32 %v2045, %v2045
  %v2051 = vmul.f32 %v2046, %v2046
  %v2052 = vsel %vm158, %v2047, 0.0
  %2053 = vadd.xlane.f32.xlu0 %v2052
  %v2054 = vpop.xlane.xlu0 %2053
  %v2055 = vsel %vm158, %v2048, 0.0
  %2056 = vadd.xlane.f32.xlu0 %v2055
  %v2057 = vpop.xlane.xlu0 %2056
  %v2058 = vsel %vm158, %v2049, 0.0
  %2059 = vadd.xlane.f32.xlu0 %v2058
  %v2060 = vpop.xlane.xlu0 %2059
  %v2061 = vsel %vm158, %v2050, 0.0
  %2062 = vadd.xlane.f32.xlu0 %v2061
  %v2063 = vpop.xlane.xlu0 %2062
  %v2064 = vsel %vm171, %v2051, 0.0
  %2065 = vadd.xlane.f32.xlu0 %v2064
  %v2066 = vpop.xlane.xlu0 %2065
  %v2067 = vmul.f32 %v2054, %v181
  %v2068 = vmul.f32 %v2057, %v181
  %v2069 = vmul.f32 %v2060, %v181
  %v2070 = vmul.f32 %v2063, %v181
  %v2071 = vmul.f32 %v2066, %v181
  %v2072 = vadd.f32 %v2067, 1e-12
  %v2073 = vadd.f32 %v2068, 1e-12
  %v2074 = vadd.f32 %v2069, 1e-12
  %v2075 = vadd.f32 %v2070, 1e-12
  %v2076 = vadd.f32 %v2071, 1e-12
  %v2077 = vrsqrt.pop %v2072
  %v2078 = vmul.f32 %v2077, %v2072
  %v2079 = vmul.f32 %v2078, %v2077
  %v2080 = vmul.f32 0.5, %v2079
  %v2081 = vsub.f32 1.5, %v2080
  %v2082 = vmul.f32 %v2077, %v2081
  %vm2083 = vweird.f32 %v2072
  %vm2084 = vweird.f32 %v2077
  %vm2085 = vmor %vm2083, %vm2084
  %v2086 = vsel %vm2085, %v2077, %v2082
  %v2087 = vrsqrt.pop %v2073
  %v2088 = vmul.f32 %v2087, %v2073
  %v2089 = vmul.f32 %v2088, %v2087
  %v2090 = vmul.f32 0.5, %v2089
  %v2091 = vsub.f32 1.5, %v2090
  %v2092 = vmul.f32 %v2087, %v2091
  %vm2093 = vweird.f32 %v2073
  %vm2094 = vweird.f32 %v2087
  %vm2095 = vmor %vm2093, %vm2094
  %v2096 = vsel %vm2095, %v2087, %v2092
  %v2097 = vrsqrt.pop %v2074
  %v2098 = vmul.f32 %v2097, %v2074
  %v2099 = vmul.f32 %v2098, %v2097
  %v2100 = vmul.f32 0.5, %v2099
  %v2101 = vsub.f32 1.5, %v2100
  %v2102 = vmul.f32 %v2097, %v2101
  %vm2103 = vweird.f32 %v2074
  %vm2104 = vweird.f32 %v2097
  %vm2105 = vmor %vm2103, %vm2104
  %v2106 = vsel %vm2105, %v2097, %v2102
  %v2107 = vrsqrt.pop %v2075
  %v2108 = vmul.f32 %v2107, %v2075
  %v2109 = vmul.f32 %v2108, %v2107
  %v2110 = vmul.f32 0.5, %v2109
  %v2111 = vsub.f32 1.5, %v2110
  %v2112 = vmul.f32 %v2107, %v2111
  %vm2113 = vweird.f32 %v2075
  %vm2114 = vweird.f32 %v2107
  %vm2115 = vmor %vm2113, %vm2114
  %v2116 = vsel %vm2115, %v2107, %v2112
  %v2117 = vrsqrt.pop %v2076
  %v2118 = vmul.f32 %v2117, %v2076
  %v2119 = vmul.f32 %v2118, %v2117
  %v2120 = vmul.f32 0.5, %v2119
  %v2121 = vsub.f32 1.5, %v2120
  %v2122 = vmul.f32 %v2117, %v2121
  %vm2123 = vweird.f32 %v2076
  %vm2124 = vweird.f32 %v2117
  %vm2125 = vmor %vm2123, %vm2124
  %v2126 = vsel %vm2125, %v2117, %v2122
  %v2127 = vmul.f32 %v2042, %v2086
  %v2128 = vmul.f32 %v2043, %v2096
  %v2129 = vmul.f32 %v2044, %v2106
  %v2130 = vmul.f32 %v2045, %v2116
  %v2131 = vmul.f32 %v2046, %v2126
  %v2133 = vperm.slane %v2019, 0
  %v2135 = vmul.f32 %v2127, %v2133
  %v2136 = vmul.f32 %v2128, %v2133
  %v2137 = vmul.f32 %v2129, %v2133
  %v2138 = vmul.f32 %v2130, %v2133
  %v2139 = vmul.f32 %v2131, %v2133
  %v2141 = vperm.slane %v2021, 0
  %v2143 = vadd.f32 %v2135, %v2141
  %v2144 = vadd.f32 %v2136, %v2141
  %v2145 = vadd.f32 %v2137, %v2141
  %v2146 = vadd.f32 %v2138, %v2141
  %v2147 = vadd.f32 %v2139, %v2141
  %s2148 = scalar_lea.vmem %s6, 32
  %v2149 = vld [vmem:[%s2148] sm:$0xff]
  %v2150 = vld [vmem:[%s2148 + $0x8] sm:$0xff]
  %v2151 = vld [vmem:[%s2148 + $0x10] sm:$0xff]
  %v2152 = vld [vmem:[%s2148 + $0x18] sm:$0xff]
  %s2153 = scalar_lea.vmem %s7, 1
  %v2154 = vld [vmem:[%s2153] sm:$0x1]
  %v2156 = vperm.slane %v2154, 0
  %v2159 = vsel %vm158, %v2143, 0
  %v2162 = vsel %vm158, %v2144, 0
  %v2165 = vsel %vm158, %v2145, 0
  %v2168 = vsel %vm158, %v2146, 0
  %v2171 = vsel %vm158, %v2147, 0
  %2173 = vmatpush.msra.mxu0 0.0
  %2174 = vmatpush.msra.mxu0 0.0
  %2175 = vmatpush.msra.mxu0 0.0
  %2176 = vmatpush.msra.mxu0 0.0
  %2177 = vmatpush.msra.mxu0 0.0
  %2178 = vmatpush.msra.mxu0 0.0
  %2179 = vmatpush.msra.mxu0 0.0
  %2180 = vmatpush.msra.mxu0 0.0
  %2181 = vmatpush.msra.mxu0 0.0
  %2182 = vmatpush.msra.mxu0 0.0
  %2183 = vmatpush.msra.mxu0 0.0
  %2184 = vmatpush.msra.mxu0 0.0
  %2185 = vmatpush.msra.mxu0 %v2152
  %2186 = vmatpush.msra.mxu0 %v2151
  %2187 = vmatpush.msra.mxu0 %v2150
  %2188 = vmatpush.msra.mxu0 %v2149
  %2189 = vmatmul.f32.gmra.mxu0 %v2159
  %v2190 = vpop.f32.mrf.mxu0
  %v2191 = vadd.f32 %v2156, %v2190
  %2192 = vmatmul.f32.gmra.mxu0 %v2162
  %v2193 = vpop.f32.mrf.mxu0
  %v2194 = vadd.f32 %v2156, %v2193
  %2195 = vmatmul.f32.gmra.mxu0 %v2165
  %v2196 = vpop.f32.mrf.mxu0
  %v2197 = vadd.f32 %v2156, %v2196
  %2198 = vmatmul.f32.gmra.mxu0 %v2168
  %v2199 = vpop.f32.mrf.mxu0
  %v2200 = vadd.f32 %v2156, %v2199
  %2201 = vmatmul.f32.gmra.mxu0 %v2171
  %v2202 = vpop.f32.mrf.mxu0
  %v2203 = vadd.f32 %v2156, %v2202
  %2204 = vdwg.mxu0
  %s2205 = scalar_lea.vmem %s8, 32
  %v2206 = vld [vmem:[%s2205] sm:$0xff]
  %v2207 = vld [vmem:[%s2205 + $0x8] sm:$0xff]
  %v2208 = vld [vmem:[%s2205 + $0x10] sm:$0xff]
  %v2209 = vld [vmem:[%s2205 + $0x18] sm:$0xff]
  %2213 = vrot.lane.b32.xlu0 %v2191, 96
  %v2214 = vpop.permute.xlu0 %2213
  %2215 = vrot.lane.b32.xlu0 %v2194, 96
  %v2216 = vpop.permute.xlu0 %2215
  %2217 = vrot.lane.b32.xlu0 %v2197, 96
  %v2218 = vpop.permute.xlu0 %2217
  %v2219 = vsel %vm361, %v2191, 0
  %v2221 = vsel %vm361, %v2194, 0
  %v2223 = vsel %vm361, %v2197, 0
  %v2225 = vsel %vm361, %v2214, 0
  %v2227 = vsel %vm361, %v2216, 0
  %v2229 = vsel %vm361, %v2218, 0
  %2231 = vmatpush.xpose.msra.mxu0 0.0
  %2232 = vmatpush.xpose.msra.mxu0 0.0
  %2233 = vmatpush.xpose.msra.mxu0 0.0
  %2234 = vmatpush.xpose.msra.mxu0 0.0
  %2235 = vmatpush.xpose.msra.mxu0 0.0
  %2236 = vmatpush.xpose.msra.mxu0 0.0
  %2237 = vmatpush.xpose.msra.mxu0 0.0
  %2238 = vmatpush.xpose.msra.mxu0 0.0
  %2239 = vmatpush.xpose.msra.mxu0 0.0
  %2240 = vmatpush.xpose.msra.mxu0 0.0
  %2241 = vmatpush.xpose.msra.mxu0 0.0
  %2242 = vmatpush.xpose.msra.mxu0 0.0
  %2243 = vmatpush.xpose.msra.mxu0 0.0
  %2244 = vmatpush.xpose.msra.mxu0 %v2229
  %2245 = vmatpush.xpose.msra.mxu0 %v2227
  %2246 = vmatpush.xpose.msra.mxu0 %v2225
  %2247 = vmatmul.f32.gmra.mxu0 %v2219
  %v2248 = vpop.f32.mrf.mxu0
  %v2249 = vadd.f32 0.0, %v2248
  %2250 = vmatmul.f32.gmra.mxu0 %v2221
  %v2251 = vpop.f32.mrf.mxu0
  %v2252 = vadd.f32 0.0, %v2251
  %2253 = vmatmul.f32.gmra.mxu0 %v2223
  %v2254 = vpop.f32.mrf.mxu0
  %v2255 = vadd.f32 0.0, %v2254
  %2256 = vdwg.mxu0
  %v2257 = vmul.f32 %v2249, 0.35355338
  %v2258 = vmul.f32 %v2252, 0.35355338
  %v2259 = vmul.f32 %v2255, 0.35355338
  %v2260 = vsel %vm403, %v2257, -inf
  %2261 = vmax.xlane.f32.xlu0 %v2260
  %v2262 = vpop.xlane.xlu0 %2261
  %v2263 = vsel %vm403, %v2258, -inf
  %2264 = vmax.xlane.f32.xlu0 %v2263
  %v2265 = vpop.xlane.xlu0 %2264
  %v2266 = vsel %vm410, %v2259, -inf
  %2267 = vmax.xlane.f32.xlu0 %v2266
  %v2268 = vpop.xlane.xlu0 %2267
  %v2269 = vsub.f32 %v2257, %v2262
  %v2270 = vsub.f32 %v2258, %v2265
  %v2271 = vsub.f32 %v2259, %v2268
  %v2272 = vmul.f32 %v2269, 1.442695
  %v2273 = vpow.pop %v2272
  %v2274 = vmul.f32 %v2270, 1.442695
  %v2275 = vpow.pop %v2274
  %v2276 = vmul.f32 %v2271, 1.442695
  %v2277 = vpow.pop %v2276
  %v2278 = vsel %vm403, %v2273, 0.0
  %2279 = vadd.xlane.f32.xlu0 %v2278
  %v2280 = vpop.xlane.xlu0 %2279
  %v2281 = vsel %vm403, %v2275, 0.0
  %2282 = vadd.xlane.f32.xlu0 %v2281
  %v2283 = vpop.xlane.xlu0 %2282
  %v2284 = vsel %vm410, %v2277, 0.0
  %2285 = vadd.xlane.f32.xlu0 %v2284
  %v2286 = vpop.xlane.xlu0 %2285
  %v2287 = vrcp.pop %v2280
  %v2288 = vrcp.pop %v2283
  %v2289 = vrcp.pop %v2286
  %v2290 = vmul.f32 %v2273, %v2287
  %v2291 = vmul.f32 %v2275, %v2288
  %v2292 = vmul.f32 %v2277, %v2289
  %2293 = vrot.lane.b32.xlu0 %v2191, 64
  %v2294 = vpop.permute.xlu0 %2293
  %2295 = vrot.lane.b32.xlu0 %v2194, 64
  %v2296 = vpop.permute.xlu0 %2295
  %2297 = vrot.lane.b32.xlu0 %v2197, 64
  %v2298 = vpop.permute.xlu0 %2297
  %v2302 = vsel %vm403, %v2290, 0
  %v2305 = vsel %vm403, %v2291, 0
  %v2308 = vsel %vm403, %v2292, 0
  %v2310 = vsel %vm134, %v2298, 0
  %2312 = vmatpush.msra.mxu0 0.0
  %2313 = vmatpush.msra.mxu0 0.0
  %2314 = vmatpush.msra.mxu0 0.0
  %2315 = vmatpush.msra.mxu0 0.0
  %2316 = vmatpush.msra.mxu0 0.0
  %2317 = vmatpush.msra.mxu0 0.0
  %2318 = vmatpush.msra.mxu0 0.0
  %2319 = vmatpush.msra.mxu0 0.0
  %2320 = vmatpush.msra.mxu0 0.0
  %2321 = vmatpush.msra.mxu0 0.0
  %2322 = vmatpush.msra.mxu0 0.0
  %2323 = vmatpush.msra.mxu0 0.0
  %2324 = vmatpush.msra.mxu0 0.0
  %2325 = vmatpush.msra.mxu0 %v2310
  %2326 = vmatpush.msra.mxu0 %v2296
  %2327 = vmatpush.msra.mxu0 %v2294
  %2328 = vmatmul.f32.gmra.mxu0 %v2302
  %v2329 = vpop.f32.mrf.mxu0
  %v2330 = vadd.f32 0.0, %v2329
  %2331 = vmatmul.f32.gmra.mxu0 %v2305
  %v2332 = vpop.f32.mrf.mxu0
  %v2333 = vadd.f32 0.0, %v2332
  %2334 = vmatmul.f32.gmra.mxu0 %v2308
  %v2335 = vpop.f32.mrf.mxu0
  %v2336 = vadd.f32 0.0, %v2335
  %2337 = vdwg.mxu0
  %2338 = vrot.lane.b32.xlu0 %v2191, 120
  %v2339 = vpop.permute.xlu0 %2338
  %2340 = vrot.lane.b32.xlu0 %v2194, 120
  %v2341 = vpop.permute.xlu0 %2340
  %2342 = vrot.lane.b32.xlu0 %v2197, 120
  %v2343 = vpop.permute.xlu0 %2342
  %2344 = vrot.lane.b32.xlu0 %v2191, 88
  %v2345 = vpop.permute.xlu0 %2344
  %2346 = vrot.lane.b32.xlu0 %v2194, 88
  %v2347 = vpop.permute.xlu0 %2346
  %2348 = vrot.lane.b32.xlu0 %v2197, 88
  %v2349 = vpop.permute.xlu0 %2348
  %v2350 = vsel %vm361, %v2339, 0
  %v2352 = vsel %vm361, %v2341, 0
  %v2354 = vsel %vm361, %v2343, 0
  %v2356 = vsel %vm361, %v2345, 0
  %v2358 = vsel %vm361, %v2347, 0
  %v2360 = vsel %vm361, %v2349, 0
  %2362 = vmatpush.xpose.msra.mxu0 0.0
  %2363 = vmatpush.xpose.msra.mxu0 0.0
  %2364 = vmatpush.xpose.msra.mxu0 0.0
  %2365 = vmatpush.xpose.msra.mxu0 0.0
  %2366 = vmatpush.xpose.msra.mxu0 0.0
  %2367 = vmatpush.xpose.msra.mxu0 0.0
  %2368 = vmatpush.xpose.msra.mxu0 0.0
  %2369 = vmatpush.xpose.msra.mxu0 0.0
  %2370 = vmatpush.xpose.msra.mxu0 0.0
  %2371 = vmatpush.xpose.msra.mxu0 0.0
  %2372 = vmatpush.xpose.msra.mxu0 0.0
  %2373 = vmatpush.xpose.msra.mxu0 0.0
  %2374 = vmatpush.xpose.msra.mxu0 0.0
  %2375 = vmatpush.xpose.msra.mxu0 %v2360
  %2376 = vmatpush.xpose.msra.mxu0 %v2358
  %2377 = vmatpush.xpose.msra.mxu0 %v2356
  %2378 = vmatmul.f32.gmra.mxu0 %v2350
  %v2379 = vpop.f32.mrf.mxu0
  %v2380 = vadd.f32 0.0, %v2379
  %2381 = vmatmul.f32.gmra.mxu0 %v2352
  %v2382 = vpop.f32.mrf.mxu0
  %v2383 = vadd.f32 0.0, %v2382
  %2384 = vmatmul.f32.gmra.mxu0 %v2354
  %v2385 = vpop.f32.mrf.mxu0
  %v2386 = vadd.f32 0.0, %v2385
  %2387 = vdwg.mxu0
  %v2388 = vmul.f32 %v2380, 0.35355338
  %v2389 = vmul.f32 %v2383, 0.35355338
  %v2390 = vmul.f32 %v2386, 0.35355338
  %v2391 = vsel %vm403, %v2388, -inf
  %2392 = vmax.xlane.f32.xlu0 %v2391
  %v2393 = vpop.xlane.xlu0 %2392
  %v2394 = vsel %vm403, %v2389, -inf
  %2395 = vmax.xlane.f32.xlu0 %v2394
  %v2396 = vpop.xlane.xlu0 %2395
  %v2397 = vsel %vm410, %v2390, -inf
  %2398 = vmax.xlane.f32.xlu0 %v2397
  %v2399 = vpop.xlane.xlu0 %2398
  %v2400 = vsub.f32 %v2388, %v2393
  %v2401 = vsub.f32 %v2389, %v2396
  %v2402 = vsub.f32 %v2390, %v2399
  %v2403 = vmul.f32 %v2400, 1.442695
  %v2404 = vpow.pop %v2403
  %v2405 = vmul.f32 %v2401, 1.442695
  %v2406 = vpow.pop %v2405
  %v2407 = vmul.f32 %v2402, 1.442695
  %v2408 = vpow.pop %v2407
  %v2409 = vsel %vm403, %v2404, 0.0
  %2410 = vadd.xlane.f32.xlu0 %v2409
  %v2411 = vpop.xlane.xlu0 %2410
  %v2412 = vsel %vm403, %v2406, 0.0
  %2413 = vadd.xlane.f32.xlu0 %v2412
  %v2414 = vpop.xlane.xlu0 %2413
  %v2415 = vsel %vm410, %v2408, 0.0
  %2416 = vadd.xlane.f32.xlu0 %v2415
  %v2417 = vpop.xlane.xlu0 %2416
  %v2418 = vrcp.pop %v2411
  %v2419 = vrcp.pop %v2414
  %v2420 = vrcp.pop %v2417
  %v2421 = vmul.f32 %v2404, %v2418
  %v2422 = vmul.f32 %v2406, %v2419
  %v2423 = vmul.f32 %v2408, %v2420
  %2424 = vrot.lane.b32.xlu0 %v2191, 56
  %v2425 = vpop.permute.xlu0 %2424
  %2426 = vrot.lane.b32.xlu0 %v2194, 56
  %v2427 = vpop.permute.xlu0 %2426
  %2428 = vrot.lane.b32.xlu0 %v2197, 56
  %v2429 = vpop.permute.xlu0 %2428
  %v2433 = vsel %vm403, %v2421, 0
  %v2436 = vsel %vm403, %v2422, 0
  %v2439 = vsel %vm403, %v2423, 0
  %v2441 = vsel %vm134, %v2429, 0
  %2443 = vmatpush.msra.mxu0 0.0
  %2444 = vmatpush.msra.mxu0 0.0
  %2445 = vmatpush.msra.mxu0 0.0
  %2446 = vmatpush.msra.mxu0 0.0
  %2447 = vmatpush.msra.mxu0 0.0
  %2448 = vmatpush.msra.mxu0 0.0
  %2449 = vmatpush.msra.mxu0 0.0
  %2450 = vmatpush.msra.mxu0 0.0
  %2451 = vmatpush.msra.mxu0 0.0
  %2452 = vmatpush.msra.mxu0 0.0
  %2453 = vmatpush.msra.mxu0 0.0
  %2454 = vmatpush.msra.mxu0 0.0
  %2455 = vmatpush.msra.mxu0 0.0
  %2456 = vmatpush.msra.mxu0 %v2441
  %2457 = vmatpush.msra.mxu0 %v2427
  %2458 = vmatpush.msra.mxu0 %v2425
  %2459 = vmatmul.f32.gmra.mxu0 %v2433
  %v2460 = vpop.f32.mrf.mxu0
  %v2461 = vadd.f32 0.0, %v2460
  %2462 = vmatmul.f32.gmra.mxu0 %v2436
  %v2463 = vpop.f32.mrf.mxu0
  %v2464 = vadd.f32 0.0, %v2463
  %2465 = vmatmul.f32.gmra.mxu0 %v2439
  %v2466 = vpop.f32.mrf.mxu0
  %v2467 = vadd.f32 0.0, %v2466
  %2468 = vdwg.mxu0
  %v2470 = vsel %vm361, %v2461, 0
  %v2473 = vsel %vm361, %v2464, 0
  %v2476 = vsel %vm361, %v2467, 0
  %2478 = vmatpush.msra.mxu0 0.0
  %2479 = vmatpush.msra.mxu0 0.0
  %2480 = vmatpush.msra.mxu0 0.0
  %2481 = vmatpush.msra.mxu0 0.0
  %2482 = vmatpush.msra.mxu0 0.0
  %2483 = vmatpush.msra.mxu0 0.0
  %2484 = vmatpush.msra.mxu0 0.0
  %2485 = vmatpush.msra.mxu0 0.0
  %2486 = vmatpush.msra.mxu0 0.0
  %2487 = vmatpush.msra.mxu0 0.0
  %2488 = vmatpush.msra.mxu0 0.0
  %2489 = vmatpush.msra.mxu0 0.0
  %2490 = vmatpush.msra.mxu0 0.0
  %2491 = vmatpush.msra.mxu0 0.0
  %2492 = vmatpush.msra.mxu0 0.0
  %2493 = vmatpush.msra.mxu0 %v2207
  %2494 = vmatmul.f32.gmra.mxu0 %v2470
  %v2495 = vpop.f32.mrf.mxu0
  %v2496 = vadd.f32 0.0, %v2495
  %2497 = vmatmul.f32.gmra.mxu0 %v2473
  %v2498 = vpop.f32.mrf.mxu0
  %v2499 = vadd.f32 0.0, %v2498
  %2500 = vmatmul.f32.gmra.mxu0 %v2476
  %v2501 = vpop.f32.mrf.mxu0
  %v2502 = vadd.f32 0.0, %v2501
  %2503 = vdwg.mxu0
  %v2505 = vsel %vm361, %v2330, 0
  %v2508 = vsel %vm361, %v2333, 0
  %v2511 = vsel %vm361, %v2336, 0
  %2513 = vmatpush.msra.mxu0 0.0
  %2514 = vmatpush.msra.mxu0 0.0
  %2515 = vmatpush.msra.mxu0 0.0
  %2516 = vmatpush.msra.mxu0 0.0
  %2517 = vmatpush.msra.mxu0 0.0
  %2518 = vmatpush.msra.mxu0 0.0
  %2519 = vmatpush.msra.mxu0 0.0
  %2520 = vmatpush.msra.mxu0 0.0
  %2521 = vmatpush.msra.mxu0 0.0
  %2522 = vmatpush.msra.mxu0 0.0
  %2523 = vmatpush.msra.mxu0 0.0
  %2524 = vmatpush.msra.mxu0 0.0
  %2525 = vmatpush.msra.mxu0 0.0
  %2526 = vmatpush.msra.mxu0 0.0
  %2527 = vmatpush.msra.mxu0 0.0
  %2528 = vmatpush.msra.mxu0 %v2206
  %2529 = vmatmul.f32.gmra.mxu0 %v2505
  %v2530 = vpop.f32.mrf.mxu0
  %v2531 = vadd.f32 %v2496, %v2530
  %2532 = vmatmul.f32.gmra.mxu0 %v2508
  %v2533 = vpop.f32.mrf.mxu0
  %v2534 = vadd.f32 %v2499, %v2533
  %2535 = vmatmul.f32.gmra.mxu0 %v2511
  %v2536 = vpop.f32.mrf.mxu0
  %v2537 = vadd.f32 %v2502, %v2536
  %2538 = vdwg.mxu0
  %2539 = vrot.lane.b32.xlu0 %v2191, 112
  %v2540 = vpop.permute.xlu0 %2539
  %2541 = vrot.lane.b32.xlu0 %v2194, 112
  %v2542 = vpop.permute.xlu0 %2541
  %2543 = vrot.lane.b32.xlu0 %v2197, 112
  %v2544 = vpop.permute.xlu0 %2543
  %2545 = vrot.lane.b32.xlu0 %v2191, 80
  %v2546 = vpop.permute.xlu0 %2545
  %2547 = vrot.lane.b32.xlu0 %v2194, 80
  %v2548 = vpop.permute.xlu0 %2547
  %2549 = vrot.lane.b32.xlu0 %v2197, 80
  %v2550 = vpop.permute.xlu0 %2549
  %v2551 = vsel %vm361, %v2540, 0
  %v2553 = vsel %vm361, %v2542, 0
  %v2555 = vsel %vm361, %v2544, 0
  %v2557 = vsel %vm361, %v2546, 0
  %v2559 = vsel %vm361, %v2548, 0
  %v2561 = vsel %vm361, %v2550, 0
  %2563 = vmatpush.xpose.msra.mxu0 0.0
  %2564 = vmatpush.xpose.msra.mxu0 0.0
  %2565 = vmatpush.xpose.msra.mxu0 0.0
  %2566 = vmatpush.xpose.msra.mxu0 0.0
  %2567 = vmatpush.xpose.msra.mxu0 0.0
  %2568 = vmatpush.xpose.msra.mxu0 0.0
  %2569 = vmatpush.xpose.msra.mxu0 0.0
  %2570 = vmatpush.xpose.msra.mxu0 0.0
  %2571 = vmatpush.xpose.msra.mxu0 0.0
  %2572 = vmatpush.xpose.msra.mxu0 0.0
  %2573 = vmatpush.xpose.msra.mxu0 0.0
  %2574 = vmatpush.xpose.msra.mxu0 0.0
  %2575 = vmatpush.xpose.msra.mxu0 0.0
  %2576 = vmatpush.xpose.msra.mxu0 %v2561
  %2577 = vmatpush.xpose.msra.mxu0 %v2559
  %2578 = vmatpush.xpose.msra.mxu0 %v2557
  %2579 = vmatmul.f32.gmra.mxu0 %v2551
  %v2580 = vpop.f32.mrf.mxu0
  %v2581 = vadd.f32 0.0, %v2580
  %2582 = vmatmul.f32.gmra.mxu0 %v2553
  %v2583 = vpop.f32.mrf.mxu0
  %v2584 = vadd.f32 0.0, %v2583
  %2585 = vmatmul.f32.gmra.mxu0 %v2555
  %v2586 = vpop.f32.mrf.mxu0
  %v2587 = vadd.f32 0.0, %v2586
  %2588 = vdwg.mxu0
  %v2589 = vmul.f32 %v2581, 0.35355338
  %v2590 = vmul.f32 %v2584, 0.35355338
  %v2591 = vmul.f32 %v2587, 0.35355338
  %v2592 = vsel %vm403, %v2589, -inf
  %2593 = vmax.xlane.f32.xlu0 %v2592
  %v2594 = vpop.xlane.xlu0 %2593
  %v2595 = vsel %vm403, %v2590, -inf
  %2596 = vmax.xlane.f32.xlu0 %v2595
  %v2597 = vpop.xlane.xlu0 %2596
  %v2598 = vsel %vm410, %v2591, -inf
  %2599 = vmax.xlane.f32.xlu0 %v2598
  %v2600 = vpop.xlane.xlu0 %2599
  %v2601 = vsub.f32 %v2589, %v2594
  %v2602 = vsub.f32 %v2590, %v2597
  %v2603 = vsub.f32 %v2591, %v2600
  %v2604 = vmul.f32 %v2601, 1.442695
  %v2605 = vpow.pop %v2604
  %v2606 = vmul.f32 %v2602, 1.442695
  %v2607 = vpow.pop %v2606
  %v2608 = vmul.f32 %v2603, 1.442695
  %v2609 = vpow.pop %v2608
  %v2610 = vsel %vm403, %v2605, 0.0
  %2611 = vadd.xlane.f32.xlu0 %v2610
  %v2612 = vpop.xlane.xlu0 %2611
  %v2613 = vsel %vm403, %v2607, 0.0
  %2614 = vadd.xlane.f32.xlu0 %v2613
  %v2615 = vpop.xlane.xlu0 %2614
  %v2616 = vsel %vm410, %v2609, 0.0
  %2617 = vadd.xlane.f32.xlu0 %v2616
  %v2618 = vpop.xlane.xlu0 %2617
  %v2619 = vrcp.pop %v2612
  %v2620 = vrcp.pop %v2615
  %v2621 = vrcp.pop %v2618
  %v2622 = vmul.f32 %v2605, %v2619
  %v2623 = vmul.f32 %v2607, %v2620
  %v2624 = vmul.f32 %v2609, %v2621
  %2625 = vrot.lane.b32.xlu0 %v2191, 48
  %v2626 = vpop.permute.xlu0 %2625
  %2627 = vrot.lane.b32.xlu0 %v2194, 48
  %v2628 = vpop.permute.xlu0 %2627
  %2629 = vrot.lane.b32.xlu0 %v2197, 48
  %v2630 = vpop.permute.xlu0 %2629
  %v2634 = vsel %vm403, %v2622, 0
  %v2637 = vsel %vm403, %v2623, 0
  %v2640 = vsel %vm403, %v2624, 0
  %v2642 = vsel %vm134, %v2630, 0
  %2644 = vmatpush.msra.mxu0 0.0
  %2645 = vmatpush.msra.mxu0 0.0
  %2646 = vmatpush.msra.mxu0 0.0
  %2647 = vmatpush.msra.mxu0 0.0
  %2648 = vmatpush.msra.mxu0 0.0
  %2649 = vmatpush.msra.mxu0 0.0
  %2650 = vmatpush.msra.mxu0 0.0
  %2651 = vmatpush.msra.mxu0 0.0
  %2652 = vmatpush.msra.mxu0 0.0
  %2653 = vmatpush.msra.mxu0 0.0
  %2654 = vmatpush.msra.mxu0 0.0
  %2655 = vmatpush.msra.mxu0 0.0
  %2656 = vmatpush.msra.mxu0 0.0
  %2657 = vmatpush.msra.mxu0 %v2642
  %2658 = vmatpush.msra.mxu0 %v2628
  %2659 = vmatpush.msra.mxu0 %v2626
  %2660 = vmatmul.f32.gmra.mxu0 %v2634
  %v2661 = vpop.f32.mrf.mxu0
  %v2662 = vadd.f32 0.0, %v2661
  %2663 = vmatmul.f32.gmra.mxu0 %v2637
  %v2664 = vpop.f32.mrf.mxu0
  %v2665 = vadd.f32 0.0, %v2664
  %2666 = vmatmul.f32.gmra.mxu0 %v2640
  %v2667 = vpop.f32.mrf.mxu0
  %v2668 = vadd.f32 0.0, %v2667
  %2669 = vdwg.mxu0
  %v2671 = vsel %vm361, %v2662, 0
  %v2674 = vsel %vm361, %v2665, 0
  %v2677 = vsel %vm361, %v2668, 0
  %2679 = vmatpush.msra.mxu0 0.0
  %2680 = vmatpush.msra.mxu0 0.0
  %2681 = vmatpush.msra.mxu0 0.0
  %2682 = vmatpush.msra.mxu0 0.0
  %2683 = vmatpush.msra.mxu0 0.0
  %2684 = vmatpush.msra.mxu0 0.0
  %2685 = vmatpush.msra.mxu0 0.0
  %2686 = vmatpush.msra.mxu0 0.0
  %2687 = vmatpush.msra.mxu0 0.0
  %2688 = vmatpush.msra.mxu0 0.0
  %2689 = vmatpush.msra.mxu0 0.0
  %2690 = vmatpush.msra.mxu0 0.0
  %2691 = vmatpush.msra.mxu0 0.0
  %2692 = vmatpush.msra.mxu0 0.0
  %2693 = vmatpush.msra.mxu0 0.0
  %2694 = vmatpush.msra.mxu0 %v2208
  %2695 = vmatmul.f32.gmra.mxu0 %v2671
  %v2696 = vpop.f32.mrf.mxu0
  %v2697 = vadd.f32 0.0, %v2696
  %2698 = vmatmul.f32.gmra.mxu0 %v2674
  %v2699 = vpop.f32.mrf.mxu0
  %v2700 = vadd.f32 0.0, %v2699
  %2701 = vmatmul.f32.gmra.mxu0 %v2677
  %v2702 = vpop.f32.mrf.mxu0
  %v2703 = vadd.f32 0.0, %v2702
  %2704 = vdwg.mxu0
  %v2705 = vadd.f32 %v2531, %v2697
  %v2706 = vadd.f32 %v2534, %v2700
  %v2707 = vadd.f32 %v2537, %v2703
  %2708 = vrot.lane.b32.xlu0 %v2191, 104
  %v2709 = vpop.permute.xlu0 %2708
  %2710 = vrot.lane.b32.xlu0 %v2194, 104
  %v2711 = vpop.permute.xlu0 %2710
  %2712 = vrot.lane.b32.xlu0 %v2197, 104
  %v2713 = vpop.permute.xlu0 %2712
  %2714 = vrot.lane.b32.xlu0 %v2191, 72
  %v2715 = vpop.permute.xlu0 %2714
  %2716 = vrot.lane.b32.xlu0 %v2194, 72
  %v2717 = vpop.permute.xlu0 %2716
  %2718 = vrot.lane.b32.xlu0 %v2197, 72
  %v2719 = vpop.permute.xlu0 %2718
  %v2720 = vsel %vm361, %v2709, 0
  %v2722 = vsel %vm361, %v2711, 0
  %v2724 = vsel %vm361, %v2713, 0
  %v2726 = vsel %vm361, %v2715, 0
  %v2728 = vsel %vm361, %v2717, 0
  %v2730 = vsel %vm361, %v2719, 0
  %2732 = vmatpush.xpose.msra.mxu0 0.0
  %2733 = vmatpush.xpose.msra.mxu0 0.0
  %2734 = vmatpush.xpose.msra.mxu0 0.0
  %2735 = vmatpush.xpose.msra.mxu0 0.0
  %2736 = vmatpush.xpose.msra.mxu0 0.0
  %2737 = vmatpush.xpose.msra.mxu0 0.0
  %2738 = vmatpush.xpose.msra.mxu0 0.0
  %2739 = vmatpush.xpose.msra.mxu0 0.0
  %2740 = vmatpush.xpose.msra.mxu0 0.0
  %2741 = vmatpush.xpose.msra.mxu0 0.0
  %2742 = vmatpush.xpose.msra.mxu0 0.0
  %2743 = vmatpush.xpose.msra.mxu0 0.0
  %2744 = vmatpush.xpose.msra.mxu0 0.0
  %2745 = vmatpush.xpose.msra.mxu0 %v2730
  %2746 = vmatpush.xpose.msra.mxu0 %v2728
  %2747 = vmatpush.xpose.msra.mxu0 %v2726
  %2748 = vmatmul.f32.gmra.mxu0 %v2720
  %v2749 = vpop.f32.mrf.mxu0
  %v2750 = vadd.f32 0.0, %v2749
  %2751 = vmatmul.f32.gmra.mxu0 %v2722
  %v2752 = vpop.f32.mrf.mxu0
  %v2753 = vadd.f32 0.0, %v2752
  %2754 = vmatmul.f32.gmra.mxu0 %v2724
  %v2755 = vpop.f32.mrf.mxu0
  %v2756 = vadd.f32 0.0, %v2755
  %2757 = vdwg.mxu0
  %v2758 = vmul.f32 %v2750, 0.35355338
  %v2759 = vmul.f32 %v2753, 0.35355338
  %v2760 = vmul.f32 %v2756, 0.35355338
  %v2761 = vsel %vm403, %v2758, -inf
  %2762 = vmax.xlane.f32.xlu0 %v2761
  %v2763 = vpop.xlane.xlu0 %2762
  %v2764 = vsel %vm403, %v2759, -inf
  %2765 = vmax.xlane.f32.xlu0 %v2764
  %v2766 = vpop.xlane.xlu0 %2765
  %v2767 = vsel %vm410, %v2760, -inf
  %2768 = vmax.xlane.f32.xlu0 %v2767
  %v2769 = vpop.xlane.xlu0 %2768
  %v2770 = vsub.f32 %v2758, %v2763
  %v2771 = vsub.f32 %v2759, %v2766
  %v2772 = vsub.f32 %v2760, %v2769
  %v2773 = vmul.f32 %v2770, 1.442695
  %v2774 = vpow.pop %v2773
  %v2775 = vmul.f32 %v2771, 1.442695
  %v2776 = vpow.pop %v2775
  %v2777 = vmul.f32 %v2772, 1.442695
  %v2778 = vpow.pop %v2777
  %v2779 = vsel %vm403, %v2774, 0.0
  %2780 = vadd.xlane.f32.xlu0 %v2779
  %v2781 = vpop.xlane.xlu0 %2780
  %v2782 = vsel %vm403, %v2776, 0.0
  %2783 = vadd.xlane.f32.xlu0 %v2782
  %v2784 = vpop.xlane.xlu0 %2783
  %v2785 = vsel %vm410, %v2778, 0.0
  %2786 = vadd.xlane.f32.xlu0 %v2785
  %v2787 = vpop.xlane.xlu0 %2786
  %v2788 = vrcp.pop %v2781
  %v2789 = vrcp.pop %v2784
  %v2790 = vrcp.pop %v2787
  %v2791 = vmul.f32 %v2774, %v2788
  %v2792 = vmul.f32 %v2776, %v2789
  %v2793 = vmul.f32 %v2778, %v2790
  %2794 = vrot.lane.b32.xlu0 %v2191, 40
  %v2795 = vpop.permute.xlu0 %2794
  %2796 = vrot.lane.b32.xlu0 %v2194, 40
  %v2797 = vpop.permute.xlu0 %2796
  %2798 = vrot.lane.b32.xlu0 %v2197, 40
  %v2799 = vpop.permute.xlu0 %2798
  %v2803 = vsel %vm403, %v2791, 0
  %v2806 = vsel %vm403, %v2792, 0
  %v2809 = vsel %vm403, %v2793, 0
  %v2811 = vsel %vm134, %v2799, 0
  %2813 = vmatpush.msra.mxu0 0.0
  %2814 = vmatpush.msra.mxu0 0.0
  %2815 = vmatpush.msra.mxu0 0.0
  %2816 = vmatpush.msra.mxu0 0.0
  %2817 = vmatpush.msra.mxu0 0.0
  %2818 = vmatpush.msra.mxu0 0.0
  %2819 = vmatpush.msra.mxu0 0.0
  %2820 = vmatpush.msra.mxu0 0.0
  %2821 = vmatpush.msra.mxu0 0.0
  %2822 = vmatpush.msra.mxu0 0.0
  %2823 = vmatpush.msra.mxu0 0.0
  %2824 = vmatpush.msra.mxu0 0.0
  %2825 = vmatpush.msra.mxu0 0.0
  %2826 = vmatpush.msra.mxu0 %v2811
  %2827 = vmatpush.msra.mxu0 %v2797
  %2828 = vmatpush.msra.mxu0 %v2795
  %2829 = vmatmul.f32.gmra.mxu0 %v2803
  %v2830 = vpop.f32.mrf.mxu0
  %v2831 = vadd.f32 0.0, %v2830
  %2832 = vmatmul.f32.gmra.mxu0 %v2806
  %v2833 = vpop.f32.mrf.mxu0
  %v2834 = vadd.f32 0.0, %v2833
  %2835 = vmatmul.f32.gmra.mxu0 %v2809
  %v2836 = vpop.f32.mrf.mxu0
  %v2837 = vadd.f32 0.0, %v2836
  %2838 = vdwg.mxu0
  %v2840 = vsel %vm361, %v2831, 0
  %v2843 = vsel %vm361, %v2834, 0
  %v2846 = vsel %vm361, %v2837, 0
  %2848 = vmatpush.msra.mxu0 0.0
  %2849 = vmatpush.msra.mxu0 0.0
  %2850 = vmatpush.msra.mxu0 0.0
  %2851 = vmatpush.msra.mxu0 0.0
  %2852 = vmatpush.msra.mxu0 0.0
  %2853 = vmatpush.msra.mxu0 0.0
  %2854 = vmatpush.msra.mxu0 0.0
  %2855 = vmatpush.msra.mxu0 0.0
  %2856 = vmatpush.msra.mxu0 0.0
  %2857 = vmatpush.msra.mxu0 0.0
  %2858 = vmatpush.msra.mxu0 0.0
  %2859 = vmatpush.msra.mxu0 0.0
  %2860 = vmatpush.msra.mxu0 0.0
  %2861 = vmatpush.msra.mxu0 0.0
  %2862 = vmatpush.msra.mxu0 0.0
  %2863 = vmatpush.msra.mxu0 %v2209
  %2864 = vmatmul.f32.gmra.mxu0 %v2840
  %v2865 = vpop.f32.mrf.mxu0
  %v2866 = vadd.f32 0.0, %v2865
  %2867 = vmatmul.f32.gmra.mxu0 %v2843
  %v2868 = vpop.f32.mrf.mxu0
  %v2869 = vadd.f32 0.0, %v2868
  %2870 = vmatmul.f32.gmra.mxu0 %v2846
  %v2871 = vpop.f32.mrf.mxu0
  %v2872 = vadd.f32 0.0, %v2871
  %2873 = vdwg.mxu0
  %v2874 = vadd.f32 %v2705, %v2866
  %v2875 = vadd.f32 %v2706, %v2869
  %v2876 = vadd.f32 %v2707, %v2872
  %v2879 = vrot.slane %v2197, 1
  %v2880 = vrot.slane %v2200, 1
  %v2881 = vsel %vm1024, %v2879, %v2880
  %v2882 = vrot.slane %v2203, 1
  %v2883 = vsel %vm1024, %v2880, %v2882
  %2884 = vrot.lane.b32.xlu0 %v2881, 96
  %v2885 = vpop.permute.xlu0 %2884
  %2886 = vrot.lane.b32.xlu0 %v2883, 96
  %v2887 = vpop.permute.xlu0 %2886
  %2888 = vrot.lane.b32.xlu0 %v2882, 96
  %v2889 = vpop.permute.xlu0 %2888
  %v2890 = vsel %vm361, %v2881, 0
  %v2892 = vsel %vm361, %v2883, 0
  %v2894 = vsel %vm361, %v2882, 0
  %v2896 = vsel %vm361, %v2885, 0
  %v2898 = vsel %vm361, %v2887, 0
  %v2900 = vsel %vm361, %v2889, 0
  %2902 = vmatpush.xpose.msra.mxu0 0.0
  %2903 = vmatpush.xpose.msra.mxu0 0.0
  %2904 = vmatpush.xpose.msra.mxu0 0.0
  %2905 = vmatpush.xpose.msra.mxu0 0.0
  %2906 = vmatpush.xpose.msra.mxu0 0.0
  %2907 = vmatpush.xpose.msra.mxu0 0.0
  %2908 = vmatpush.xpose.msra.mxu0 0.0
  %2909 = vmatpush.xpose.msra.mxu0 0.0
  %2910 = vmatpush.xpose.msra.mxu0 0.0
  %2911 = vmatpush.xpose.msra.mxu0 0.0
  %2912 = vmatpush.xpose.msra.mxu0 0.0
  %2913 = vmatpush.xpose.msra.mxu0 0.0
  %2914 = vmatpush.xpose.msra.mxu0 0.0
  %2915 = vmatpush.xpose.msra.mxu0 %v2900
  %2916 = vmatpush.xpose.msra.mxu0 %v2898
  %2917 = vmatpush.xpose.msra.mxu0 %v2896
  %2918 = vmatmul.f32.gmra.mxu0 %v2890
  %v2919 = vpop.f32.mrf.mxu0
  %v2920 = vadd.f32 0.0, %v2919
  %2921 = vmatmul.f32.gmra.mxu0 %v2892
  %v2922 = vpop.f32.mrf.mxu0
  %v2923 = vadd.f32 0.0, %v2922
  %2924 = vmatmul.f32.gmra.mxu0 %v2894
  %v2925 = vpop.f32.mrf.mxu0
  %v2926 = vadd.f32 0.0, %v2925
  %2927 = vdwg.mxu0
  %v2928 = vmul.f32 %v2920, 0.35355338
  %v2929 = vmul.f32 %v2923, 0.35355338
  %v2930 = vmul.f32 %v2926, 0.35355338
  %v2931 = vsel %vm403, %v2928, -inf
  %2932 = vmax.xlane.f32.xlu0 %v2931
  %v2933 = vpop.xlane.xlu0 %2932
  %v2934 = vsel %vm403, %v2929, -inf
  %2935 = vmax.xlane.f32.xlu0 %v2934
  %v2936 = vpop.xlane.xlu0 %2935
  %v2937 = vsel %vm410, %v2930, -inf
  %2938 = vmax.xlane.f32.xlu0 %v2937
  %v2939 = vpop.xlane.xlu0 %2938
  %v2940 = vsub.f32 %v2928, %v2933
  %v2941 = vsub.f32 %v2929, %v2936
  %v2942 = vsub.f32 %v2930, %v2939
  %v2943 = vmul.f32 %v2940, 1.442695
  %v2944 = vpow.pop %v2943
  %v2945 = vmul.f32 %v2941, 1.442695
  %v2946 = vpow.pop %v2945
  %v2947 = vmul.f32 %v2942, 1.442695
  %v2948 = vpow.pop %v2947
  %v2949 = vsel %vm403, %v2944, 0.0
  %2950 = vadd.xlane.f32.xlu0 %v2949
  %v2951 = vpop.xlane.xlu0 %2950
  %v2952 = vsel %vm403, %v2946, 0.0
  %2953 = vadd.xlane.f32.xlu0 %v2952
  %v2954 = vpop.xlane.xlu0 %2953
  %v2955 = vsel %vm410, %v2948, 0.0
  %2956 = vadd.xlane.f32.xlu0 %v2955
  %v2957 = vpop.xlane.xlu0 %2956
  %v2958 = vrcp.pop %v2951
  %v2959 = vrcp.pop %v2954
  %v2960 = vrcp.pop %v2957
  %v2961 = vmul.f32 %v2944, %v2958
  %v2962 = vmul.f32 %v2946, %v2959
  %v2963 = vmul.f32 %v2948, %v2960
  %2964 = vrot.lane.b32.xlu0 %v2881, 64
  %v2965 = vpop.permute.xlu0 %2964
  %2966 = vrot.lane.b32.xlu0 %v2883, 64
  %v2967 = vpop.permute.xlu0 %2966
  %2968 = vrot.lane.b32.xlu0 %v2882, 64
  %v2969 = vpop.permute.xlu0 %2968
  %v2973 = vsel %vm403, %v2961, 0
  %v2976 = vsel %vm403, %v2962, 0
  %v2979 = vsel %vm403, %v2963, 0
  %v2981 = vsel %vm134, %v2969, 0
  %2983 = vmatpush.msra.mxu0 0.0
  %2984 = vmatpush.msra.mxu0 0.0
  %2985 = vmatpush.msra.mxu0 0.0
  %2986 = vmatpush.msra.mxu0 0.0
  %2987 = vmatpush.msra.mxu0 0.0
  %2988 = vmatpush.msra.mxu0 0.0
  %2989 = vmatpush.msra.mxu0 0.0
  %2990 = vmatpush.msra.mxu0 0.0
  %2991 = vmatpush.msra.mxu0 0.0
  %2992 = vmatpush.msra.mxu0 0.0
  %2993 = vmatpush.msra.mxu0 0.0
  %2994 = vmatpush.msra.mxu0 0.0
  %2995 = vmatpush.msra.mxu0 0.0
  %2996 = vmatpush.msra.mxu0 %v2981
  %2997 = vmatpush.msra.mxu0 %v2967
  %2998 = vmatpush.msra.mxu0 %v2965
  %2999 = vmatmul.f32.gmra.mxu0 %v2973
  %v3000 = vpop.f32.mrf.mxu0
  %v3001 = vadd.f32 0.0, %v3000
  %3002 = vmatmul.f32.gmra.mxu0 %v2976
  %v3003 = vpop.f32.mrf.mxu0
  %v3004 = vadd.f32 0.0, %v3003
  %3005 = vmatmul.f32.gmra.mxu0 %v2979
  %v3006 = vpop.f32.mrf.mxu0
  %v3007 = vadd.f32 0.0, %v3006
  %3008 = vdwg.mxu0
  %3009 = vrot.lane.b32.xlu0 %v2881, 120
  %v3010 = vpop.permute.xlu0 %3009
  %3011 = vrot.lane.b32.xlu0 %v2883, 120
  %v3012 = vpop.permute.xlu0 %3011
  %3013 = vrot.lane.b32.xlu0 %v2882, 120
  %v3014 = vpop.permute.xlu0 %3013
  %3015 = vrot.lane.b32.xlu0 %v2881, 88
  %v3016 = vpop.permute.xlu0 %3015
  %3017 = vrot.lane.b32.xlu0 %v2883, 88
  %v3018 = vpop.permute.xlu0 %3017
  %3019 = vrot.lane.b32.xlu0 %v2882, 88
  %v3020 = vpop.permute.xlu0 %3019
  %v3021 = vsel %vm361, %v3010, 0
  %v3023 = vsel %vm361, %v3012, 0
  %v3025 = vsel %vm361, %v3014, 0
  %v3027 = vsel %vm361, %v3016, 0
  %v3029 = vsel %vm361, %v3018, 0
  %v3031 = vsel %vm361, %v3020, 0
  %3033 = vmatpush.xpose.msra.mxu0 0.0
  %3034 = vmatpush.xpose.msra.mxu0 0.0
  %3035 = vmatpush.xpose.msra.mxu0 0.0
  %3036 = vmatpush.xpose.msra.mxu0 0.0
  %3037 = vmatpush.xpose.msra.mxu0 0.0
  %3038 = vmatpush.xpose.msra.mxu0 0.0
  %3039 = vmatpush.xpose.msra.mxu0 0.0
  %3040 = vmatpush.xpose.msra.mxu0 0.0
  %3041 = vmatpush.xpose.msra.mxu0 0.0
  %3042 = vmatpush.xpose.msra.mxu0 0.0
  %3043 = vmatpush.xpose.msra.mxu0 0.0
  %3044 = vmatpush.xpose.msra.mxu0 0.0
  %3045 = vmatpush.xpose.msra.mxu0 0.0
  %3046 = vmatpush.xpose.msra.mxu0 %v3031
  %3047 = vmatpush.xpose.msra.mxu0 %v3029
  %3048 = vmatpush.xpose.msra.mxu0 %v3027
  %3049 = vmatmul.f32.gmra.mxu0 %v3021
  %v3050 = vpop.f32.mrf.mxu0
  %v3051 = vadd.f32 0.0, %v3050
  %3052 = vmatmul.f32.gmra.mxu0 %v3023
  %v3053 = vpop.f32.mrf.mxu0
  %v3054 = vadd.f32 0.0, %v3053
  %3055 = vmatmul.f32.gmra.mxu0 %v3025
  %v3056 = vpop.f32.mrf.mxu0
  %v3057 = vadd.f32 0.0, %v3056
  %3058 = vdwg.mxu0
  %v3059 = vmul.f32 %v3051, 0.35355338
  %v3060 = vmul.f32 %v3054, 0.35355338
  %v3061 = vmul.f32 %v3057, 0.35355338
  %v3062 = vsel %vm403, %v3059, -inf
  %3063 = vmax.xlane.f32.xlu0 %v3062
  %v3064 = vpop.xlane.xlu0 %3063
  %v3065 = vsel %vm403, %v3060, -inf
  %3066 = vmax.xlane.f32.xlu0 %v3065
  %v3067 = vpop.xlane.xlu0 %3066
  %v3068 = vsel %vm410, %v3061, -inf
  %3069 = vmax.xlane.f32.xlu0 %v3068
  %v3070 = vpop.xlane.xlu0 %3069
  %v3071 = vsub.f32 %v3059, %v3064
  %v3072 = vsub.f32 %v3060, %v3067
  %v3073 = vsub.f32 %v3061, %v3070
  %v3074 = vmul.f32 %v3071, 1.442695
  %v3075 = vpow.pop %v3074
  %v3076 = vmul.f32 %v3072, 1.442695
  %v3077 = vpow.pop %v3076
  %v3078 = vmul.f32 %v3073, 1.442695
  %v3079 = vpow.pop %v3078
  %v3080 = vsel %vm403, %v3075, 0.0
  %3081 = vadd.xlane.f32.xlu0 %v3080
  %v3082 = vpop.xlane.xlu0 %3081
  %v3083 = vsel %vm403, %v3077, 0.0
  %3084 = vadd.xlane.f32.xlu0 %v3083
  %v3085 = vpop.xlane.xlu0 %3084
  %v3086 = vsel %vm410, %v3079, 0.0
  %3087 = vadd.xlane.f32.xlu0 %v3086
  %v3088 = vpop.xlane.xlu0 %3087
  %v3089 = vrcp.pop %v3082
  %v3090 = vrcp.pop %v3085
  %v3091 = vrcp.pop %v3088
  %v3092 = vmul.f32 %v3075, %v3089
  %v3093 = vmul.f32 %v3077, %v3090
  %v3094 = vmul.f32 %v3079, %v3091
  %3095 = vrot.lane.b32.xlu0 %v2881, 56
  %v3096 = vpop.permute.xlu0 %3095
  %3097 = vrot.lane.b32.xlu0 %v2883, 56
  %v3098 = vpop.permute.xlu0 %3097
  %3099 = vrot.lane.b32.xlu0 %v2882, 56
  %v3100 = vpop.permute.xlu0 %3099
  %v3104 = vsel %vm403, %v3092, 0
  %v3107 = vsel %vm403, %v3093, 0
  %v3110 = vsel %vm403, %v3094, 0
  %v3112 = vsel %vm134, %v3100, 0
  %3114 = vmatpush.msra.mxu0 0.0
  %3115 = vmatpush.msra.mxu0 0.0
  %3116 = vmatpush.msra.mxu0 0.0
  %3117 = vmatpush.msra.mxu0 0.0
  %3118 = vmatpush.msra.mxu0 0.0
  %3119 = vmatpush.msra.mxu0 0.0
  %3120 = vmatpush.msra.mxu0 0.0
  %3121 = vmatpush.msra.mxu0 0.0
  %3122 = vmatpush.msra.mxu0 0.0
  %3123 = vmatpush.msra.mxu0 0.0
  %3124 = vmatpush.msra.mxu0 0.0
  %3125 = vmatpush.msra.mxu0 0.0
  %3126 = vmatpush.msra.mxu0 0.0
  %3127 = vmatpush.msra.mxu0 %v3112
  %3128 = vmatpush.msra.mxu0 %v3098
  %3129 = vmatpush.msra.mxu0 %v3096
  %3130 = vmatmul.f32.gmra.mxu0 %v3104
  %v3131 = vpop.f32.mrf.mxu0
  %v3132 = vadd.f32 0.0, %v3131
  %3133 = vmatmul.f32.gmra.mxu0 %v3107
  %v3134 = vpop.f32.mrf.mxu0
  %v3135 = vadd.f32 0.0, %v3134
  %3136 = vmatmul.f32.gmra.mxu0 %v3110
  %v3137 = vpop.f32.mrf.mxu0
  %v3138 = vadd.f32 0.0, %v3137
  %3139 = vdwg.mxu0
  %v3141 = vsel %vm361, %v3132, 0
  %v3144 = vsel %vm361, %v3135, 0
  %v3147 = vsel %vm361, %v3138, 0
  %3149 = vmatpush.msra.mxu0 0.0
  %3150 = vmatpush.msra.mxu0 0.0
  %3151 = vmatpush.msra.mxu0 0.0
  %3152 = vmatpush.msra.mxu0 0.0
  %3153 = vmatpush.msra.mxu0 0.0
  %3154 = vmatpush.msra.mxu0 0.0
  %3155 = vmatpush.msra.mxu0 0.0
  %3156 = vmatpush.msra.mxu0 0.0
  %3157 = vmatpush.msra.mxu0 0.0
  %3158 = vmatpush.msra.mxu0 0.0
  %3159 = vmatpush.msra.mxu0 0.0
  %3160 = vmatpush.msra.mxu0 0.0
  %3161 = vmatpush.msra.mxu0 0.0
  %3162 = vmatpush.msra.mxu0 0.0
  %3163 = vmatpush.msra.mxu0 0.0
  %3164 = vmatpush.msra.mxu0 %v2207
  %3165 = vmatmul.f32.gmra.mxu0 %v3141
  %v3166 = vpop.f32.mrf.mxu0
  %v3167 = vadd.f32 0.0, %v3166
  %3168 = vmatmul.f32.gmra.mxu0 %v3144
  %v3169 = vpop.f32.mrf.mxu0
  %v3170 = vadd.f32 0.0, %v3169
  %3171 = vmatmul.f32.gmra.mxu0 %v3147
  %v3172 = vpop.f32.mrf.mxu0
  %v3173 = vadd.f32 0.0, %v3172
  %3174 = vdwg.mxu0
  %v3176 = vsel %vm361, %v3001, 0
  %v3179 = vsel %vm361, %v3004, 0
  %v3182 = vsel %vm361, %v3007, 0
  %3184 = vmatpush.msra.mxu0 0.0
  %3185 = vmatpush.msra.mxu0 0.0
  %3186 = vmatpush.msra.mxu0 0.0
  %3187 = vmatpush.msra.mxu0 0.0
  %3188 = vmatpush.msra.mxu0 0.0
  %3189 = vmatpush.msra.mxu0 0.0
  %3190 = vmatpush.msra.mxu0 0.0
  %3191 = vmatpush.msra.mxu0 0.0
  %3192 = vmatpush.msra.mxu0 0.0
  %3193 = vmatpush.msra.mxu0 0.0
  %3194 = vmatpush.msra.mxu0 0.0
  %3195 = vmatpush.msra.mxu0 0.0
  %3196 = vmatpush.msra.mxu0 0.0
  %3197 = vmatpush.msra.mxu0 0.0
  %3198 = vmatpush.msra.mxu0 0.0
  %3199 = vmatpush.msra.mxu0 %v2206
  %3200 = vmatmul.f32.gmra.mxu0 %v3176
  %v3201 = vpop.f32.mrf.mxu0
  %v3202 = vadd.f32 %v3167, %v3201
  %3203 = vmatmul.f32.gmra.mxu0 %v3179
  %v3204 = vpop.f32.mrf.mxu0
  %v3205 = vadd.f32 %v3170, %v3204
  %3206 = vmatmul.f32.gmra.mxu0 %v3182
  %v3207 = vpop.f32.mrf.mxu0
  %v3208 = vadd.f32 %v3173, %v3207
  %3209 = vdwg.mxu0
  %3210 = vrot.lane.b32.xlu0 %v2881, 112
  %v3211 = vpop.permute.xlu0 %3210
  %3212 = vrot.lane.b32.xlu0 %v2883, 112
  %v3213 = vpop.permute.xlu0 %3212
  %3214 = vrot.lane.b32.xlu0 %v2882, 112
  %v3215 = vpop.permute.xlu0 %3214
  %3216 = vrot.lane.b32.xlu0 %v2881, 80
  %v3217 = vpop.permute.xlu0 %3216
  %3218 = vrot.lane.b32.xlu0 %v2883, 80
  %v3219 = vpop.permute.xlu0 %3218
  %3220 = vrot.lane.b32.xlu0 %v2882, 80
  %v3221 = vpop.permute.xlu0 %3220
  %v3222 = vsel %vm361, %v3211, 0
  %v3224 = vsel %vm361, %v3213, 0
  %v3226 = vsel %vm361, %v3215, 0
  %v3228 = vsel %vm361, %v3217, 0
  %v3230 = vsel %vm361, %v3219, 0
  %v3232 = vsel %vm361, %v3221, 0
  %3234 = vmatpush.xpose.msra.mxu0 0.0
  %3235 = vmatpush.xpose.msra.mxu0 0.0
  %3236 = vmatpush.xpose.msra.mxu0 0.0
  %3237 = vmatpush.xpose.msra.mxu0 0.0
  %3238 = vmatpush.xpose.msra.mxu0 0.0
  %3239 = vmatpush.xpose.msra.mxu0 0.0
  %3240 = vmatpush.xpose.msra.mxu0 0.0
  %3241 = vmatpush.xpose.msra.mxu0 0.0
  %3242 = vmatpush.xpose.msra.mxu0 0.0
  %3243 = vmatpush.xpose.msra.mxu0 0.0
  %3244 = vmatpush.xpose.msra.mxu0 0.0
  %3245 = vmatpush.xpose.msra.mxu0 0.0
  %3246 = vmatpush.xpose.msra.mxu0 0.0
  %3247 = vmatpush.xpose.msra.mxu0 %v3232
  %3248 = vmatpush.xpose.msra.mxu0 %v3230
  %3249 = vmatpush.xpose.msra.mxu0 %v3228
  %3250 = vmatmul.f32.gmra.mxu0 %v3222
  %v3251 = vpop.f32.mrf.mxu0
  %v3252 = vadd.f32 0.0, %v3251
  %3253 = vmatmul.f32.gmra.mxu0 %v3224
  %v3254 = vpop.f32.mrf.mxu0
  %v3255 = vadd.f32 0.0, %v3254
  %3256 = vmatmul.f32.gmra.mxu0 %v3226
  %v3257 = vpop.f32.mrf.mxu0
  %v3258 = vadd.f32 0.0, %v3257
  %3259 = vdwg.mxu0
  %v3260 = vmul.f32 %v3252, 0.35355338
  %v3261 = vmul.f32 %v3255, 0.35355338
  %v3262 = vmul.f32 %v3258, 0.35355338
  %v3263 = vsel %vm403, %v3260, -inf
  %3264 = vmax.xlane.f32.xlu0 %v3263
  %v3265 = vpop.xlane.xlu0 %3264
  %v3266 = vsel %vm403, %v3261, -inf
  %3267 = vmax.xlane.f32.xlu0 %v3266
  %v3268 = vpop.xlane.xlu0 %3267
  %v3269 = vsel %vm410, %v3262, -inf
  %3270 = vmax.xlane.f32.xlu0 %v3269
  %v3271 = vpop.xlane.xlu0 %3270
  %v3272 = vsub.f32 %v3260, %v3265
  %v3273 = vsub.f32 %v3261, %v3268
  %v3274 = vsub.f32 %v3262, %v3271
  %v3275 = vmul.f32 %v3272, 1.442695
  %v3276 = vpow.pop %v3275
  %v3277 = vmul.f32 %v3273, 1.442695
  %v3278 = vpow.pop %v3277
  %v3279 = vmul.f32 %v3274, 1.442695
  %v3280 = vpow.pop %v3279
  %v3281 = vsel %vm403, %v3276, 0.0
  %3282 = vadd.xlane.f32.xlu0 %v3281
  %v3283 = vpop.xlane.xlu0 %3282
  %v3284 = vsel %vm403, %v3278, 0.0
  %3285 = vadd.xlane.f32.xlu0 %v3284
  %v3286 = vpop.xlane.xlu0 %3285
  %v3287 = vsel %vm410, %v3280, 0.0
  %3288 = vadd.xlane.f32.xlu0 %v3287
  %v3289 = vpop.xlane.xlu0 %3288
  %v3290 = vrcp.pop %v3283
  %v3291 = vrcp.pop %v3286
  %v3292 = vrcp.pop %v3289
  %v3293 = vmul.f32 %v3276, %v3290
  %v3294 = vmul.f32 %v3278, %v3291
  %v3295 = vmul.f32 %v3280, %v3292
  %3296 = vrot.lane.b32.xlu0 %v2881, 48
  %v3297 = vpop.permute.xlu0 %3296
  %3298 = vrot.lane.b32.xlu0 %v2883, 48
  %v3299 = vpop.permute.xlu0 %3298
  %3300 = vrot.lane.b32.xlu0 %v2882, 48
  %v3301 = vpop.permute.xlu0 %3300
  %v3305 = vsel %vm403, %v3293, 0
  %v3308 = vsel %vm403, %v3294, 0
  %v3311 = vsel %vm403, %v3295, 0
  %v3313 = vsel %vm134, %v3301, 0
  %3315 = vmatpush.msra.mxu0 0.0
  %3316 = vmatpush.msra.mxu0 0.0
  %3317 = vmatpush.msra.mxu0 0.0
  %3318 = vmatpush.msra.mxu0 0.0
  %3319 = vmatpush.msra.mxu0 0.0
  %3320 = vmatpush.msra.mxu0 0.0
  %3321 = vmatpush.msra.mxu0 0.0
  %3322 = vmatpush.msra.mxu0 0.0
  %3323 = vmatpush.msra.mxu0 0.0
  %3324 = vmatpush.msra.mxu0 0.0
  %3325 = vmatpush.msra.mxu0 0.0
  %3326 = vmatpush.msra.mxu0 0.0
  %3327 = vmatpush.msra.mxu0 0.0
  %3328 = vmatpush.msra.mxu0 %v3313
  %3329 = vmatpush.msra.mxu0 %v3299
  %3330 = vmatpush.msra.mxu0 %v3297
  %3331 = vmatmul.f32.gmra.mxu0 %v3305
  %v3332 = vpop.f32.mrf.mxu0
  %v3333 = vadd.f32 0.0, %v3332
  %3334 = vmatmul.f32.gmra.mxu0 %v3308
  %v3335 = vpop.f32.mrf.mxu0
  %v3336 = vadd.f32 0.0, %v3335
  %3337 = vmatmul.f32.gmra.mxu0 %v3311
  %v3338 = vpop.f32.mrf.mxu0
  %v3339 = vadd.f32 0.0, %v3338
  %3340 = vdwg.mxu0
  %v3342 = vsel %vm361, %v3333, 0
  %v3345 = vsel %vm361, %v3336, 0
  %v3348 = vsel %vm361, %v3339, 0
  %3350 = vmatpush.msra.mxu0 0.0
  %3351 = vmatpush.msra.mxu0 0.0
  %3352 = vmatpush.msra.mxu0 0.0
  %3353 = vmatpush.msra.mxu0 0.0
  %3354 = vmatpush.msra.mxu0 0.0
  %3355 = vmatpush.msra.mxu0 0.0
  %3356 = vmatpush.msra.mxu0 0.0
  %3357 = vmatpush.msra.mxu0 0.0
  %3358 = vmatpush.msra.mxu0 0.0
  %3359 = vmatpush.msra.mxu0 0.0
  %3360 = vmatpush.msra.mxu0 0.0
  %3361 = vmatpush.msra.mxu0 0.0
  %3362 = vmatpush.msra.mxu0 0.0
  %3363 = vmatpush.msra.mxu0 0.0
  %3364 = vmatpush.msra.mxu0 0.0
  %3365 = vmatpush.msra.mxu0 %v2208
  %3366 = vmatmul.f32.gmra.mxu0 %v3342
  %v3367 = vpop.f32.mrf.mxu0
  %v3368 = vadd.f32 0.0, %v3367
  %3369 = vmatmul.f32.gmra.mxu0 %v3345
  %v3370 = vpop.f32.mrf.mxu0
  %v3371 = vadd.f32 0.0, %v3370
  %3372 = vmatmul.f32.gmra.mxu0 %v3348
  %v3373 = vpop.f32.mrf.mxu0
  %v3374 = vadd.f32 0.0, %v3373
  %3375 = vdwg.mxu0
  %v3376 = vadd.f32 %v3202, %v3368
  %v3377 = vadd.f32 %v3205, %v3371
  %v3378 = vadd.f32 %v3208, %v3374
  %3379 = vrot.lane.b32.xlu0 %v2881, 104
  %v3380 = vpop.permute.xlu0 %3379
  %3381 = vrot.lane.b32.xlu0 %v2883, 104
  %v3382 = vpop.permute.xlu0 %3381
  %3383 = vrot.lane.b32.xlu0 %v2882, 104
  %v3384 = vpop.permute.xlu0 %3383
  %3385 = vrot.lane.b32.xlu0 %v2881, 72
  %v3386 = vpop.permute.xlu0 %3385
  %3387 = vrot.lane.b32.xlu0 %v2883, 72
  %v3388 = vpop.permute.xlu0 %3387
  %3389 = vrot.lane.b32.xlu0 %v2882, 72
  %v3390 = vpop.permute.xlu0 %3389
  %v3391 = vsel %vm361, %v3380, 0
  %v3393 = vsel %vm361, %v3382, 0
  %v3395 = vsel %vm361, %v3384, 0
  %v3397 = vsel %vm361, %v3386, 0
  %v3399 = vsel %vm361, %v3388, 0
  %v3401 = vsel %vm361, %v3390, 0
  %3403 = vmatpush.xpose.msra.mxu0 0.0
  %3404 = vmatpush.xpose.msra.mxu0 0.0
  %3405 = vmatpush.xpose.msra.mxu0 0.0
  %3406 = vmatpush.xpose.msra.mxu0 0.0
  %3407 = vmatpush.xpose.msra.mxu0 0.0
  %3408 = vmatpush.xpose.msra.mxu0 0.0
  %3409 = vmatpush.xpose.msra.mxu0 0.0
  %3410 = vmatpush.xpose.msra.mxu0 0.0
  %3411 = vmatpush.xpose.msra.mxu0 0.0
  %3412 = vmatpush.xpose.msra.mxu0 0.0
  %3413 = vmatpush.xpose.msra.mxu0 0.0
  %3414 = vmatpush.xpose.msra.mxu0 0.0
  %3415 = vmatpush.xpose.msra.mxu0 0.0
  %3416 = vmatpush.xpose.msra.mxu0 %v3401
  %3417 = vmatpush.xpose.msra.mxu0 %v3399
  %3418 = vmatpush.xpose.msra.mxu0 %v3397
  %3419 = vmatmul.f32.gmra.mxu0 %v3391
  %v3420 = vpop.f32.mrf.mxu0
  %v3421 = vadd.f32 0.0, %v3420
  %3422 = vmatmul.f32.gmra.mxu0 %v3393
  %v3423 = vpop.f32.mrf.mxu0
  %v3424 = vadd.f32 0.0, %v3423
  %3425 = vmatmul.f32.gmra.mxu0 %v3395
  %v3426 = vpop.f32.mrf.mxu0
  %v3427 = vadd.f32 0.0, %v3426
  %3428 = vdwg.mxu0
  %v3429 = vmul.f32 %v3421, 0.35355338
  %v3430 = vmul.f32 %v3424, 0.35355338
  %v3431 = vmul.f32 %v3427, 0.35355338
  %v3432 = vsel %vm403, %v3429, -inf
  %3433 = vmax.xlane.f32.xlu0 %v3432
  %v3434 = vpop.xlane.xlu0 %3433
  %v3435 = vsel %vm403, %v3430, -inf
  %3436 = vmax.xlane.f32.xlu0 %v3435
  %v3437 = vpop.xlane.xlu0 %3436
  %v3438 = vsel %vm410, %v3431, -inf
  %3439 = vmax.xlane.f32.xlu0 %v3438
  %v3440 = vpop.xlane.xlu0 %3439
  %v3441 = vsub.f32 %v3429, %v3434
  %v3442 = vsub.f32 %v3430, %v3437
  %v3443 = vsub.f32 %v3431, %v3440
  %v3444 = vmul.f32 %v3441, 1.442695
  %v3445 = vpow.pop %v3444
  %v3446 = vmul.f32 %v3442, 1.442695
  %v3447 = vpow.pop %v3446
  %v3448 = vmul.f32 %v3443, 1.442695
  %v3449 = vpow.pop %v3448
  %v3450 = vsel %vm403, %v3445, 0.0
  %3451 = vadd.xlane.f32.xlu0 %v3450
  %v3452 = vpop.xlane.xlu0 %3451
  %v3453 = vsel %vm403, %v3447, 0.0
  %3454 = vadd.xlane.f32.xlu0 %v3453
  %v3455 = vpop.xlane.xlu0 %3454
  %v3456 = vsel %vm410, %v3449, 0.0
  %3457 = vadd.xlane.f32.xlu0 %v3456
  %v3458 = vpop.xlane.xlu0 %3457
  %v3459 = vrcp.pop %v3452
  %v3460 = vrcp.pop %v3455
  %v3461 = vrcp.pop %v3458
  %v3462 = vmul.f32 %v3445, %v3459
  %v3463 = vmul.f32 %v3447, %v3460
  %v3464 = vmul.f32 %v3449, %v3461
  %3465 = vrot.lane.b32.xlu0 %v2881, 40
  %v3466 = vpop.permute.xlu0 %3465
  %3467 = vrot.lane.b32.xlu0 %v2883, 40
  %v3468 = vpop.permute.xlu0 %3467
  %3469 = vrot.lane.b32.xlu0 %v2882, 40
  %v3470 = vpop.permute.xlu0 %3469
  %v3474 = vsel %vm403, %v3462, 0
  %v3477 = vsel %vm403, %v3463, 0
  %v3480 = vsel %vm403, %v3464, 0
  %v3482 = vsel %vm134, %v3470, 0
  %3484 = vmatpush.msra.mxu0 0.0
  %3485 = vmatpush.msra.mxu0 0.0
  %3486 = vmatpush.msra.mxu0 0.0
  %3487 = vmatpush.msra.mxu0 0.0
  %3488 = vmatpush.msra.mxu0 0.0
  %3489 = vmatpush.msra.mxu0 0.0
  %3490 = vmatpush.msra.mxu0 0.0
  %3491 = vmatpush.msra.mxu0 0.0
  %3492 = vmatpush.msra.mxu0 0.0
  %3493 = vmatpush.msra.mxu0 0.0
  %3494 = vmatpush.msra.mxu0 0.0
  %3495 = vmatpush.msra.mxu0 0.0
  %3496 = vmatpush.msra.mxu0 0.0
  %3497 = vmatpush.msra.mxu0 %v3482
  %3498 = vmatpush.msra.mxu0 %v3468
  %3499 = vmatpush.msra.mxu0 %v3466
  %3500 = vmatmul.f32.gmra.mxu0 %v3474
  %v3501 = vpop.f32.mrf.mxu0
  %v3502 = vadd.f32 0.0, %v3501
  %3503 = vmatmul.f32.gmra.mxu0 %v3477
  %v3504 = vpop.f32.mrf.mxu0
  %v3505 = vadd.f32 0.0, %v3504
  %3506 = vmatmul.f32.gmra.mxu0 %v3480
  %v3507 = vpop.f32.mrf.mxu0
  %v3508 = vadd.f32 0.0, %v3507
  %3509 = vdwg.mxu0
  %v3511 = vsel %vm361, %v3502, 0
  %v3514 = vsel %vm361, %v3505, 0
  %v3517 = vsel %vm361, %v3508, 0
  %3519 = vmatpush.msra.mxu0 0.0
  %3520 = vmatpush.msra.mxu0 0.0
  %3521 = vmatpush.msra.mxu0 0.0
  %3522 = vmatpush.msra.mxu0 0.0
  %3523 = vmatpush.msra.mxu0 0.0
  %3524 = vmatpush.msra.mxu0 0.0
  %3525 = vmatpush.msra.mxu0 0.0
  %3526 = vmatpush.msra.mxu0 0.0
  %3527 = vmatpush.msra.mxu0 0.0
  %3528 = vmatpush.msra.mxu0 0.0
  %3529 = vmatpush.msra.mxu0 0.0
  %3530 = vmatpush.msra.mxu0 0.0
  %3531 = vmatpush.msra.mxu0 0.0
  %3532 = vmatpush.msra.mxu0 0.0
  %3533 = vmatpush.msra.mxu0 0.0
  %3534 = vmatpush.msra.mxu0 %v2209
  %3535 = vmatmul.f32.gmra.mxu0 %v3511
  %v3536 = vpop.f32.mrf.mxu0
  %v3537 = vadd.f32 0.0, %v3536
  %3538 = vmatmul.f32.gmra.mxu0 %v3514
  %v3539 = vpop.f32.mrf.mxu0
  %v3540 = vadd.f32 0.0, %v3539
  %3541 = vmatmul.f32.gmra.mxu0 %v3517
  %v3542 = vpop.f32.mrf.mxu0
  %v3543 = vadd.f32 0.0, %v3542
  %3544 = vdwg.mxu0
  %v3545 = vadd.f32 %v3376, %v3537
  %v3546 = vadd.f32 %v3377, %v3540
  %v3547 = vadd.f32 %v3378, %v3543
  %v3551 = vrot.slane %v3545, 7
  %v3552 = vrot.slane %v3546, 7
  %v3553 = vsel %vm134, %v3551, %v3552
  %v3554 = vrot.slane %v3547, 7
  %v3555 = vsel %vm134, %v3552, %v3554
  %v3559 = vsel %vm134, %v2876, %v3551
  %v3560 = vadd.f32 %v2013, %v2874
  %v3561 = vadd.f32 %v2014, %v2875
  %v3562 = vadd.f32 %v2015, %v3559
  %v3563 = vadd.f32 %v2016, %v3553
  %v3564 = vadd.f32 %v2017, %v3555
  %s3565 = scalar_lea.vmem %s9, 1
  %v3566 = vld [vmem:[%s3565] sm:$0x1]
  %v3568 = vperm.slane %v3566, 0
  %v3570 = vadd.f32 %v3560, %v3568
  %v3571 = vadd.f32 %v3561, %v3568
  %v3572 = vadd.f32 %v3562, %v3568
  %v3573 = vadd.f32 %v3563, %v3568
  %v3574 = vadd.f32 %v3564, %v3568
  %s3575 = scalar_lea.vmem %s10, 1
  %v3576 = vld [vmem:[%s3575] sm:$0x1]
  %s3577 = scalar_lea.vmem %s11, 1
  %v3578 = vld [vmem:[%s3577] sm:$0x1]
  %v3579 = vsel %vm158, %v3570, 0.0
  %3580 = vadd.xlane.f32.xlu0 %v3579
  %v3581 = vpop.xlane.xlu0 %3580
  %v3582 = vsel %vm158, %v3571, 0.0
  %3583 = vadd.xlane.f32.xlu0 %v3582
  %v3584 = vpop.xlane.xlu0 %3583
  %v3585 = vsel %vm158, %v3572, 0.0
  %3586 = vadd.xlane.f32.xlu0 %v3585
  %v3587 = vpop.xlane.xlu0 %3586
  %v3588 = vsel %vm158, %v3573, 0.0
  %3589 = vadd.xlane.f32.xlu0 %v3588
  %v3590 = vpop.xlane.xlu0 %3589
  %v3591 = vsel %vm171, %v3574, 0.0
  %3592 = vadd.xlane.f32.xlu0 %v3591
  %v3593 = vpop.xlane.xlu0 %3592
  %v3594 = vmul.f32 %v3581, %v181
  %v3595 = vmul.f32 %v3584, %v181
  %v3596 = vmul.f32 %v3587, %v181
  %v3597 = vmul.f32 %v3590, %v181
  %v3598 = vmul.f32 %v3593, %v181
  %v3599 = vsub.f32 %v3570, %v3594
  %v3600 = vsub.f32 %v3571, %v3595
  %v3601 = vsub.f32 %v3572, %v3596
  %v3602 = vsub.f32 %v3573, %v3597
  %v3603 = vsub.f32 %v3574, %v3598
  %v3604 = vmul.f32 %v3599, %v3599
  %v3605 = vmul.f32 %v3600, %v3600
  %v3606 = vmul.f32 %v3601, %v3601
  %v3607 = vmul.f32 %v3602, %v3602
  %v3608 = vmul.f32 %v3603, %v3603
  %v3609 = vsel %vm158, %v3604, 0.0
  %3610 = vadd.xlane.f32.xlu0 %v3609
  %v3611 = vpop.xlane.xlu0 %3610
  %v3612 = vsel %vm158, %v3605, 0.0
  %3613 = vadd.xlane.f32.xlu0 %v3612
  %v3614 = vpop.xlane.xlu0 %3613
  %v3615 = vsel %vm158, %v3606, 0.0
  %3616 = vadd.xlane.f32.xlu0 %v3615
  %v3617 = vpop.xlane.xlu0 %3616
  %v3618 = vsel %vm158, %v3607, 0.0
  %3619 = vadd.xlane.f32.xlu0 %v3618
  %v3620 = vpop.xlane.xlu0 %3619
  %v3621 = vsel %vm171, %v3608, 0.0
  %3622 = vadd.xlane.f32.xlu0 %v3621
  %v3623 = vpop.xlane.xlu0 %3622
  %v3624 = vmul.f32 %v3611, %v181
  %v3625 = vmul.f32 %v3614, %v181
  %v3626 = vmul.f32 %v3617, %v181
  %v3627 = vmul.f32 %v3620, %v181
  %v3628 = vmul.f32 %v3623, %v181
  %v3629 = vadd.f32 %v3624, 1e-12
  %v3630 = vadd.f32 %v3625, 1e-12
  %v3631 = vadd.f32 %v3626, 1e-12
  %v3632 = vadd.f32 %v3627, 1e-12
  %v3633 = vadd.f32 %v3628, 1e-12
  %v3634 = vrsqrt.pop %v3629
  %v3635 = vmul.f32 %v3634, %v3629
  %v3636 = vmul.f32 %v3635, %v3634
  %v3637 = vmul.f32 0.5, %v3636
  %v3638 = vsub.f32 1.5, %v3637
  %v3639 = vmul.f32 %v3634, %v3638
  %vm3640 = vweird.f32 %v3629
  %vm3641 = vweird.f32 %v3634
  %vm3642 = vmor %vm3640, %vm3641
  %v3643 = vsel %vm3642, %v3634, %v3639
  %v3644 = vrsqrt.pop %v3630
  %v3645 = vmul.f32 %v3644, %v3630
  %v3646 = vmul.f32 %v3645, %v3644
  %v3647 = vmul.f32 0.5, %v3646
  %v3648 = vsub.f32 1.5, %v3647
  %v3649 = vmul.f32 %v3644, %v3648
  %vm3650 = vweird.f32 %v3630
  %vm3651 = vweird.f32 %v3644
  %vm3652 = vmor %vm3650, %vm3651
  %v3653 = vsel %vm3652, %v3644, %v3649
  %v3654 = vrsqrt.pop %v3631
  %v3655 = vmul.f32 %v3654, %v3631
  %v3656 = vmul.f32 %v3655, %v3654
  %v3657 = vmul.f32 0.5, %v3656
  %v3658 = vsub.f32 1.5, %v3657
  %v3659 = vmul.f32 %v3654, %v3658
  %vm3660 = vweird.f32 %v3631
  %vm3661 = vweird.f32 %v3654
  %vm3662 = vmor %vm3660, %vm3661
  %v3663 = vsel %vm3662, %v3654, %v3659
  %v3664 = vrsqrt.pop %v3632
  %v3665 = vmul.f32 %v3664, %v3632
  %v3666 = vmul.f32 %v3665, %v3664
  %v3667 = vmul.f32 0.5, %v3666
  %v3668 = vsub.f32 1.5, %v3667
  %v3669 = vmul.f32 %v3664, %v3668
  %vm3670 = vweird.f32 %v3632
  %vm3671 = vweird.f32 %v3664
  %vm3672 = vmor %vm3670, %vm3671
  %v3673 = vsel %vm3672, %v3664, %v3669
  %v3674 = vrsqrt.pop %v3633
  %v3675 = vmul.f32 %v3674, %v3633
  %v3676 = vmul.f32 %v3675, %v3674
  %v3677 = vmul.f32 0.5, %v3676
  %v3678 = vsub.f32 1.5, %v3677
  %v3679 = vmul.f32 %v3674, %v3678
  %vm3680 = vweird.f32 %v3633
  %vm3681 = vweird.f32 %v3674
  %vm3682 = vmor %vm3680, %vm3681
  %v3683 = vsel %vm3682, %v3674, %v3679
  %v3684 = vmul.f32 %v3599, %v3643
  %v3685 = vmul.f32 %v3600, %v3653
  %v3686 = vmul.f32 %v3601, %v3663
  %v3687 = vmul.f32 %v3602, %v3673
  %v3688 = vmul.f32 %v3603, %v3683
  %v3690 = vperm.slane %v3576, 0
  %v3692 = vmul.f32 %v3684, %v3690
  %v3693 = vmul.f32 %v3685, %v3690
  %v3694 = vmul.f32 %v3686, %v3690
  %v3695 = vmul.f32 %v3687, %v3690
  %v3696 = vmul.f32 %v3688, %v3690
  %v3698 = vperm.slane %v3578, 0
  %v3700 = vadd.f32 %v3692, %v3698
  %v3701 = vadd.f32 %v3693, %v3698
  %v3702 = vadd.f32 %v3694, %v3698
  %v3703 = vadd.f32 %v3695, %v3698
  %v3704 = vadd.f32 %v3696, %v3698
  %s3705 = scalar_lea.vmem %s12, 32
  %v3706 = vld [vmem:[%s3705] sm:$0xff]
  %v3707 = vld [vmem:[%s3705 + $0x8] sm:$0xff]
  %v3708 = vld [vmem:[%s3705 + $0x10] sm:$0xff]
  %v3709 = vld [vmem:[%s3705 + $0x18] sm:$0xff]
  %s3710 = scalar_lea.vmem %s13, 1
  %v3711 = vld [vmem:[%s3710] sm:$0x1]
  %v3713 = vperm.slane %v3711, 0
  %v3716 = vsel %vm158, %v3700, 0
  %v3719 = vsel %vm158, %v3701, 0
  %v3722 = vsel %vm158, %v3702, 0
  %v3725 = vsel %vm158, %v3703, 0
  %v3728 = vsel %vm158, %v3704, 0
  %3730 = vmatpush.msra.mxu0 0.0
  %3731 = vmatpush.msra.mxu0 0.0
  %3732 = vmatpush.msra.mxu0 0.0
  %3733 = vmatpush.msra.mxu0 0.0
  %3734 = vmatpush.msra.mxu0 0.0
  %3735 = vmatpush.msra.mxu0 0.0
  %3736 = vmatpush.msra.mxu0 0.0
  %3737 = vmatpush.msra.mxu0 0.0
  %3738 = vmatpush.msra.mxu0 0.0
  %3739 = vmatpush.msra.mxu0 0.0
  %3740 = vmatpush.msra.mxu0 0.0
  %3741 = vmatpush.msra.mxu0 0.0
  %3742 = vmatpush.msra.mxu0 %v3709
  %3743 = vmatpush.msra.mxu0 %v3708
  %3744 = vmatpush.msra.mxu0 %v3707
  %3745 = vmatpush.msra.mxu0 %v3706
  %3746 = vmatmul.f32.gmra.mxu0 %v3716
  %v3747 = vpop.f32.mrf.mxu0
  %v3748 = vadd.f32 %v3713, %v3747
  %3749 = vmatmul.f32.gmra.mxu0 %v3719
  %v3750 = vpop.f32.mrf.mxu0
  %v3751 = vadd.f32 %v3713, %v3750
  %3752 = vmatmul.f32.gmra.mxu0 %v3722
  %v3753 = vpop.f32.mrf.mxu0
  %v3754 = vadd.f32 %v3713, %v3753
  %3755 = vmatmul.f32.gmra.mxu0 %v3725
  %v3756 = vpop.f32.mrf.mxu0
  %v3757 = vadd.f32 %v3713, %v3756
  %3758 = vmatmul.f32.gmra.mxu0 %v3728
  %v3759 = vpop.f32.mrf.mxu0
  %v3760 = vadd.f32 %v3713, %v3759
  %3761 = vdwg.mxu0
  %v3762 = vmul.f32 %v3748, 0.5
  %v3763 = vmul.f32 %v3751, 0.5
  %v3764 = vmul.f32 %v3754, 0.5
  %v3765 = vmul.f32 %v3757, 0.5
  %v3766 = vmul.f32 %v3760, 0.5
  %v3767 = vmul.f32 %v3748, 0.044715
  %v3768 = vmul.f32 %v3751, 0.044715
  %v3769 = vmul.f32 %v3754, 0.044715
  %v3770 = vmul.f32 %v3757, 0.044715
  %v3771 = vmul.f32 %v3760, 0.044715
  %v3772 = vmul.f32 %v3767, %v3748
  %v3773 = vmul.f32 %v3768, %v3751
  %v3774 = vmul.f32 %v3769, %v3754
  %v3775 = vmul.f32 %v3770, %v3757
  %v3776 = vmul.f32 %v3771, %v3760
  %v3777 = vmul.f32 %v3772, %v3748
  %v3778 = vmul.f32 %v3773, %v3751
  %v3779 = vmul.f32 %v3774, %v3754
  %v3780 = vmul.f32 %v3775, %v3757
  %v3781 = vmul.f32 %v3776, %v3760
  %v3782 = vadd.f32 %v3748, %v3777
  %v3783 = vadd.f32 %v3751, %v3778
  %v3784 = vadd.f32 %v3754, %v3779
  %v3785 = vadd.f32 %v3757, %v3780
  %v3786 = vadd.f32 %v3760, %v3781
  %v3787 = vmul.f32 %v3782, 0.7978846
  %v3788 = vmul.f32 %v3783, 0.7978846
  %v3789 = vmul.f32 %v3784, 0.7978846
  %v3790 = vmul.f32 %v3785, 0.7978846
  %v3791 = vmul.f32 %v3786, 0.7978846
  %v3792 = vtanh.pop %v3787
  %v3793 = vtanh.pop %v3788
  %v3794 = vtanh.pop %v3789
  %v3795 = vtanh.pop %v3790
  %v3796 = vtanh.pop %v3791
  %v3797 = vadd.f32 %v3792, 1.0
  %v3798 = vadd.f32 %v3793, 1.0
  %v3799 = vadd.f32 %v3794, 1.0
  %v3800 = vadd.f32 %v3795, 1.0
  %v3801 = vadd.f32 %v3796, 1.0
  %v3802 = vmul.f32 %v3762, %v3797
  %v3803 = vmul.f32 %v3763, %v3798
  %v3804 = vmul.f32 %v3764, %v3799
  %v3805 = vmul.f32 %v3765, %v3800
  %v3806 = vmul.f32 %v3766, %v3801
  %s3807 = scalar_lea.vmem %s14, 64
  %v3808 = vld [vmem:[%s3807] sm:$0xff]
  %v3809 = vld [vmem:[%s3807 + $0x8] sm:$0xff]
  %v3810 = vld [vmem:[%s3807 + $0x10] sm:$0xff]
  %v3811 = vld [vmem:[%s3807 + $0x18] sm:$0xff]
  %v3812 = vld [vmem:[%s3807 + $0x20] sm:$0xff]
  %v3813 = vld [vmem:[%s3807 + $0x28] sm:$0xff]
  %v3814 = vld [vmem:[%s3807 + $0x30] sm:$0xff]
  %v3815 = vld [vmem:[%s3807 + $0x38] sm:$0xff]
  %v3817 = vsel %vm1956, %v3802, 0
  %v3820 = vsel %vm1956, %v3803, 0
  %v3823 = vsel %vm1956, %v3804, 0
  %v3826 = vsel %vm1956, %v3805, 0
  %v3829 = vsel %vm1956, %v3806, 0
  %3831 = vmatpush.msra.mxu0 0.0
  %3832 = vmatpush.msra.mxu0 0.0
  %3833 = vmatpush.msra.mxu0 0.0
  %3834 = vmatpush.msra.mxu0 0.0
  %3835 = vmatpush.msra.mxu0 0.0
  %3836 = vmatpush.msra.mxu0 0.0
  %3837 = vmatpush.msra.mxu0 0.0
  %3838 = vmatpush.msra.mxu0 0.0
  %3839 = vmatpush.msra.mxu0 %v3815
  %3840 = vmatpush.msra.mxu0 %v3814
  %3841 = vmatpush.msra.mxu0 %v3813
  %3842 = vmatpush.msra.mxu0 %v3812
  %3843 = vmatpush.msra.mxu0 %v3811
  %3844 = vmatpush.msra.mxu0 %v3810
  %3845 = vmatpush.msra.mxu0 %v3809
  %3846 = vmatpush.msra.mxu0 %v3808
  %3847 = vmatmul.f32.gmra.mxu0 %v3817
  %v3848 = vpop.f32.mrf.mxu0
  %v3849 = vadd.f32 0.0, %v3848
  %3850 = vmatmul.f32.gmra.mxu0 %v3820
  %v3851 = vpop.f32.mrf.mxu0
  %3852 = vmatmul.f32.gmra.mxu0 %v3823
  %v3853 = vpop.f32.mrf.mxu0
  %v3854 = vadd.f32 0.0, %v3853
  %3855 = vmatmul.f32.gmra.mxu0 %v3826
  %v3856 = vpop.f32.mrf.mxu0
  %3857 = vmatmul.f32.gmra.mxu0 %v3829
  %v3858 = vpop.f32.mrf.mxu0
  %3859 = vdwg.mxu0
  %v3860 = vadd.f32 %v3570, %v3849
  %v3861 = vadd.f32 %v3572, %v3854
  %s3862 = scalar_lea.vmem %s15, 1
  %v3863 = vld [vmem:[%s3862] sm:$0x1]
  %v3865 = vperm.slane %v3863, 0
  %v3867 = vadd.f32 %v3860, %v3865
  %v3868 = vadd.f32 %v3861, %v3865
  %v3869 = vld [vmem:[%s16] sm:$0x1]
  %v3870 = vld [vmem:[%s17] sm:$0x1]
  %v3871 = vsel %vm158, %v3867, 0.0
  %3872 = vadd.xlane.f32.xlu0 %v3871
  %v3873 = vpop.xlane.xlu0 %3872
  %v3874 = vsel %vm158, %v3868, 0.0
  %3875 = vadd.xlane.f32.xlu0 %v3874
  %v3876 = vpop.xlane.xlu0 %3875
  %v3877 = vmul.f32 %v3873, %v181
  %v3878 = vmul.f32 %v3876, %v181
  %v3879 = vsub.f32 %v3867, %v3877
  %v3880 = vsub.f32 %v3868, %v3878
  %v3881 = vmul.f32 %v3879, %v3879
  %v3882 = vmul.f32 %v3880, %v3880
  %v3883 = vsel %vm158, %v3881, 0.0
  %3884 = vadd.xlane.f32.xlu0 %v3883
  %v3885 = vpop.xlane.xlu0 %3884
  %v3886 = vsel %vm158, %v3882, 0.0
  %3887 = vadd.xlane.f32.xlu0 %v3886
  %v3888 = vpop.xlane.xlu0 %3887
  %v3889 = vmul.f32 %v3885, %v181
  %v3890 = vmul.f32 %v3888, %v181
  %v3891 = vadd.f32 %v3889, 1e-12
  %v3892 = vadd.f32 %v3890, 1e-12
  %v3893 = vrsqrt.pop %v3891
  %v3894 = vmul.f32 %v3893, %v3891
  %v3895 = vmul.f32 %v3894, %v3893
  %v3896 = vmul.f32 0.5, %v3895
  %v3897 = vsub.f32 1.5, %v3896
  %v3898 = vmul.f32 %v3893, %v3897
  %vm3899 = vweird.f32 %v3891
  %vm3900 = vweird.f32 %v3893
  %vm3901 = vmor %vm3899, %vm3900
  %v3902 = vsel %vm3901, %v3893, %v3898
  %v3903 = vrsqrt.pop %v3892
  %v3904 = vmul.f32 %v3903, %v3892
  %v3905 = vmul.f32 %v3904, %v3903
  %v3906 = vmul.f32 0.5, %v3905
  %v3907 = vsub.f32 1.5, %v3906
  %v3908 = vmul.f32 %v3903, %v3907
  %vm3909 = vweird.f32 %v3892
  %vm3910 = vweird.f32 %v3903
  %vm3911 = vmor %vm3909, %vm3910
  %v3912 = vsel %vm3911, %v3903, %v3908
  %v3913 = vmul.f32 %v3879, %v3902
  %v3914 = vmul.f32 %v3880, %v3912
  %v3916 = vperm.slane %v3869, 0
  %v3918 = vmul.f32 %v3913, %v3916
  %v3919 = vmul.f32 %v3914, %v3916
  %v3921 = vperm.slane %v3870, 0
  %v3923 = vadd.f32 %v3918, %v3921
  %v3924 = vadd.f32 %v3919, %v3921
  %v3925 = vsel %vm134, %v3923, %v3924
  %v3926 = vld [vmem:[%s18] sm:$0xff]
  %v3927 = vld [vmem:[%s18 + $0x8] sm:$0xff]
  %v3928 = vld [vmem:[%s18 + $0x10] sm:$0xff]
  %v3929 = vld [vmem:[%s18 + $0x18] sm:$0xff]
  %v3930 = vld [vmem:[%s18 + $0x20] sm:$0xff]
  %v3931 = vld [vmem:[%s18 + $0x28] sm:$0xff]
  %v3932 = vld [vmem:[%s18 + $0x30] sm:$0xff]
  %v3933 = vld [vmem:[%s18 + $0x38] sm:$0xff]
  %v3934 = vld [vmem:[%s19] sm:$0x3]
  %v3936 = vperm.slane %v3934, 0
  %v3937 = vperm.slane %v3934, 1
  %v3941 = vsel %vm158, %v3925, 0
  %3943 = vmatpush.msra.mxu0 0.0
  %3944 = vmatpush.msra.mxu0 0.0
  %3945 = vmatpush.msra.mxu0 0.0
  %3946 = vmatpush.msra.mxu0 0.0
  %3947 = vmatpush.msra.mxu0 0.0
  %3948 = vmatpush.msra.mxu0 0.0
  %3949 = vmatpush.msra.mxu0 0.0
  %3950 = vmatpush.msra.mxu0 0.0
  %3951 = vmatpush.msra.mxu0 0.0
  %3952 = vmatpush.msra.mxu0 0.0
  %3953 = vmatpush.msra.mxu0 0.0
  %3954 = vmatpush.msra.mxu0 0.0
  %3955 = vmatpush.msra.mxu0 %v3932
  %3956 = vmatpush.msra.mxu0 %v3930
  %3957 = vmatpush.msra.mxu0 %v3928
  %3958 = vmatpush.msra.mxu0 %v3926
  %3959 = vmatmul.f32.gmra.mxu0 %v3941
  %v3960 = vpop.f32.mrf.mxu0
  %v3961 = vadd.f32 %v3936, %v3960
  %3962 = vdwg.mxu0
  %3963 = vmatpush.msra.mxu0 0.0
  %3964 = vmatpush.msra.mxu0 0.0
  %3965 = vmatpush.msra.mxu0 0.0
  %3966 = vmatpush.msra.mxu0 0.0
  %3967 = vmatpush.msra.mxu0 0.0
  %3968 = vmatpush.msra.mxu0 0.0
  %3969 = vmatpush.msra.mxu0 0.0
  %3970 = vmatpush.msra.mxu0 0.0
  %3971 = vmatpush.msra.mxu0 0.0
  %3972 = vmatpush.msra.mxu0 0.0
  %3973 = vmatpush.msra.mxu0 0.0
  %3974 = vmatpush.msra.mxu0 0.0
  %3975 = vmatpush.msra.mxu0 %v3933
  %3976 = vmatpush.msra.mxu0 %v3931
  %3977 = vmatpush.msra.mxu0 %v3929
  %3978 = vmatpush.msra.mxu0 %v3927
  %3979 = vmatmul.f32.gmra.mxu0 %v3941
  %v3980 = vpop.f32.mrf.mxu0
  %v3981 = vadd.f32 %v3937, %v3980
  %3982 = vdwg.mxu0
  %v3983 = vmax.f32 %v3961, 0.0
  %v3984 = vmax.f32 %v3981, 0.0
  %v3985 = vld [vmem:[%s20] sm:$0x3]
  %v3987 = vperm.slane %v3985, 0
  %v3988 = vperm.slane %v3985, 1
  %v3991 = vmul.f32 %v3983, %v3987
  %v3992 = vmul.f32 %v3984, %v3988
  %v3993 = vsel %vm146, %v3991, 0.0
  %v3994 = vsel %vm146, %v3992, 0.0
  %v3995 = vadd.f32 %v3993, %v3994
  %3996 = vadd.xlane.f32.xlu0 %v3995
  %v3997 = vpop.xlane.xlu0 %3996
  %v3998 = vld [vmem:[#allocation2] sm:$0x1]
  %v4000 = vperm.slane %v3998, 0
  %v4002 = vadd.f32 %v3997, %v4000
  %vm4003 = vcmask 1024
  %4004 = vst.msk [vmem:[%s22] sm:$0x3] %vm4003, %v4002
  // Predicated region
  $region90: #{vit_regressor_forward.1} parent=0 // pred_check
    _
  $region91: #{vit_regressor_forward.1} parent=0 // pred_check_branch
    %4006 = sbr.rel (0) target = $region93
  $region92: #{vit_regressor_forward.1} parent=0 // pred_region
    _
  $region93: #{vit_regressor_forward.1} parent=0 // pred_fallthru
    _
  // Predicated region
  $region94: #{vit_regressor_forward.1} parent=0 // pred_check
    _
  $region95: #{vit_regressor_forward.1} parent=0 // pred_check_branch
    %4008 = sbr.rel (0) target = $region97
  $region96: #{vit_regressor_forward.1} parent=0 // pred_region
    _
  $region97: #{vit_regressor_forward.1} parent=0 // pred_fallthru
    _

</llo_original>
